<compile_context>
chip_gen: v7x
topology: tpu7x:2x2x1
jax: 0.10.0
libtpu: 0.0.40
codegen_flags: <defaults>
</compile_context>

<pallas_src>
import functools

import jax
import jax.numpy as jnp
from jax.experimental import pallas as pl
from jax.experimental.pallas import tpu as pltpu


# ----------------------------------------------------------------------------
# Pallas kernels
# ----------------------------------------------------------------------------

def _conv_mm_kernel(w_ref, p_ref, b_ref, o_ref, *, relu):
    # o (Cout, tm) = W (Cout, K) @ P (K, tm) + b (Cout, 1)  -> lane-dense output.
    acc = jnp.dot(w_ref[...], p_ref[...], preferred_element_type=jnp.float32)
    acc = acc + b_ref[...]
    if relu:
        acc = jnp.maximum(acc, 0.0)
    o_ref[...] = acc.astype(o_ref.dtype)


def pallas_conv_matmul(w, p, b, *, relu=False, tile_m=2048):
    """y (Cout, M) = w (Cout, K) @ p (K, M) + b, optional ReLU.

    M (lanes) is padded to a multiple of 128 and tiled with a 'parallel' grid;
    K is zero-padded to a multiple of 8 for clean sublane tiling.
    """
    Cout, K = w.shape
    K2, M = p.shape
    assert K == K2
    # Pad the reduction dim to a multiple of 8 (sublane tiling).
    Kp = ((K + 7) // 8) * 8
    if Kp != K:
        w = jnp.pad(w, ((0, 0), (0, Kp - K)))
        p = jnp.pad(p, ((0, Kp - K), (0, 0)))
    # Pad M to a multiple of 128 (lane-dense, unmasked stores), then tile.
    Mp = ((M + 127) // 128) * 128
    tm = Mp if Mp <= tile_m else tile_m
    Mp = ((Mp + tm - 1) // tm) * tm
    if Mp != M:
        p = jnp.pad(p, ((0, 0), (0, Mp - M)))
    b2 = b.reshape(Cout, 1).astype(jnp.float32)

    out = pl.pallas_call(
        functools.partial(_conv_mm_kernel, relu=relu),
        out_shape=jax.ShapeDtypeStruct((Cout, Mp), jnp.float32),
        grid=(Mp // tm,),
        in_specs=[
            pl.BlockSpec((Cout, Kp), lambda i: (0, 0)),
            pl.BlockSpec((Kp, tm), lambda i: (0, i)),
            pl.BlockSpec((Cout, 1), lambda i: (0, 0)),
        ],
        out_specs=pl.BlockSpec((Cout, tm), lambda i: (0, i)),
        compiler_params=pltpu.CompilerParams(dimension_semantics=("parallel",)),
    )(w.astype(jnp.float32), p.astype(jnp.float32), b2)
    return out[:, :M] if Mp != M else out


def _head_kernel(flat_ref, w1_ref, b1_ref, w2_ref, b2_ref, wd_ref, emb_ref,
                 red_ref, ypred_ref, dist_ref, *, inv_scale):
    # fc1 -> ReLU
    h1 = jnp.dot(flat_ref[...], w1_ref[...], preferred_element_type=jnp.float32)
    h1 = jnp.maximum(h1 + b1_ref[...], 0.0)
    # fc2 -> ReLU   (Dropout(p=0.2) is identity at inference time)
    z = jnp.dot(h1, w2_ref[...], preferred_element_type=jnp.float32)
    z = jnp.maximum(z + b2_ref[...], 0.0)
    # last_layer: einsum('ij,mnj->imn') as ONE matmul into flattened (E*C) lanes
    ze = jnp.dot(z, wd_ref[...], preferred_element_type=jnp.float32)       # (B, E*C)
    diff = ze - emb_ref[...]                                               # (B, E*C)
    sq = diff * diff
    # mean over E via a constant 0/1 reduction matrix on the MXU (no reshapes)
    ssum = jnp.dot(sq, red_ref[...], preferred_element_type=jnp.float32)   # (B, C)
    dist = ssum * inv_scale                                                # /(E*2*sigma^2)
    dist_ref[...] = dist
    ypred_ref[...] = jnp.exp(-dist)


def pallas_fused_head(flat, fc1_w, fc1_b, fc2_w, fc2_b, W_duq, emb, sigma):
    """Fused fc1+ReLU -> fc2+ReLU -> DUQ last_layer + RBF output_layer."""
    B, Fin = flat.shape
    E, C, Fz = W_duq.shape
    H1 = fc1_w.shape[0]
    H2 = fc2_w.shape[0]
    assert fc1_w.shape == (H1, Fin) and fc2_w.shape == (H2, H1) and Fz == H2

    w1 = fc1_w.T.astype(jnp.float32)                         # (Fin, H1)
    b1 = fc1_b.reshape(1, H1).astype(jnp.float32)
    w2 = fc2_w.T.astype(jnp.float32)                         # (H1, H2)
    b2 = fc2_b.reshape(1, H2).astype(jnp.float32)
    wd = W_duq.reshape(E * C, Fz).T.astype(jnp.float32)      # (H2, E*C)
    embf = emb.reshape(1, E * C).astype(jnp.float32)         # (1, E*C)
    red = jnp.tile(jnp.eye(C, dtype=jnp.float32), (E, 1))    # (E*C, C): sums over E
    inv_scale = 1.0 / (E * 2.0 * float(sigma) ** 2)
    EC = E * C

    y_pred, dists = pl.pallas_call(
        functools.partial(_head_kernel, inv_scale=inv_scale),
        out_shape=(jax.ShapeDtypeStruct((B, C), jnp.float32),
                   jax.ShapeDtypeStruct((B, C), jnp.float32)),
        grid=(1,),
        in_specs=[
            pl.BlockSpec((B, Fin), lambda i: (0, 0)),
            pl.BlockSpec((Fin, H1), lambda i: (0, 0)),
            pl.BlockSpec((1, H1), lambda i: (0, 0)),
            pl.BlockSpec((H1, H2), lambda i: (0, 0)),
            pl.BlockSpec((1, H2), lambda i: (0, 0)),
            pl.BlockSpec((H2, EC), lambda i: (0, 0)),
            pl.BlockSpec((1, EC), lambda i: (0, 0)),
            pl.BlockSpec((EC, C), lambda i: (0, 0)),
        ],
        out_specs=(pl.BlockSpec((B, C), lambda i: (0, 0)),
                   pl.BlockSpec((B, C), lambda i: (0, 0))),
        compiler_params=pltpu.CompilerParams(dimension_semantics=("arbitrary",)),
    )(flat.astype(jnp.float32), w1, b1, w2, b2, wd, embf, red)
    return y_pred, dists


# ----------------------------------------------------------------------------
# Plain-JAX glue (transposed im2col, maxpool) — small reshapes / reductions
# ----------------------------------------------------------------------------

# TODO(synk): fold the 5x5 tap gather (im2col) into the conv kernel via shifted
# in-kernel reads to avoid materializing the (K, M) patch matrix in HBM.
def im2col_T(x_cbhw, k):
    """x: (C, B, H, W) -> patches (C*k*k, B*Ho*Wo), rows ordered (c, dh, dw)."""
    C, B, H, W = x_cbhw.shape
    Ho, Wo = H - k + 1, W - k + 1
    cols = []
    for c in range(C):
        for dh in range(k):
            for dw in range(k):
                cols.append(x_cbhw[c, :, dh:dh + Ho, dw:dw + Wo])   # (B, Ho, Wo)
    patches = jnp.stack(cols, axis=0)                                # (C*k*k, B, Ho, Wo)
    return patches.reshape(C * k * k, B * Ho * Wo), Ho, Wo


def maxpool2_cbhw(t):
    C, B, H, W = t.shape
    return t.reshape(C, B, H // 2, 2, W // 2, 2).max(axis=(3, 5))


# ----------------------------------------------------------------------------
# Parameters (deterministic synthetic init; shapes follow CNN_DUQ.__init__)
# ----------------------------------------------------------------------------

def init_params(key, num_classes, embedding_size):
    ks = jax.random.split(key, 10)
    p = {}
    p["conv1_w"] = 0.10 * jax.random.normal(ks[0], (6, 1, 5, 5), jnp.float32)
    p["conv1_b"] = 0.10 * jax.random.normal(ks[1], (6,), jnp.float32)
    p["conv2_w"] = 0.05 * jax.random.normal(ks[2], (16, 6, 5, 5), jnp.float32)
    p["conv2_b"] = 0.05 * jax.random.normal(ks[3], (16,), jnp.float32)
    p["fc1_w"] = 0.05 * jax.random.normal(ks[4], (120, 256), jnp.float32)  # (out, in)
    p["fc1_b"] = 0.05 * jax.random.normal(ks[5], (120,), jnp.float32)
    p["fc2_w"] = 0.05 * jax.random.normal(ks[6], (84, 120), jnp.float32)
    p["fc2_b"] = 0.05 * jax.random.normal(ks[7], (84,), jnp.float32)
    # DUQ parameters / buffers
    p["W_duq"] = 0.05 * jax.random.normal(ks[8], (embedding_size, num_classes, 84),
                                          jnp.float32)
    N = jnp.ones((num_classes,), jnp.float32) * 12.0
    m = jax.random.normal(ks[9], (embedding_size, num_classes), jnp.float32) * N[None, :]
    p["N"], p["m"] = N, m
    # NOTE: LeNet's `self.out` Linear(84,84) is never used by CNN_DUQ.forward.
    return p


# ----------------------------------------------------------------------------
# Forward pass (mirrors CNN_DUQ.forward, inference mode)
# ----------------------------------------------------------------------------

def cnn_duq_forward(params, x, *, length_scale):
    B = x.shape[0]

    # first_layer: Conv2d(1 -> 6, k=5): 28 -> 24   (transposed, lane-dense matmul)
    x_cbhw = jnp.transpose(x, (1, 0, 2, 3))                      # (1, B, 28, 28)
    p1, Ho1, Wo1 = im2col_T(x_cbhw, 5)                           # (25, B*576)
    w1 = params["conv1_w"].reshape(6, 25)
    c1 = pallas_conv_matmul(w1, p1, params["conv1_b"])           # (6, B*576)
    c1 = c1.reshape(6, B, Ho1, Wo1)                              # channel-major

    # second_layer: MaxPool2 -> ReLU -> Conv2d(6 -> 16, k=5): 12 -> 8
    h = jnp.maximum(maxpool2_cbhw(c1), 0.0)                      # (6, B, 12, 12)
    p2, Ho2, Wo2 = im2col_T(h, 5)                                # (150, B*64)
    w2 = params["conv2_w"].reshape(16, 150)
    c2 = pallas_conv_matmul(w2, p2, params["conv2_b"])           # (16, B*64)
    c2 = c2.reshape(16, B, Ho2, Wo2)

    # projection prefix: MaxPool2 -> ReLU -> Flatten (torch (C,H,W) order)
    h = jnp.maximum(maxpool2_cbhw(c2), 0.0)                      # (16, B, 4, 4)
    flat = jnp.transpose(h, (1, 0, 2, 3)).reshape(B, 16 * 4 * 4)  # (B, 256)

    # fused head: fc1+ReLU -> fc2+ReLU -> (Dropout = id) -> last_layer + output_layer
    emb = params["m"] / params["N"][None, :]                     # (E, C)
    y_pred, dists = pallas_fused_head(flat, params["fc1_w"], params["fc1_b"],
                                      params["fc2_w"], params["fc2_b"],
                                      params["W_duq"], emb, length_scale)
    return y_pred, dists


# ----------------------------------------------------------------------------
# Pure-JAX reference (for correctness check only)
# ----------------------------------------------------------------------------

def reference_forward(params, x, sigma):
    def conv(t, w, b):
        y = jax.lax.conv_general_dilated(t, w, (1, 1), "VALID",
                                         dimension_numbers=("NCHW", "OIHW", "NCHW"))
        return y + b.reshape(1, -1, 1, 1)

    def pool(t):
        B, C, H, W = t.shape
        return t.reshape(B, C, H // 2, 2, W // 2, 2).max(axis=(3, 5))

    c1 = conv(x, params["conv1_w"], params["conv1_b"])
    h = jnp.maximum(pool(c1), 0.0)
    c2 = conv(h, params["conv2_w"], params["conv2_b"])
    h = jnp.maximum(pool(c2), 0.0)
    flat = h.reshape(x.shape[0], -1)
    h1 = jnp.maximum(flat @ params["fc1_w"].T + params["fc1_b"], 0.0)
    z = jnp.maximum(h1 @ params["fc2_w"].T + params["fc2_b"], 0.0)
    ze = jnp.einsum("ij,mnj->imn", z, params["W_duq"])
    emb = params["m"] / params["N"][None, :]
    diff = ze - emb[None]
    dist = (diff ** 2).mean(1) / (2.0 * sigma ** 2)
    return jnp.exp(-dist), dist


# ----------------------------------------------------------------------------

if __name__ == "__main__":
    key = jax.random.PRNGKey(0)
    pkey, xkey = jax.random.split(key)

    num_classes = 10
    embedding_size = 32
    length_scale = 0.1          # learnable_length_scale=False -> plain float sigma
    # gamma only affects update_embeddings(), not forward().

    params = init_params(pkey, num_classes, embedding_size)
    x = jax.random.normal(xkey, (2, 1, 28, 28), jnp.float32)   # MNIST-sized NCHW input

    fwd = jax.jit(functools.partial(cnn_duq_forward, length_scale=length_scale))
    y_pred, dists = fwd(params, x)
    jax.block_until_ready((y_pred, dists))

    assert y_pred.shape == (2, num_classes) and dists.shape == (2, num_classes)
    assert bool(jnp.all(jnp.isfinite(y_pred))) and bool(jnp.all(jnp.isfinite(dists)))
    # y_pred == exp(-dists) by construction of the DUQ head
    assert bool(jnp.allclose(y_pred, jnp.exp(-dists), rtol=1e-5, atol=1e-6))

    # cross-check against a pure-JAX reference of the PyTorch forward
    y_ref, d_ref = reference_forward(params, x, length_scale)
    assert bool(jnp.allclose(dists, d_ref, rtol=2e-2, atol=1e-2))
    assert bool(jnp.allclose(y_pred, y_ref, rtol=2e-2, atol=1e-2))

    print("KERNEL_OK")
</pallas_src>

<mosaic_0001>
module attributes {stable_mosaic.version = 11 : i64} {
  func.func @_conv_mm_kernel(%arg0: i32, %arg1: memref<6x32xf32, #tpu.memory_space<vmem>>, %arg2: memref<32x1152xf32, #tpu.memory_space<vmem>>, %arg3: memref<6x1xf32, #tpu.memory_space<vmem>>, %arg4: memref<6x1152xf32, #tpu.memory_space<vmem>>) attributes {dimension_semantics = [#tpu.dimension_semantics<parallel>], iteration_bounds = array<i64: 1>, scalar_prefetch = 0 : i64, scratch_operands = 0 : i64, tpu.core_type = #tpu.core_type<tc>, window_params = [{pipeline_mode = #tpu.pipeline_mode<synchronous>, transform_indices = @transform_0, window_bounds = array<i64: 6, 32>}, {transform_indices = @transform_1, window_bounds = array<i64: 32, 1152>}, {pipeline_mode = #tpu.pipeline_mode<synchronous>, transform_indices = @transform_2, window_bounds = array<i64: 6, 1>}, {transform_indices = @transform_3, window_bounds = array<i64: 6, 1152>}]} {
    %c0 = arith.constant 0 : index
    %c0_0 = arith.constant 0 : index
    %0 = vector.load %arg1[%c0, %c0_0] : memref<6x32xf32, #tpu.memory_space<vmem>>, vector<6x32xf32>
    %c0_1 = arith.constant 0 : index
    %c0_2 = arith.constant 0 : index
    %1 = vector.load %arg2[%c0_1, %c0_2] : memref<32x1152xf32, #tpu.memory_space<vmem>>, vector<32x1152xf32>
    %cst = arith.constant dense<0.000000e+00> : vector<6x1152xf32>
    %2 = tpu.matmul %0, %1, %cst {dimension_numbers = #tpu.dot_dimension_numbers<[1], [0], [0], [1], [0, 0, 1, 1], [], []>} : vector<6x32xf32>, vector<32x1152xf32>, vector<6x1152xf32> -> vector<6x1152xf32>
    %c0_3 = arith.constant 0 : index
    %c0_4 = arith.constant 0 : index
    %3 = vector.load %arg3[%c0_3, %c0_4] : memref<6x1xf32, #tpu.memory_space<vmem>>, vector<6x1xf32>
    %4 = vector.broadcast %3 : vector<6x1xf32> to vector<6x1152xf32>
    %5 = arith.addf %2, %4 : vector<6x1152xf32>
    %c0_5 = arith.constant 0 : index
    %c0_6 = arith.constant 0 : index
    %6 = vector.load %arg4[%c0_5, %c0_6] : memref<6x1152xf32, #tpu.memory_space<vmem>>, vector<6x1152xf32>
    tpu.vector_store %arg4[%c0_5, %c0_6], %5 {strides = array<i32>} : memref<6x1152xf32, #tpu.memory_space<vmem>>, vector<6x1152xf32>,
    return
  }
  func.func @transform_0(%arg0: i32) -> (i32, i32) {
    %c0_i32 = arith.constant 0 : i32
    %c0_i32_0 = arith.constant 0 : i32
    %c0_i32_1 = arith.constant 0 : i32
    return %c0_i32, %c0_i32_0 : i32, i32
  }
  func.func @transform_1(%arg0: i32) -> (i32, i32) {
    %c0_i32 = arith.constant 0 : i32
    %c0_i32_0 = arith.constant 0 : i32
    return %c0_i32, %arg0 : i32, i32
  }
  func.func @transform_2(%arg0: i32) -> (i32, i32) {
    %c0_i32 = arith.constant 0 : i32
    %c0_i32_0 = arith.constant 0 : i32
    %c0_i32_1 = arith.constant 0 : i32
    return %c0_i32, %c0_i32_0 : i32, i32
  }
  func.func @transform_3(%arg0: i32) -> (i32, i32) {
    %c0_i32 = arith.constant 0 : i32
    %c0_i32_0 = arith.constant 0 : i32
    return %c0_i32, %arg0 : i32, i32
  }
}

module attributes {stable_mosaic.version = 11 : i64} {
  func.func @_conv_mm_kernel(%arg0: i32, %arg1: memref<16x152xf32, #tpu.memory_space<vmem>>, %arg2: memref<152x128xf32, #tpu.memory_space<vmem>>, %arg3: memref<16x1xf32, #tpu.memory_space<vmem>>, %arg4: memref<16x128xf32, #tpu.memory_space<vmem>>) attributes {dimension_semantics = [#tpu.dimension_semantics<parallel>], iteration_bounds = array<i64: 1>, scalar_prefetch = 0 : i64, scratch_operands = 0 : i64, tpu.core_type = #tpu.core_type<tc>, window_params = [{pipeline_mode = #tpu.pipeline_mode<synchronous>, transform_indices = @transform_0, window_bounds = array<i64: 16, 152>}, {transform_indices = @transform_1, window_bounds = array<i64: 152, 128>}, {pipeline_mode = #tpu.pipeline_mode<synchronous>, transform_indices = @transform_2, window_bounds = array<i64: 16, 1>}, {transform_indices = @transform_3, window_bounds = array<i64: 16, 128>}]} {
    %c0 = arith.constant 0 : index
    %c0_0 = arith.constant 0 : index
    %0 = vector.load %arg1[%c0, %c0_0] : memref<16x152xf32, #tpu.memory_space<vmem>>, vector<16x152xf32>
    %c0_1 = arith.constant 0 : index
    %c0_2 = arith.constant 0 : index
    %1 = vector.load %arg2[%c0_1, %c0_2] : memref<152x128xf32, #tpu.memory_space<vmem>>, vector<152x128xf32>
    %cst = arith.constant dense<0.000000e+00> : vector<16x128xf32>
    %2 = tpu.matmul %0, %1, %cst {dimension_numbers = #tpu.dot_dimension_numbers<[1], [0], [0], [1], [0, 0, 1, 1], [], []>} : vector<16x152xf32>, vector<152x128xf32>, vector<16x128xf32> -> vector<16x128xf32>
    %c0_3 = arith.constant 0 : index
    %c0_4 = arith.constant 0 : index
    %3 = vector.load %arg3[%c0_3, %c0_4] : memref<16x1xf32, #tpu.memory_space<vmem>>, vector<16x1xf32>
    %4 = vector.broadcast %3 : vector<16x1xf32> to vector<16x128xf32>
    %5 = arith.addf %2, %4 : vector<16x128xf32>
    %c0_5 = arith.constant 0 : index
    %c0_6 = arith.constant 0 : index
    %6 = vector.load %arg4[%c0_5, %c0_6] : memref<16x128xf32, #tpu.memory_space<vmem>>, vector<16x128xf32>
    tpu.vector_store %arg4[%c0_5, %c0_6], %5 {strides = array<i32>} : memref<16x128xf32, #tpu.memory_space<vmem>>, vector<16x128xf32>,
    return
  }
  func.func @transform_0(%arg0: i32) -> (i32, i32) {
    %c0_i32 = arith.constant 0 : i32
    %c0_i32_0 = arith.constant 0 : i32
    %c0_i32_1 = arith.constant 0 : i32
    return %c0_i32, %c0_i32_0 : i32, i32
  }
  func.func @transform_1(%arg0: i32) -> (i32, i32) {
    %c0_i32 = arith.constant 0 : i32
    %c0_i32_0 = arith.constant 0 : i32
    return %c0_i32, %arg0 : i32, i32
  }
  func.func @transform_2(%arg0: i32) -> (i32, i32) {
    %c0_i32 = arith.constant 0 : i32
    %c0_i32_0 = arith.constant 0 : i32
    %c0_i32_1 = arith.constant 0 : i32
    return %c0_i32, %c0_i32_0 : i32, i32
  }
  func.func @transform_3(%arg0: i32) -> (i32, i32) {
    %c0_i32 = arith.constant 0 : i32
    %c0_i32_0 = arith.constant 0 : i32
    return %c0_i32, %arg0 : i32, i32
  }
}

module attributes {stable_mosaic.version = 11 : i64} {
  func.func @_head_kernel(%arg0: i32, %arg1: memref<2x256xf32, #tpu.memory_space<vmem>>, %arg2: memref<256x120xf32, #tpu.memory_space<vmem>>, %arg3: memref<1x120xf32, #tpu.memory_space<vmem>>, %arg4: memref<120x84xf32, #tpu.memory_space<vmem>>, %arg5: memref<1x84xf32, #tpu.memory_space<vmem>>, %arg6: memref<84x320xf32, #tpu.memory_space<vmem>>, %arg7: memref<1x320xf32, #tpu.memory_space<vmem>>, %arg8: memref<320x10xf32, #tpu.memory_space<vmem>>, %arg9: memref<2x10xf32, #tpu.memory_space<vmem>>, %arg10: memref<2x10xf32, #tpu.memory_space<vmem>>) attributes {dimension_semantics = [#tpu.dimension_semantics<arbitrary>], iteration_bounds = array<i64: 1>, scalar_prefetch = 0 : i64, scratch_operands = 0 : i64, tpu.core_type = #tpu.core_type<tc>, window_params = [{pipeline_mode = #tpu.pipeline_mode<synchronous>, transform_indices = @transform_0, window_bounds = array<i64: 2, 256>}, {pipeline_mode = #tpu.pipeline_mode<synchronous>, transform_indices = @transform_1, window_bounds = array<i64: 256, 120>}, {pipeline_mode = #tpu.pipeline_mode<synchronous>, transform_indices = @transform_2, window_bounds = array<i64: 1, 120>}, {pipeline_mode = #tpu.pipeline_mode<synchronous>, transform_indices = @transform_3, window_bounds = array<i64: 120, 84>}, {pipeline_mode = #tpu.pipeline_mode<synchronous>, transform_indices = @transform_4, window_bounds = array<i64: 1, 84>}, {pipeline_mode = #tpu.pipeline_mode<synchronous>, transform_indices = @transform_5, window_bounds = array<i64: 84, 320>}, {pipeline_mode = #tpu.pipeline_mode<synchronous>, transform_indices = @transform_6, window_bounds = array<i64: 1, 320>}, {pipeline_mode = #tpu.pipeline_mode<synchronous>, transform_indices = @transform_7, window_bounds = array<i64: 320, 10>}, {pipeline_mode = #tpu.pipeline_mode<synchronous>, transform_indices = @transform_8, window_bounds = array<i64: 2, 10>}, {pipeline_mode = #tpu.pipeline_mode<synchronous>, transform_indices = @transform_9, window_bounds = array<i64: 2, 10>}]} {
    %c0 = arith.constant 0 : index
    %c0_0 = arith.constant 0 : index
    %0 = vector.load %arg1[%c0, %c0_0] : memref<2x256xf32, #tpu.memory_space<vmem>>, vector<2x256xf32>
    %c0_1 = arith.constant 0 : index
    %c0_2 = arith.constant 0 : index
    %1 = vector.load %arg2[%c0_1, %c0_2] : memref<256x120xf32, #tpu.memory_space<vmem>>, vector<256x120xf32>
    %cst = arith.constant dense<0.000000e+00> : vector<2x120xf32>
    %2 = tpu.matmul %0, %1, %cst {dimension_numbers = #tpu.dot_dimension_numbers<[1], [0], [0], [1], [0, 0, 1, 1], [], []>} : vector<2x256xf32>, vector<256x120xf32>, vector<2x120xf32> -> vector<2x120xf32>
    %c0_3 = arith.constant 0 : index
    %c0_4 = arith.constant 0 : index
    %3 = vector.load %arg3[%c0_3, %c0_4] : memref<1x120xf32, #tpu.memory_space<vmem>>, vector<1x120xf32>
    %4 = vector.broadcast %3 : vector<1x120xf32> to vector<2x120xf32>
    %5 = arith.addf %2, %4 : vector<2x120xf32>
    %cst_5 = arith.constant 0.000000e+00 : f32
    %6 = vector.broadcast %cst_5 : f32 to vector<2x120xf32>
    %7 = arith.maximumf %5, %6 : vector<2x120xf32>
    %c0_6 = arith.constant 0 : index
    %c0_7 = arith.constant 0 : index
    %8 = vector.load %arg4[%c0_6, %c0_7] : memref<120x84xf32, #tpu.memory_space<vmem>>, vector<120x84xf32>
    %cst_8 = arith.constant dense<0.000000e+00> : vector<2x84xf32>
    %9 = tpu.matmul %7, %8, %cst_8 {dimension_numbers = #tpu.dot_dimension_numbers<[1], [0], [0], [1], [0, 0, 1, 1], [], []>} : vector<2x120xf32>, vector<120x84xf32>, vector<2x84xf32> -> vector<2x84xf32>
    %c0_9 = arith.constant 0 : index
    %c0_10 = arith.constant 0 : index
    %10 = vector.load %arg5[%c0_9, %c0_10] : memref<1x84xf32, #tpu.memory_space<vmem>>, vector<1x84xf32>
    %11 = vector.broadcast %10 : vector<1x84xf32> to vector<2x84xf32>
    %12 = arith.addf %9, %11 : vector<2x84xf32>
    %cst_11 = arith.constant 0.000000e+00 : f32
    %13 = vector.broadcast %cst_11 : f32 to vector<2x84xf32>
    %14 = arith.maximumf %12, %13 : vector<2x84xf32>
    %c0_12 = arith.constant 0 : index
    %c0_13 = arith.constant 0 : index
    %15 = vector.load %arg6[%c0_12, %c0_13] : memref<84x320xf32, #tpu.memory_space<vmem>>, vector<84x320xf32>
    %cst_14 = arith.constant dense<0.000000e+00> : vector<2x320xf32>
    %16 = tpu.matmul %14, %15, %cst_14 {dimension_numbers = #tpu.dot_dimension_numbers<[1], [0], [0], [1], [0, 0, 1, 1], [], []>} : vector<2x84xf32>, vector<84x320xf32>, vector<2x320xf32> -> vector<2x320xf32>
    %c0_15 = arith.constant 0 : index
    %c0_16 = arith.constant 0 : index
    %17 = vector.load %arg7[%c0_15, %c0_16] : memref<1x320xf32, #tpu.memory_space<vmem>>, vector<1x320xf32>
    %18 = vector.broadcast %17 : vector<1x320xf32> to vector<2x320xf32>
    %19 = arith.subf %16, %18 : vector<2x320xf32>
    %20 = arith.mulf %19, %19 : vector<2x320xf32>
    %c0_17 = arith.constant 0 : index
    %c0_18 = arith.constant 0 : index
    %21 = vector.load %arg8[%c0_17, %c0_18] : memref<320x10xf32, #tpu.memory_space<vmem>>, vector<320x10xf32>
    %cst_19 = arith.constant dense<0.000000e+00> : vector<2x10xf32>
    %22 = tpu.matmul %20, %21, %cst_19 {dimension_numbers = #tpu.dot_dimension_numbers<[1], [0], [0], [1], [0, 0, 1, 1], [], []>} : vector<2x320xf32>, vector<320x10xf32>, vector<2x10xf32> -> vector<2x10xf32>
    %cst_20 = arith.constant 1.562500e+00 : f32
    %23 = vector.broadcast %cst_20 : f32 to vector<2x10xf32>
    %24 = arith.mulf %22, %23 : vector<2x10xf32>
    %c0_21 = arith.constant 0 : index
    %c0_22 = arith.constant 0 : index
    %25 = vector.load %arg10[%c0_21, %c0_22] : memref<2x10xf32, #tpu.memory_space<vmem>>, vector<2x10xf32>
    tpu.vector_store %arg10[%c0_21, %c0_22], %24 {strides = array<i32>} : memref<2x10xf32, #tpu.memory_space<vmem>>, vector<2x10xf32>,
    %cst_23 = arith.constant 0.000000e+00 : f32
    %26 = vector.broadcast %cst_23 : f32 to vector<2x10xf32>
    %27 = arith.subf %26, %24 : vector<2x10xf32>
    %28 = math.exp %27 : vector<2x10xf32>
    %c0_24 = arith.constant 0 : index
    %c0_25 = arith.constant 0 : index
    %29 = vector.load %arg9[%c0_24, %c0_25] : memref<2x10xf32, #tpu.memory_space<vmem>>, vector<2x10xf32>
    tpu.vector_store %arg9[%c0_24, %c0_25], %28 {strides = array<i32>} : memref<2x10xf32, #tpu.memory_space<vmem>>, vector<2x10xf32>,
    return
  }
  func.func @transform_0(%arg0: i32) -> (i32, i32) {
    %c0_i32 = arith.constant 0 : i32
    %c0_i32_0 = arith.constant 0 : i32
    %c0_i32_1 = arith.constant 0 : i32
    return %c0_i32, %c0_i32_0 : i32, i32
  }
  func.func @transform_1(%arg0: i32) -> (i32, i32) {
    %c0_i32 = arith.constant 0 : i32
    %c0_i32_0 = arith.constant 0 : i32
    %c0_i32_1 = arith.constant 0 : i32
    return %c0_i32, %c0_i32_0 : i32, i32
  }
  func.func @transform_2(%arg0: i32) -> (i32, i32) {
    %c0_i32 = arith.constant 0 : i32
    %c0_i32_0 = arith.constant 0 : i32
    %c0_i32_1 = arith.constant 0 : i32
    return %c0_i32, %c0_i32_0 : i32, i32
  }
  func.func @transform_3(%arg0: i32) -> (i32, i32) {
    %c0_i32 = arith.constant 0 : i32
    %c0_i32_0 = arith.constant 0 : i32
    %c0_i32_1 = arith.constant 0 : i32
    return %c0_i32, %c0_i32_0 : i32, i32
  }
  func.func @transform_4(%arg0: i32) -> (i32, i32) {
    %c0_i32 = arith.constant 0 : i32
    %c0_i32_0 = arith.constant 0 : i32
    %c0_i32_1 = arith.constant 0 : i32
    return %c0_i32, %c0_i32_0 : i32, i32
  }
  func.func @transform_5(%arg0: i32) -> (i32, i32) {
    %c0_i32 = arith.constant 0 : i32
    %c0_i32_0 = arith.constant 0 : i32
    %c0_i32_1 = arith.constant 0 : i32
    return %c0_i32, %c0_i32_0 : i32, i32
  }
  func.func @transform_6(%arg0: i32) -> (i32, i32) {
    %c0_i32 = arith.constant 0 : i32
    %c0_i32_0 = arith.constant 0 : i32
    %c0_i32_1 = arith.constant 0 : i32
    return %c0_i32, %c0_i32_0 : i32, i32
  }
  func.func @transform_7(%arg0: i32) -> (i32, i32) {
    %c0_i32 = arith.constant 0 : i32
    %c0_i32_0 = arith.constant 0 : i32
    %c0_i32_1 = arith.constant 0 : i32
    return %c0_i32, %c0_i32_0 : i32, i32
  }
  func.func @transform_8(%arg0: i32) -> (i32, i32) {
    %c0_i32 = arith.constant 0 : i32
    %c0_i32_0 = arith.constant 0 : i32
    %c0_i32_1 = arith.constant 0 : i32
    return %c0_i32, %c0_i32_0 : i32, i32
  }
  func.func @transform_9(%arg0: i32) -> (i32, i32) {
    %c0_i32 = arith.constant 0 : i32
    %c0_i32_0 = arith.constant 0 : i32
    %c0_i32_1 = arith.constant 0 : i32
    return %c0_i32, %c0_i32_0 : i32, i32
  }
}

</mosaic_0001>

<llo_original>
// kernel: cnn_duq_forward.3
$region0: #{cnn_duq_forward.3}
  #allocation0 [shape = 'u32[]', space=smem, size = 0x4, offset = 0x4, fixed_abs, tag = 'smem constant byte address 0x4 - core index']
  #allocation1 [shape = 'u32[144,128]{1,0:T(1,128)}', space=vmem, size = 0x12000, scoped, tag = 'internal scratch']
  %s0 = inlined_call_operand.vmem [shape: f32[6,32], index: 0, kind: input, shape index: {}]
  %s1 = inlined_call_operand.vmem [shape: f32[32,1152], index: 1, kind: input, shape index: {}]
  %s2 = inlined_call_operand.vmem [shape: f32[6,1], index: 2, kind: input, shape index: {}]
  %s3 = inlined_call_operand.vmem [shape: f32[6,1152], index: 3, kind: output, shape index: {}]
  %s4 = sld [smem:[#allocation0]]
  $region22: #{cnn_duq_forward.3} parent=0
    _
  %s6 = ssub.s32 1, %s4
  %s7 = scalar_select 0, %s6, %s4
  // Predicated region
  $region2: #{cnn_duq_forward.3} parent=0 // pred_check
    _
  $region3: #{cnn_duq_forward.3} parent=0 // pred_check_branch
    %9 = sbr.rel (0) target = $region5
  $region4: #{cnn_duq_forward.3} parent=0 // pred_region
    _
  $region5: #{cnn_duq_forward.3} parent=0 // pred_fallthru
    _
  // Predicated region
  $region6: #{cnn_duq_forward.3} parent=0 // pred_check
    _
  $region7: #{cnn_duq_forward.3} parent=0 // pred_check_branch
    %11 = sbr.rel (0) target = $region9
  $region8: #{cnn_duq_forward.3} parent=0 // pred_region
    _
  $region9: #{cnn_duq_forward.3} parent=0 // pred_fallthru
    _
  // Predicated region
  $region10: #{cnn_duq_forward.3} parent=0 // pred_check
    _
  $region11: #{cnn_duq_forward.3} parent=0 // pred_check_branch
    %13 = sbr.rel (0) target = $region13
  $region12: #{cnn_duq_forward.3} parent=0 // pred_region
    _
  $region13: #{cnn_duq_forward.3} parent=0 // pred_fallthru
    _
  %v14 = vld [vmem:[%s0] sm:$0x3f]
  %v15 = vld [vmem:[%s1] sm:$0xff]
  %v16 = vld [vmem:[%s1 + $0x8] sm:$0xff]
  %v17 = vld [vmem:[%s1 + $0x10] sm:$0xff]
  %v18 = vld [vmem:[%s1 + $0x18] sm:$0xff]
  %v19 = vld [vmem:[%s1 + $0x20] sm:$0xff]
  %v20 = vld [vmem:[%s1 + $0x28] sm:$0xff]
  %v21 = vld [vmem:[%s1 + $0x30] sm:$0xff]
  %v22 = vld [vmem:[%s1 + $0x38] sm:$0xff]
  %v23 = vld [vmem:[%s1 + $0x40] sm:$0xff]
  %v24 = vld [vmem:[%s1 + $0x48] sm:$0xff]
  %v25 = vld [vmem:[%s1 + $0x50] sm:$0xff]
  %v26 = vld [vmem:[%s1 + $0x58] sm:$0xff]
  %v27 = vld [vmem:[%s1 + $0x60] sm:$0xff]
  %v28 = vld [vmem:[%s1 + $0x68] sm:$0xff]
  %v29 = vld [vmem:[%s1 + $0x70] sm:$0xff]
  %v30 = vld [vmem:[%s1 + $0x78] sm:$0xff]
  %v31 = vld [vmem:[%s1 + $0x80] sm:$0xff]
  %v32 = vld [vmem:[%s1 + $0x88] sm:$0xff]
  %v33 = vld [vmem:[%s1 + $0x90] sm:$0xff]
  %v34 = vld [vmem:[%s1 + $0x98] sm:$0xff]
  %v35 = vld [vmem:[%s1 + $0xa0] sm:$0xff]
  %v36 = vld [vmem:[%s1 + $0xa8] sm:$0xff]
  %v37 = vld [vmem:[%s1 + $0xb0] sm:$0xff]
  %v38 = vld [vmem:[%s1 + $0xb8] sm:$0xff]
  %v39 = vld [vmem:[%s1 + $0xc0] sm:$0xff]
  %v40 = vld [vmem:[%s1 + $0xc8] sm:$0xff]
  %v41 = vld [vmem:[%s1 + $0xd0] sm:$0xff]
  %v42 = vld [vmem:[%s1 + $0xd8] sm:$0xff]
  %v43 = vld [vmem:[%s1 + $0xe0] sm:$0xff]
  %v44 = vld [vmem:[%s1 + $0xe8] sm:$0xff]
  %v45 = vld [vmem:[%s1 + $0xf0] sm:$0xff]
  %v46 = vld [vmem:[%s1 + $0xf8] sm:$0xff]
  %v47 = vld [vmem:[%s1 + $0x100] sm:$0xff]
  %v48 = vld [vmem:[%s1 + $0x108] sm:$0xff]
  %v49 = vld [vmem:[%s1 + $0x110] sm:$0xff]
  %v50 = vld [vmem:[%s1 + $0x118] sm:$0xff]
  %v51 = vld [vmem:[%s2] sm:$0x3f]
  %53 = vset.pattern.permute.xlu0 0
  %54 = vperm.xlu0 %53, %v51
  %v55 = vpop.permute.xlu0 %54
  %vm57 = vcmask 261120
  %v59 = vsel %vm57, %v14, 0
  %61 = vmatprep.subr.mxu0 %v16
  %62 = vmatpush1.msra.mxu0 %v15
  %63 = vmatprep.subr.mxu0 %v25
  %64 = vmatpush1.msra.mxu0 %v24
  %65 = vmatprep.subr.mxu0 %v34
  %66 = vmatpush1.msra.mxu0 %v33
  %67 = vmatprep.subr.mxu0 %v43
  %68 = vmatpush1.msra.mxu0 %v42
  %69 = vmatprep.subr.mxu0 0.0
  %70 = vmatpush1.msra.mxu0 0.0
  %71 = vmatprep.subr.mxu0 0.0
  %72 = vmatpush1.msra.mxu0 0.0
  %73 = vmatprep.subr.mxu0 0.0
  %74 = vmatpush1.msra.mxu0 0.0
  %75 = vmatprep.subr.mxu0 0.0
  %76 = vmatpush1.msra.mxu0 0.0
  %77 = vmatprep.subr.mxu0 0.0
  %78 = vmatpush1.msra.mxu0 0.0
  %79 = vmatprep.subr.mxu0 0.0
  %80 = vmatpush1.msra.mxu0 0.0
  %81 = vmatprep.subr.mxu0 0.0
  %82 = vmatpush1.msra.mxu0 0.0
  %83 = vmatprep.subr.mxu0 0.0
  %84 = vmatpush1.msra.mxu0 0.0
  %85 = vmatprep.subr.mxu0 0.0
  %86 = vmatpush1.msra.mxu0 0.0
  %87 = vmatprep.subr.mxu0 0.0
  %88 = vmatpush1.msra.mxu0 0.0
  %89 = vmatprep.subr.mxu0 0.0
  %90 = vmatpush1.msra.mxu0 0.0
  %91 = vmatprep.subr.mxu0 0.0
  %92 = vmatpush1.msra.mxu0 0.0
  %93 = vmatprep.subr.mxu0 0.0
  %94 = vmatpush1.msra.mxu0 0.0
  %95 = vmatprep.subr.mxu0 0.0
  %96 = vmatpush1.msra.mxu0 0.0
  %97 = vmatprep.subr.mxu0 0.0
  %98 = vmatpush1.msra.mxu0 0.0
  %99 = vmatprep.subr.mxu0 0.0
  %100 = vmatpush1.msra.mxu0 0.0
  %101 = vmatprep.subr.mxu0 0.0
  %102 = vmatpush1.msra.mxu0 0.0
  %103 = vmatprep.subr.mxu0 0.0
  %104 = vmatpush1.msra.mxu0 0.0
  %105 = vmatprep.subr.mxu0 0.0
  %106 = vmatpush1.msra.mxu0 0.0
  %107 = vmatprep.subr.mxu0 0.0
  %108 = vmatpush1.msra.mxu0 0.0
  %109 = vmatprep.subr.mxu0 0.0
  %110 = vmatpush1.msra.mxu0 0.0
  %111 = vmatprep.subr.mxu0 0.0
  %112 = vmatpush1.msra.mxu0 0.0
  %113 = vmatprep.subr.mxu0 0.0
  %114 = vmatpush1.msra.mxu0 0.0
  %115 = vmatprep.subr.mxu0 0.0
  %116 = vmatpush1.msra.mxu0 0.0
  %117 = vmatprep.subr.mxu0 0.0
  %118 = vmatpush1.msra.mxu0 0.0
  %119 = vmatprep.subr.mxu0 0.0
  %120 = vmatpush1.msra.mxu0 0.0
  %121 = vmatprep.subr.mxu0 0.0
  %122 = vmatpush1.msra.mxu0 0.0
  %123 = vmatprep.subr.mxu0 0.0
  %124 = vmatpush1.msra.mxu0 0.0
  %125 = vmatprep.mubr.f32.mxu0 0.0
  %126 = vmatmul.mubr.f32.gmra.mrb[0].mxu0 %v59
  %v127 = vpop.f32.mrb[0].mxu0
  %v128 = vadd.f32 %v55, %v127
  %v129 = vpop.f32.mrb[0].mxu0
  %v130 = vadd.f32 %v55, %v129
  %131 = vdwg.mxu0
  %132 = vmatprep.subr.mxu0 %v18
  %133 = vmatpush1.msra.mxu0 %v17
  %134 = vmatprep.subr.mxu0 %v27
  %135 = vmatpush1.msra.mxu0 %v26
  %136 = vmatprep.subr.mxu0 %v36
  %137 = vmatpush1.msra.mxu0 %v35
  %138 = vmatprep.subr.mxu0 %v45
  %139 = vmatpush1.msra.mxu0 %v44
  %140 = vmatprep.subr.mxu0 0.0
  %141 = vmatpush1.msra.mxu0 0.0
  %142 = vmatprep.subr.mxu0 0.0
  %143 = vmatpush1.msra.mxu0 0.0
  %144 = vmatprep.subr.mxu0 0.0
  %145 = vmatpush1.msra.mxu0 0.0
  %146 = vmatprep.subr.mxu0 0.0
  %147 = vmatpush1.msra.mxu0 0.0
  %148 = vmatprep.subr.mxu0 0.0
  %149 = vmatpush1.msra.mxu0 0.0
  %150 = vmatprep.subr.mxu0 0.0
  %151 = vmatpush1.msra.mxu0 0.0
  %152 = vmatprep.subr.mxu0 0.0
  %153 = vmatpush1.msra.mxu0 0.0
  %154 = vmatprep.subr.mxu0 0.0
  %155 = vmatpush1.msra.mxu0 0.0
  %156 = vmatprep.subr.mxu0 0.0
  %157 = vmatpush1.msra.mxu0 0.0
  %158 = vmatprep.subr.mxu0 0.0
  %159 = vmatpush1.msra.mxu0 0.0
  %160 = vmatprep.subr.mxu0 0.0
  %161 = vmatpush1.msra.mxu0 0.0
  %162 = vmatprep.subr.mxu0 0.0
  %163 = vmatpush1.msra.mxu0 0.0
  %164 = vmatprep.subr.mxu0 0.0
  %165 = vmatpush1.msra.mxu0 0.0
  %166 = vmatprep.subr.mxu0 0.0
  %167 = vmatpush1.msra.mxu0 0.0
  %168 = vmatprep.subr.mxu0 0.0
  %169 = vmatpush1.msra.mxu0 0.0
  %170 = vmatprep.subr.mxu0 0.0
  %171 = vmatpush1.msra.mxu0 0.0
  %172 = vmatprep.subr.mxu0 0.0
  %173 = vmatpush1.msra.mxu0 0.0
  %174 = vmatprep.subr.mxu0 0.0
  %175 = vmatpush1.msra.mxu0 0.0
  %176 = vmatprep.subr.mxu0 0.0
  %177 = vmatpush1.msra.mxu0 0.0
  %178 = vmatprep.subr.mxu0 0.0
  %179 = vmatpush1.msra.mxu0 0.0
  %180 = vmatprep.subr.mxu0 0.0
  %181 = vmatpush1.msra.mxu0 0.0
  %182 = vmatprep.subr.mxu0 0.0
  %183 = vmatpush1.msra.mxu0 0.0
  %184 = vmatprep.subr.mxu0 0.0
  %185 = vmatpush1.msra.mxu0 0.0
  %186 = vmatprep.subr.mxu0 0.0
  %187 = vmatpush1.msra.mxu0 0.0
  %188 = vmatprep.subr.mxu0 0.0
  %189 = vmatpush1.msra.mxu0 0.0
  %190 = vmatprep.subr.mxu0 0.0
  %191 = vmatpush1.msra.mxu0 0.0
  %192 = vmatprep.subr.mxu0 0.0
  %193 = vmatpush1.msra.mxu0 0.0
  %194 = vmatprep.subr.mxu0 0.0
  %195 = vmatpush1.msra.mxu0 0.0
  %196 = vmatprep.mubr.f32.mxu0 0.0
  %197 = vmatmul.mubr.f32.gmra.mrb[0].mxu0 %v59
  %v198 = vpop.f32.mrb[0].mxu0
  %v199 = vadd.f32 %v55, %v198
  %v200 = vpop.f32.mrb[0].mxu0
  %v201 = vadd.f32 %v55, %v200
  %202 = vdwg.mxu0
  %203 = vmatprep.subr.mxu0 %v20
  %204 = vmatpush1.msra.mxu0 %v19
  %205 = vmatprep.subr.mxu0 %v29
  %206 = vmatpush1.msra.mxu0 %v28
  %207 = vmatprep.subr.mxu0 %v38
  %208 = vmatpush1.msra.mxu0 %v37
  %209 = vmatprep.subr.mxu0 %v47
  %210 = vmatpush1.msra.mxu0 %v46
  %211 = vmatprep.subr.mxu0 0.0
  %212 = vmatpush1.msra.mxu0 0.0
  %213 = vmatprep.subr.mxu0 0.0
  %214 = vmatpush1.msra.mxu0 0.0
  %215 = vmatprep.subr.mxu0 0.0
  %216 = vmatpush1.msra.mxu0 0.0
  %217 = vmatprep.subr.mxu0 0.0
  %218 = vmatpush1.msra.mxu0 0.0
  %219 = vmatprep.subr.mxu0 0.0
  %220 = vmatpush1.msra.mxu0 0.0
  %221 = vmatprep.subr.mxu0 0.0
  %222 = vmatpush1.msra.mxu0 0.0
  %223 = vmatprep.subr.mxu0 0.0
  %224 = vmatpush1.msra.mxu0 0.0
  %225 = vmatprep.subr.mxu0 0.0
  %226 = vmatpush1.msra.mxu0 0.0
  %227 = vmatprep.subr.mxu0 0.0
  %228 = vmatpush1.msra.mxu0 0.0
  %229 = vmatprep.subr.mxu0 0.0
  %230 = vmatpush1.msra.mxu0 0.0
  %231 = vmatprep.subr.mxu0 0.0
  %232 = vmatpush1.msra.mxu0 0.0
  %233 = vmatprep.subr.mxu0 0.0
  %234 = vmatpush1.msra.mxu0 0.0
  %235 = vmatprep.subr.mxu0 0.0
  %236 = vmatpush1.msra.mxu0 0.0
  %237 = vmatprep.subr.mxu0 0.0
  %238 = vmatpush1.msra.mxu0 0.0
  %239 = vmatprep.subr.mxu0 0.0
  %240 = vmatpush1.msra.mxu0 0.0
  %241 = vmatprep.subr.mxu0 0.0
  %242 = vmatpush1.msra.mxu0 0.0
  %243 = vmatprep.subr.mxu0 0.0
  %244 = vmatpush1.msra.mxu0 0.0
  %245 = vmatprep.subr.mxu0 0.0
  %246 = vmatpush1.msra.mxu0 0.0
  %247 = vmatprep.subr.mxu0 0.0
  %248 = vmatpush1.msra.mxu0 0.0
  %249 = vmatprep.subr.mxu0 0.0
  %250 = vmatpush1.msra.mxu0 0.0
  %251 = vmatprep.subr.mxu0 0.0
  %252 = vmatpush1.msra.mxu0 0.0
  %253 = vmatprep.subr.mxu0 0.0
  %254 = vmatpush1.msra.mxu0 0.0
  %255 = vmatprep.subr.mxu0 0.0
  %256 = vmatpush1.msra.mxu0 0.0
  %257 = vmatprep.subr.mxu0 0.0
  %258 = vmatpush1.msra.mxu0 0.0
  %259 = vmatprep.subr.mxu0 0.0
  %260 = vmatpush1.msra.mxu0 0.0
  %261 = vmatprep.subr.mxu0 0.0
  %262 = vmatpush1.msra.mxu0 0.0
  %263 = vmatprep.subr.mxu0 0.0
  %264 = vmatpush1.msra.mxu0 0.0
  %265 = vmatprep.subr.mxu0 0.0
  %266 = vmatpush1.msra.mxu0 0.0
  %267 = vmatprep.mubr.f32.mxu0 0.0
  %268 = vmatmul.mubr.f32.gmra.mrb[0].mxu0 %v59
  %v269 = vpop.f32.mrb[0].mxu0
  %v270 = vadd.f32 %v55, %v269
  %v271 = vpop.f32.mrb[0].mxu0
  %v272 = vadd.f32 %v55, %v271
  %273 = vdwg.mxu0
  %274 = vmatprep.subr.mxu0 %v22
  %275 = vmatpush1.msra.mxu0 %v21
  %276 = vmatprep.subr.mxu0 %v31
  %277 = vmatpush1.msra.mxu0 %v30
  %278 = vmatprep.subr.mxu0 %v40
  %279 = vmatpush1.msra.mxu0 %v39
  %280 = vmatprep.subr.mxu0 %v49
  %281 = vmatpush1.msra.mxu0 %v48
  %282 = vmatprep.subr.mxu0 0.0
  %283 = vmatpush1.msra.mxu0 0.0
  %284 = vmatprep.subr.mxu0 0.0
  %285 = vmatpush1.msra.mxu0 0.0
  %286 = vmatprep.subr.mxu0 0.0
  %287 = vmatpush1.msra.mxu0 0.0
  %288 = vmatprep.subr.mxu0 0.0
  %289 = vmatpush1.msra.mxu0 0.0
  %290 = vmatprep.subr.mxu0 0.0
  %291 = vmatpush1.msra.mxu0 0.0
  %292 = vmatprep.subr.mxu0 0.0
  %293 = vmatpush1.msra.mxu0 0.0
  %294 = vmatprep.subr.mxu0 0.0
  %295 = vmatpush1.msra.mxu0 0.0
  %296 = vmatprep.subr.mxu0 0.0
  %297 = vmatpush1.msra.mxu0 0.0
  %298 = vmatprep.subr.mxu0 0.0
  %299 = vmatpush1.msra.mxu0 0.0
  %300 = vmatprep.subr.mxu0 0.0
  %301 = vmatpush1.msra.mxu0 0.0
  %302 = vmatprep.subr.mxu0 0.0
  %303 = vmatpush1.msra.mxu0 0.0
  %304 = vmatprep.subr.mxu0 0.0
  %305 = vmatpush1.msra.mxu0 0.0
  %306 = vmatprep.subr.mxu0 0.0
  %307 = vmatpush1.msra.mxu0 0.0
  %308 = vmatprep.subr.mxu0 0.0
  %309 = vmatpush1.msra.mxu0 0.0
  %310 = vmatprep.subr.mxu0 0.0
  %311 = vmatpush1.msra.mxu0 0.0
  %312 = vmatprep.subr.mxu0 0.0
  %313 = vmatpush1.msra.mxu0 0.0
  %314 = vmatprep.subr.mxu0 0.0
  %315 = vmatpush1.msra.mxu0 0.0
  %316 = vmatprep.subr.mxu0 0.0
  %317 = vmatpush1.msra.mxu0 0.0
  %318 = vmatprep.subr.mxu0 0.0
  %319 = vmatpush1.msra.mxu0 0.0
  %320 = vmatprep.subr.mxu0 0.0
  %321 = vmatpush1.msra.mxu0 0.0
  %322 = vmatprep.subr.mxu0 0.0
  %323 = vmatpush1.msra.mxu0 0.0
  %324 = vmatprep.subr.mxu0 0.0
  %325 = vmatpush1.msra.mxu0 0.0
  %326 = vmatprep.subr.mxu0 0.0
  %327 = vmatpush1.msra.mxu0 0.0
  %328 = vmatprep.subr.mxu0 0.0
  %329 = vmatpush1.msra.mxu0 0.0
  %330 = vmatprep.subr.mxu0 0.0
  %331 = vmatpush1.msra.mxu0 0.0
  %332 = vmatprep.subr.mxu0 0.0
  %333 = vmatpush1.msra.mxu0 0.0
  %334 = vmatprep.subr.mxu0 0.0
  %335 = vmatpush1.msra.mxu0 0.0
  %336 = vmatprep.subr.mxu0 0.0
  %337 = vmatpush1.msra.mxu0 0.0
  %338 = vmatprep.mubr.f32.mxu0 0.0
  %339 = vmatmul.mubr.f32.gmra.mrb[0].mxu0 %v59
  %v340 = vpop.f32.mrb[0].mxu0
  %v341 = vadd.f32 %v55, %v340
  %v342 = vpop.f32.mrb[0].mxu0
  %v343 = vadd.f32 %v55, %v342
  %344 = vdwg.mxu0
  %345 = vmatprep.subr.mxu0 0.0
  %346 = vmatpush1.msra.mxu0 %v23
  %347 = vmatprep.subr.mxu0 0.0
  %348 = vmatpush1.msra.mxu0 %v32
  %349 = vmatprep.subr.mxu0 0.0
  %350 = vmatpush1.msra.mxu0 %v41
  %351 = vmatprep.subr.mxu0 0.0
  %352 = vmatpush1.msra.mxu0 %v50
  %353 = vmatprep.subr.mxu0 0.0
  %354 = vmatpush1.msra.mxu0 0.0
  %355 = vmatprep.subr.mxu0 0.0
  %356 = vmatpush1.msra.mxu0 0.0
  %357 = vmatprep.subr.mxu0 0.0
  %358 = vmatpush1.msra.mxu0 0.0
  %359 = vmatprep.subr.mxu0 0.0
  %360 = vmatpush1.msra.mxu0 0.0
  %361 = vmatprep.subr.mxu0 0.0
  %362 = vmatpush1.msra.mxu0 0.0
  %363 = vmatprep.subr.mxu0 0.0
  %364 = vmatpush1.msra.mxu0 0.0
  %365 = vmatprep.subr.mxu0 0.0
  %366 = vmatpush1.msra.mxu0 0.0
  %367 = vmatprep.subr.mxu0 0.0
  %368 = vmatpush1.msra.mxu0 0.0
  %369 = vmatprep.subr.mxu0 0.0
  %370 = vmatpush1.msra.mxu0 0.0
  %371 = vmatprep.subr.mxu0 0.0
  %372 = vmatpush1.msra.mxu0 0.0
  %373 = vmatprep.subr.mxu0 0.0
  %374 = vmatpush1.msra.mxu0 0.0
  %375 = vmatprep.subr.mxu0 0.0
  %376 = vmatpush1.msra.mxu0 0.0
  %377 = vmatprep.subr.mxu0 0.0
  %378 = vmatpush1.msra.mxu0 0.0
  %379 = vmatprep.subr.mxu0 0.0
  %380 = vmatpush1.msra.mxu0 0.0
  %381 = vmatprep.subr.mxu0 0.0
  %382 = vmatpush1.msra.mxu0 0.0
  %383 = vmatprep.subr.mxu0 0.0
  %384 = vmatpush1.msra.mxu0 0.0
  %385 = vmatprep.subr.mxu0 0.0
  %386 = vmatpush1.msra.mxu0 0.0
  %387 = vmatprep.subr.mxu0 0.0
  %388 = vmatpush1.msra.mxu0 0.0
  %389 = vmatprep.subr.mxu0 0.0
  %390 = vmatpush1.msra.mxu0 0.0
  %391 = vmatprep.subr.mxu0 0.0
  %392 = vmatpush1.msra.mxu0 0.0
  %393 = vmatprep.subr.mxu0 0.0
  %394 = vmatpush1.msra.mxu0 0.0
  %395 = vmatprep.subr.mxu0 0.0
  %396 = vmatpush1.msra.mxu0 0.0
  %397 = vmatprep.subr.mxu0 0.0
  %398 = vmatpush1.msra.mxu0 0.0
  %399 = vmatprep.subr.mxu0 0.0
  %400 = vmatpush1.msra.mxu0 0.0
  %401 = vmatprep.subr.mxu0 0.0
  %402 = vmatpush1.msra.mxu0 0.0
  %403 = vmatprep.subr.mxu0 0.0
  %404 = vmatpush1.msra.mxu0 0.0
  %405 = vmatprep.subr.mxu0 0.0
  %406 = vmatpush1.msra.mxu0 0.0
  %407 = vmatprep.subr.mxu0 0.0
  %408 = vmatpush1.msra.mxu0 0.0
  %409 = vmatprep.mubr.f32.mxu0 0.0
  %410 = vmatmul.mubr.f32.gmra.mrb[0].mxu0 %v59
  %v411 = vpop.f32.mrb[0].mxu0
  %v412 = vadd.f32 %v55, %v411
  %v413 = vpop.f32.mrb[0].mxu0
  %414 = vdwg.mxu0
  %415 = vst [vmem:[%s3] sm:$0x3f] %v128
  %416 = vst [vmem:[%s3 + $0x8] sm:$0x3f] %v130
  %417 = vst [vmem:[%s3 + $0x10] sm:$0x3f] %v199
  %418 = vst [vmem:[%s3 + $0x18] sm:$0x3f] %v201
  %419 = vst [vmem:[%s3 + $0x20] sm:$0x3f] %v270
  %420 = vst [vmem:[%s3 + $0x28] sm:$0x3f] %v272
  %421 = vst [vmem:[%s3 + $0x30] sm:$0x3f] %v341
  %422 = vst [vmem:[%s3 + $0x38] sm:$0x3f] %v343
  %423 = vst [vmem:[%s3 + $0x40] sm:$0x3f] %v412
  // Predicated region
  $region14: #{cnn_duq_forward.3} parent=0 // pred_check
    _
  $region15: #{cnn_duq_forward.3} parent=0 // pred_check_branch
    %425 = sbr.rel (0) target = $region17
  $region16: #{cnn_duq_forward.3} parent=0 // pred_region
    _
  $region17: #{cnn_duq_forward.3} parent=0 // pred_fallthru
    _
  // Predicated region
  $region18: #{cnn_duq_forward.3} parent=0 // pred_check
    _
  $region19: #{cnn_duq_forward.3} parent=0 // pred_check_branch
    %427 = sbr.rel (0) target = $region21
  $region20: #{cnn_duq_forward.3} parent=0 // pred_region
    _
  $region21: #{cnn_duq_forward.3} parent=0 // pred_fallthru
    _

// kernel: cnn_duq_forward.4
$region0: #{cnn_duq_forward.4}
  #allocation0 [shape = 'u32[]', space=smem, size = 0x4, offset = 0x4, fixed_abs, tag = 'smem constant byte address 0x4 - core index']
  #allocation1 [shape = 'u32[144,128]{1,0:T(1,128)}', space=vmem, size = 0x12000, scoped, tag = 'internal scratch']
  %s0 = inlined_call_operand.vmem [shape: f32[16,152], index: 0, kind: input, shape index: {}]
  %s1 = inlined_call_operand.vmem [shape: f32[152,128], index: 1, kind: input, shape index: {}]
  %s2 = inlined_call_operand.vmem [shape: f32[16,1], index: 2, kind: input, shape index: {}]
  %s3 = inlined_call_operand.vmem [shape: f32[16,128], index: 3, kind: output, shape index: {}]
  %s4 = sld [smem:[#allocation0]]
  $region22: #{cnn_duq_forward.4} parent=0
    _
  %s6 = ssub.s32 1, %s4
  %s7 = scalar_select 0, %s6, %s4
  // Predicated region
  $region2: #{cnn_duq_forward.4} parent=0 // pred_check
    _
  $region3: #{cnn_duq_forward.4} parent=0 // pred_check_branch
    %9 = sbr.rel (0) target = $region5
  $region4: #{cnn_duq_forward.4} parent=0 // pred_region
    _
  $region5: #{cnn_duq_forward.4} parent=0 // pred_fallthru
    _
  // Predicated region
  $region6: #{cnn_duq_forward.4} parent=0 // pred_check
    _
  $region7: #{cnn_duq_forward.4} parent=0 // pred_check_branch
    %11 = sbr.rel (0) target = $region9
  $region8: #{cnn_duq_forward.4} parent=0 // pred_region
    _
  $region9: #{cnn_duq_forward.4} parent=0 // pred_fallthru
    _
  // Predicated region
  $region10: #{cnn_duq_forward.4} parent=0 // pred_check
    _
  $region11: #{cnn_duq_forward.4} parent=0 // pred_check_branch
    %13 = sbr.rel (0) target = $region13
  $region12: #{cnn_duq_forward.4} parent=0 // pred_region
    _
  $region13: #{cnn_duq_forward.4} parent=0 // pred_fallthru
    _
  %v14 = vld [vmem:[%s0] sm:$0xff]
  %v15 = vld [vmem:[%s0 + $0x8] sm:$0xff]
  %v16 = vld [vmem:[%s0 + $0x10] sm:$0xff]
  %v17 = vld [vmem:[%s0 + $0x18] sm:$0xff]
  %v18 = vld [vmem:[%s1] sm:$0xff]
  %v19 = vld [vmem:[%s1 + $0x8] sm:$0xff]
  %v20 = vld [vmem:[%s1 + $0x10] sm:$0xff]
  %v21 = vld [vmem:[%s1 + $0x18] sm:$0xff]
  %v22 = vld [vmem:[%s1 + $0x20] sm:$0xff]
  %v23 = vld [vmem:[%s1 + $0x28] sm:$0xff]
  %v24 = vld [vmem:[%s1 + $0x30] sm:$0xff]
  %v25 = vld [vmem:[%s1 + $0x38] sm:$0xff]
  %v26 = vld [vmem:[%s1 + $0x40] sm:$0xff]
  %v27 = vld [vmem:[%s1 + $0x48] sm:$0xff]
  %v28 = vld [vmem:[%s1 + $0x50] sm:$0xff]
  %v29 = vld [vmem:[%s1 + $0x58] sm:$0xff]
  %v30 = vld [vmem:[%s1 + $0x60] sm:$0xff]
  %v31 = vld [vmem:[%s1 + $0x68] sm:$0xff]
  %v32 = vld [vmem:[%s1 + $0x70] sm:$0xff]
  %v33 = vld [vmem:[%s1 + $0x78] sm:$0xff]
  %v34 = vld [vmem:[%s1 + $0x80] sm:$0xff]
  %v35 = vld [vmem:[%s1 + $0x88] sm:$0xff]
  %v36 = vld [vmem:[%s1 + $0x90] sm:$0xff]
  %v37 = vld [vmem:[%s2] sm:$0xff]
  %v38 = vld [vmem:[%s2 + $0x8] sm:$0xff]
  %40 = vset.pattern.permute.xlu0 0
  %41 = vperm.xlu0 %40, %v37
  %v42 = vpop.permute.xlu0 %41
  %45 = vset.pattern.permute.xlu0 0
  %46 = vperm.xlu0 %45, %v38
  %v47 = vpop.permute.xlu0 %46
  %vm49 = vcmask 195584
  %v51 = vsel %vm49, %v15, 0
  %v54 = vsel %vm49, %v17, 0
  %56 = vmatprep.subr.mxu0 0.0
  %57 = vmatpush1.msra.mxu0 %v18
  %58 = vmatprep.subr.mxu0 0.0
  %59 = vmatpush1.msra.mxu0 %v19
  %60 = vmatprep.subr.mxu0 0.0
  %61 = vmatpush1.msra.mxu0 %v20
  %62 = vmatprep.subr.mxu0 0.0
  %63 = vmatpush1.msra.mxu0 %v21
  %64 = vmatprep.subr.mxu0 0.0
  %65 = vmatpush1.msra.mxu0 %v22
  %66 = vmatprep.subr.mxu0 0.0
  %67 = vmatpush1.msra.mxu0 %v23
  %68 = vmatprep.subr.mxu0 0.0
  %69 = vmatpush1.msra.mxu0 %v24
  %70 = vmatprep.subr.mxu0 0.0
  %71 = vmatpush1.msra.mxu0 %v25
  %72 = vmatprep.subr.mxu0 0.0
  %73 = vmatpush1.msra.mxu0 %v26
  %74 = vmatprep.subr.mxu0 0.0
  %75 = vmatpush1.msra.mxu0 %v27
  %76 = vmatprep.subr.mxu0 0.0
  %77 = vmatpush1.msra.mxu0 %v28
  %78 = vmatprep.subr.mxu0 0.0
  %79 = vmatpush1.msra.mxu0 %v29
  %80 = vmatprep.subr.mxu0 0.0
  %81 = vmatpush1.msra.mxu0 %v30
  %82 = vmatprep.subr.mxu0 0.0
  %83 = vmatpush1.msra.mxu0 %v31
  %84 = vmatprep.subr.mxu0 0.0
  %85 = vmatpush1.msra.mxu0 %v32
  %86 = vmatprep.subr.mxu0 0.0
  %87 = vmatpush1.msra.mxu0 %v33
  %88 = vmatprep.subr.mxu0 0.0
  %89 = vmatpush1.msra.mxu0 %v34
  %90 = vmatprep.subr.mxu0 0.0
  %91 = vmatpush1.msra.mxu0 %v35
  %92 = vmatprep.subr.mxu0 0.0
  %93 = vmatpush1.msra.mxu0 %v36
  %94 = vmatprep.subr.mxu0 0.0
  %95 = vmatpush1.msra.mxu0 0.0
  %96 = vmatprep.subr.mxu0 0.0
  %97 = vmatpush1.msra.mxu0 0.0
  %98 = vmatprep.subr.mxu0 0.0
  %99 = vmatpush1.msra.mxu0 0.0
  %100 = vmatprep.subr.mxu0 0.0
  %101 = vmatpush1.msra.mxu0 0.0
  %102 = vmatprep.subr.mxu0 0.0
  %103 = vmatpush1.msra.mxu0 0.0
  %104 = vmatprep.subr.mxu0 0.0
  %105 = vmatpush1.msra.mxu0 0.0
  %106 = vmatprep.subr.mxu0 0.0
  %107 = vmatpush1.msra.mxu0 0.0
  %108 = vmatprep.subr.mxu0 0.0
  %109 = vmatpush1.msra.mxu0 0.0
  %110 = vmatprep.subr.mxu0 0.0
  %111 = vmatpush1.msra.mxu0 0.0
  %112 = vmatprep.subr.mxu0 0.0
  %113 = vmatpush1.msra.mxu0 0.0
  %114 = vmatprep.subr.mxu0 0.0
  %115 = vmatpush1.msra.mxu0 0.0
  %116 = vmatprep.subr.mxu0 0.0
  %117 = vmatpush1.msra.mxu0 0.0
  %118 = vmatprep.subr.mxu0 0.0
  %119 = vmatpush1.msra.mxu0 0.0
  %120 = vmatprep.mubr.f32.mxu0 %v51
  %121 = vmatmul.mubr.f32.gmra.mrb[0].mxu0 %v14
  %v122 = vpop.f32.mrb[0].mxu0
  %v123 = vadd.f32 %v42, %v122
  %v124 = vpop.f32.mrb[0].mxu0
  %125 = vmatprep.mubr.f32.mxu0 %v54
  %126 = vmatmul.mubr.f32.gmra.mrb[0].mxu0 %v16
  %v127 = vpop.f32.mrb[0].mxu0
  %v128 = vadd.f32 %v47, %v127
  %v129 = vpop.f32.mrb[0].mxu0
  %130 = vdwg.mxu0
  %131 = vst [vmem:[%s3] sm:$0xff] %v123
  %132 = vst [vmem:[%s3 + $0x8] sm:$0xff] %v128
  // Predicated region
  $region14: #{cnn_duq_forward.4} parent=0 // pred_check
    _
  $region15: #{cnn_duq_forward.4} parent=0 // pred_check_branch
    %134 = sbr.rel (0) target = $region17
  $region16: #{cnn_duq_forward.4} parent=0 // pred_region
    _
  $region17: #{cnn_duq_forward.4} parent=0 // pred_fallthru
    _
  // Predicated region
  $region18: #{cnn_duq_forward.4} parent=0 // pred_check
    _
  $region19: #{cnn_duq_forward.4} parent=0 // pred_check_branch
    %136 = sbr.rel (0) target = $region21
  $region20: #{cnn_duq_forward.4} parent=0 // pred_region
    _
  $region21: #{cnn_duq_forward.4} parent=0 // pred_fallthru
    _

// kernel: tile.9
$region0: #{tile.9}
  %s0 = inlined_call_operand.vmem [shape: f32[32,10,10], index: 0, kind: input, shape index: {}]
  %s1 = inlined_call_operand.vmem [shape: f32[320,10], index: 1, kind: output, shape index: {}]
  %v2 = vld [vmem:[%s0] sm:$0x1]
  %s3 = scalar_lea.vmem %s0, 31
  %v4 = vld [vmem:[%s3] sm:$0x2]
  %vm5 = vcmask 1041409
  %v6 = vsel %vm5, %v4, %v2
  %s7 = scalar_lea.vmem %s0, 62
  %v8 = vld [vmem:[%s7] sm:$0x4]
  %vm9 = vcmask 1042434
  %v10 = vsel %vm9, %v8, %v6
  %s11 = scalar_lea.vmem %s0, 93
  %v12 = vld [vmem:[%s11] sm:$0x8]
  %vm13 = vcmask 1043459
  %v14 = vsel %vm13, %v12, %v10
  %s15 = scalar_lea.vmem %s0, 124
  %v16 = vld [vmem:[%s15] sm:$0x10]
  %vm17 = vcmask 1044484
  %v18 = vsel %vm17, %v16, %v14
  %s19 = scalar_lea.vmem %s0, 155
  %v20 = vld [vmem:[%s19] sm:$0x20]
  %vm21 = vcmask 1045509
  %v22 = vsel %vm21, %v20, %v18
  %s23 = scalar_lea.vmem %s0, 186
  %v24 = vld [vmem:[%s23] sm:$0x40]
  %vm25 = vcmask 1046534
  %v26 = vsel %vm25, %v24, %v22
  %s27 = scalar_lea.vmem %s0, 217
  %v28 = vld [vmem:[%s27] sm:$0x80]
  %vm29 = vcmask 1047559
  %v30 = vsel %vm29, %v28, %v26
  %vm31 = vcmask 80896
  %32 = vst.msk [vmem:[%s1] sm:$0xff] %vm31, %v30
  %s33 = scalar_lea.vmem %s0, 256
  %v34 = vld [vmem:[%s33] sm:$0x1]
  %s35 = scalar_lea.vmem %s0, 287
  %v36 = vld [vmem:[%s35] sm:$0x2]
  %vm37 = vcmask 1041409
  %v38 = vsel %vm37, %v36, %v34
  %vm39 = vcmask 80896
  %s40 = scalar_lea.vmem %s1, 24
  %41 = vst.msk [vmem:[%s40] sm:$0x3] %vm39, %v38
  %s42 = scalar_lea.vmem %s0, 281
  %v43 = vld [vmem:[%s42] sm:$0x1]
  %s44 = scalar_lea.vmem %s0, 312
  %v45 = vld [vmem:[%s44] sm:$0x2]
  %vm46 = vcmask 1041409
  %v47 = vsel %vm46, %v45, %v43
  %s48 = scalar_lea.vmem %s0, 23
  %v49 = vld [vmem:[%s48] sm:$0x4]
  %vm50 = vcmask 1042434
  %v51 = vsel %vm50, %v49, %v47
  %s52 = scalar_lea.vmem %s0, 54
  %v53 = vld [vmem:[%s52] sm:$0x8]
  %vm54 = vcmask 1043459
  %v55 = vsel %vm54, %v53, %v51
  %s56 = scalar_lea.vmem %s0, 85
  %v57 = vld [vmem:[%s56] sm:$0x10]
  %vm58 = vcmask 1044484
  %v59 = vsel %vm58, %v57, %v55
  %s60 = scalar_lea.vmem %s0, 116
  %v61 = vld [vmem:[%s60] sm:$0x20]
  %vm62 = vcmask 1045509
  %v63 = vsel %vm62, %v61, %v59
  %s64 = scalar_lea.vmem %s0, 147
  %v65 = vld [vmem:[%s64] sm:$0x40]
  %vm66 = vcmask 1046534
  %v67 = vsel %vm66, %v65, %v63
  %s68 = scalar_lea.vmem %s0, 178
  %v69 = vld [vmem:[%s68] sm:$0x80]
  %vm70 = vcmask 1047559
  %v71 = vsel %vm70, %v69, %v67
  %72 = vrot.lane.b32.xlu0 %v71, 122
  %v73 = vpop.permute.xlu0 %72
  %vm74 = vcmask 31744
  %s75 = scalar_lea.vmem %s1, 40
  %76 = vst.msk [vmem:[%s75] sm:$0x3] %vm74, %v73
  %s77 = scalar_lea.vmem %s1, 14
  %78 = vst.msk [vmem:[%s77] sm:$0xfc] %vm74, %v73
  %s79 = scalar_lea.vmem %s0, 281
  %v80 = vld [vmem:[%s79] sm:$0x1]
  %s81 = scalar_lea.vmem %s0, 312
  %v82 = vld [vmem:[%s81] sm:$0x2]
  %vm83 = vcmask 1041409
  %v84 = vsel %vm83, %v82, %v80
  %s85 = scalar_lea.vmem %s0, 23
  %v86 = vld [vmem:[%s85] sm:$0x4]
  %vm87 = vcmask 1042434
  %v88 = vsel %vm87, %v86, %v84
  %s89 = scalar_lea.vmem %s0, 54
  %v90 = vld [vmem:[%s89] sm:$0x8]
  %vm91 = vcmask 1043459
  %v92 = vsel %vm91, %v90, %v88
  %s93 = scalar_lea.vmem %s0, 85
  %v94 = vld [vmem:[%s93] sm:$0x10]
  %vm95 = vcmask 1044484
  %v96 = vsel %vm95, %v94, %v92
  %s97 = scalar_lea.vmem %s0, 116
  %v98 = vld [vmem:[%s97] sm:$0x20]
  %vm99 = vcmask 1045509
  %v100 = vsel %vm99, %v98, %v96
  %s101 = scalar_lea.vmem %s0, 147
  %v102 = vld [vmem:[%s101] sm:$0x40]
  %vm103 = vcmask 1046534
  %v104 = vsel %vm103, %v102, %v100
  %s105 = scalar_lea.vmem %s0, 178
  %v106 = vld [vmem:[%s105] sm:$0x80]
  %vm107 = vcmask 1047559
  %v108 = vsel %vm107, %v106, %v104
  %109 = vrot.lane.b32.xlu0 %v108, 122
  %v110 = vpop.permute.xlu0 %109
  %vm111 = vcmask 1048528
  %s112 = scalar_lea.vmem %s1, 32
  %113 = vst.msk [vmem:[%s112] sm:$0x3] %vm111, %v110
  %s114 = scalar_lea.vmem %s1, 6
  %115 = vst.msk [vmem:[%s114] sm:$0xfc] %vm111, %v110
  %s116 = scalar_lea.vmem %s0, 217
  %v117 = vld [vmem:[%s116] sm:$0x1]
  %s118 = scalar_lea.vmem %s0, 248
  %v119 = vld [vmem:[%s118] sm:$0x2]
  %vm120 = vcmask 1041409
  %v121 = vsel %vm120, %v119, %v117
  %s122 = scalar_lea.vmem %s0, 217
  %v123 = vld [vmem:[%s122] sm:$0x1]
  %s124 = scalar_lea.vmem %s0, 248
  %v125 = vld [vmem:[%s124] sm:$0x2]
  %vm126 = vcmask 1041409
  %v127 = vsel %vm126, %v125, %v123
  %vm128 = vcmask 48128
  %v129 = vsel %vm128, %v127, %v121
  %130 = vrot.lane.b32.xlu0 %v129, 122
  %v131 = vpop.permute.xlu0 %130
  %vm132 = vcmask 31744
  %s133 = scalar_lea.vmem %s1, 22
  %134 = vst.msk [vmem:[%s133] sm:$0x3] %vm132, %v131
  %vm135 = vcmask 1048528
  %s136 = scalar_lea.vmem %s1, 14
  %137 = vst.msk [vmem:[%s136] sm:$0x3] %vm135, %v131
  %s138 = scalar_lea.vmem %s0, 268
  %v139 = vld [vmem:[%s138] sm:$0x1]
  %s140 = scalar_lea.vmem %s0, 299
  %v141 = vld [vmem:[%s140] sm:$0x2]
  %vm142 = vcmask 1041409
  %v143 = vsel %vm142, %v141, %v139
  %s144 = scalar_lea.vmem %s0, 10
  %v145 = vld [vmem:[%s144] sm:$0x4]
  %vm146 = vcmask 1042434
  %v147 = vsel %vm146, %v145, %v143
  %s148 = scalar_lea.vmem %s0, 41
  %v149 = vld [vmem:[%s148] sm:$0x8]
  %vm150 = vcmask 1043459
  %v151 = vsel %vm150, %v149, %v147
  %s152 = scalar_lea.vmem %s0, 72
  %v153 = vld [vmem:[%s152] sm:$0x10]
  %vm154 = vcmask 1044484
  %v155 = vsel %vm154, %v153, %v151
  %s156 = scalar_lea.vmem %s0, 103
  %v157 = vld [vmem:[%s156] sm:$0x20]
  %vm158 = vcmask 1045509
  %v159 = vsel %vm158, %v157, %v155
  %s160 = scalar_lea.vmem %s0, 134
  %v161 = vld [vmem:[%s160] sm:$0x40]
  %vm162 = vcmask 1046534
  %v163 = vsel %vm162, %v161, %v159
  %s164 = scalar_lea.vmem %s0, 165
  %v165 = vld [vmem:[%s164] sm:$0x80]
  %vm166 = vcmask 1047559
  %v167 = vsel %vm166, %v165, %v163
  %168 = vrot.lane.b32.xlu0 %v167, 120
  %v169 = vpop.permute.xlu0 %168
  %vm170 = vcmask 15360
  %s171 = scalar_lea.vmem %s1, 32
  %172 = vst.msk [vmem:[%s171] sm:$0x3] %vm170, %v169
  %s173 = scalar_lea.vmem %s1, 6
  %174 = vst.msk [vmem:[%s173] sm:$0xfc] %vm170, %v169
  %s175 = scalar_lea.vmem %s0, 12
  %v176 = vld [vmem:[%s175] sm:$0x1]
  %s177 = scalar_lea.vmem %s0, 43
  %v178 = vld [vmem:[%s177] sm:$0x2]
  %vm179 = vcmask 1041409
  %v180 = vsel %vm179, %v178, %v176
  %s181 = scalar_lea.vmem %s0, 74
  %v182 = vld [vmem:[%s181] sm:$0x4]
  %vm183 = vcmask 1042434
  %v184 = vsel %vm183, %v182, %v180
  %s185 = scalar_lea.vmem %s0, 105
  %v186 = vld [vmem:[%s185] sm:$0x8]
  %vm187 = vcmask 1043459
  %v188 = vsel %vm187, %v186, %v184
  %s189 = scalar_lea.vmem %s0, 136
  %v190 = vld [vmem:[%s189] sm:$0x10]
  %vm191 = vcmask 1044484
  %v192 = vsel %vm191, %v190, %v188
  %s193 = scalar_lea.vmem %s0, 167
  %v194 = vld [vmem:[%s193] sm:$0x20]
  %vm195 = vcmask 1045509
  %v196 = vsel %vm195, %v194, %v192
  %s197 = scalar_lea.vmem %s0, 198
  %v198 = vld [vmem:[%s197] sm:$0x40]
  %vm199 = vcmask 1046534
  %v200 = vsel %vm199, %v198, %v196
  %s201 = scalar_lea.vmem %s0, 229
  %v202 = vld [vmem:[%s201] sm:$0x80]
  %vm203 = vcmask 1047559
  %v204 = vsel %vm203, %v202, %v200
  %205 = vrot.lane.b32.xlu0 %v204, 120
  %v206 = vpop.permute.xlu0 %205
  %vm207 = vcmask 1048512
  %208 = vst.msk [vmem:[%s1] sm:$0xff] %vm207, %v206
  %s209 = scalar_lea.vmem %s0, 204
  %v210 = vld [vmem:[%s209] sm:$0x1]
  %s211 = scalar_lea.vmem %s0, 235
  %v212 = vld [vmem:[%s211] sm:$0x2]
  %vm213 = vcmask 1041409
  %v214 = vsel %vm213, %v212, %v210
  %s215 = scalar_lea.vmem %s0, 268
  %v216 = vld [vmem:[%s215] sm:$0x1]
  %s217 = scalar_lea.vmem %s0, 299
  %v218 = vld [vmem:[%s217] sm:$0x2]
  %vm219 = vcmask 1041409
  %v220 = vsel %vm219, %v218, %v216
  %vm221 = vcmask 64512
  %v222 = vsel %vm221, %v220, %v214
  %223 = vrot.lane.b32.xlu0 %v222, 120
  %v224 = vpop.permute.xlu0 %223
  %vm225 = vcmask 15360
  %s226 = scalar_lea.vmem %s1, 14
  %227 = vst.msk [vmem:[%s226] sm:$0x3] %vm225, %v224
  %vm228 = vcmask 1048512
  %s229 = scalar_lea.vmem %s1, 24
  %230 = vst.msk [vmem:[%s229] sm:$0x3] %vm228, %v224
  %s231 = scalar_lea.vmem %s0, 280
  %v232 = vld [vmem:[%s231] sm:$0x1]
  %s233 = scalar_lea.vmem %s0, 311
  %v234 = vld [vmem:[%s233] sm:$0x2]
  %vm235 = vcmask 1041409
  %v236 = vsel %vm235, %v234, %v232
  %s237 = scalar_lea.vmem %s0, 22
  %v238 = vld [vmem:[%s237] sm:$0x4]
  %vm239 = vcmask 1042434
  %v240 = vsel %vm239, %v238, %v236
  %s241 = scalar_lea.vmem %s0, 53
  %v242 = vld [vmem:[%s241] sm:$0x8]
  %vm243 = vcmask 1043459
  %v244 = vsel %vm243, %v242, %v240
  %s245 = scalar_lea.vmem %s0, 84
  %v246 = vld [vmem:[%s245] sm:$0x10]
  %vm247 = vcmask 1044484
  %v248 = vsel %vm247, %v246, %v244
  %s249 = scalar_lea.vmem %s0, 115
  %v250 = vld [vmem:[%s249] sm:$0x20]
  %vm251 = vcmask 1045509
  %v252 = vsel %vm251, %v250, %v248
  %s253 = scalar_lea.vmem %s0, 146
  %v254 = vld [vmem:[%s253] sm:$0x40]
  %vm255 = vcmask 1046534
  %v256 = vsel %vm255, %v254, %v252
  %s257 = scalar_lea.vmem %s0, 177
  %v258 = vld [vmem:[%s257] sm:$0x80]
  %vm259 = vcmask 1047559
  %v260 = vsel %vm259, %v258, %v256
  %261 = vrot.lane.b32.xlu0 %v260, 112
  %v262 = vpop.permute.xlu0 %261
  %vm263 = vcmask 999296
  %s264 = scalar_lea.vmem %s1, 32
  %265 = vst.msk [vmem:[%s264] sm:$0x3] %vm263, %v262
  %s266 = scalar_lea.vmem %s1, 6
  %267 = vst.msk [vmem:[%s266] sm:$0xfc] %vm263, %v262
  %s268 = scalar_lea.vmem %s0, 216
  %v269 = vld [vmem:[%s268] sm:$0x1]
  %s270 = scalar_lea.vmem %s0, 247
  %v271 = vld [vmem:[%s270] sm:$0x2]
  %vm272 = vcmask 1041409
  %v273 = vsel %vm272, %v271, %v269
  %274 = vrot.lane.b32.xlu0 %v273, 112
  %v275 = vpop.permute.xlu0 %274
  %vm276 = vcmask 999296
  %s277 = scalar_lea.vmem %s1, 14
  %278 = vst.msk [vmem:[%s277] sm:$0x3] %vm276, %v275
  %s279 = scalar_lea.vmem %s0, 11
  %v280 = vld [vmem:[%s279] sm:$0x1]
  %s281 = scalar_lea.vmem %s0, 42
  %v282 = vld [vmem:[%s281] sm:$0x2]
  %vm283 = vcmask 1041409
  %v284 = vsel %vm283, %v282, %v280
  %s285 = scalar_lea.vmem %s0, 73
  %v286 = vld [vmem:[%s285] sm:$0x4]
  %vm287 = vcmask 1042434
  %v288 = vsel %vm287, %v286, %v284
  %s289 = scalar_lea.vmem %s0, 104
  %v290 = vld [vmem:[%s289] sm:$0x8]
  %vm291 = vcmask 1043459
  %v292 = vsel %vm291, %v290, %v288
  %s293 = scalar_lea.vmem %s0, 135
  %v294 = vld [vmem:[%s293] sm:$0x10]
  %vm295 = vcmask 1044484
  %v296 = vsel %vm295, %v294, %v292
  %s297 = scalar_lea.vmem %s0, 166
  %v298 = vld [vmem:[%s297] sm:$0x20]
  %vm299 = vcmask 1045509
  %v300 = vsel %vm299, %v298, %v296
  %s301 = scalar_lea.vmem %s0, 197
  %v302 = vld [vmem:[%s301] sm:$0x40]
  %vm303 = vcmask 1046534
  %v304 = vsel %vm303, %v302, %v300
  %s305 = scalar_lea.vmem %s0, 228
  %v306 = vld [vmem:[%s305] sm:$0x80]
  %vm307 = vcmask 1047559
  %v308 = vsel %vm307, %v306, %v304
  %309 = vrot.lane.b32.xlu0 %v308, 110
  %v310 = vpop.permute.xlu0 %309
  %vm311 = vcmask 982896
  %312 = vst.msk [vmem:[%s1] sm:$0xff] %vm311, %v310
  %s313 = scalar_lea.vmem %s0, 267
  %v314 = vld [vmem:[%s313] sm:$0x1]
  %s315 = scalar_lea.vmem %s0, 298
  %v316 = vld [vmem:[%s315] sm:$0x2]
  %vm317 = vcmask 1041409
  %v318 = vsel %vm317, %v316, %v314
  %319 = vrot.lane.b32.xlu0 %v318, 110
  %v320 = vpop.permute.xlu0 %319
  %vm321 = vcmask 982896
  %s322 = scalar_lea.vmem %s1, 24
  %323 = vst.msk [vmem:[%s322] sm:$0x3] %vm321, %v320
  %s324 = scalar_lea.vmem %s0, 279
  %v325 = vld [vmem:[%s324] sm:$0x1]
  %s326 = scalar_lea.vmem %s0, 310
  %v327 = vld [vmem:[%s326] sm:$0x2]
  %vm328 = vcmask 1041409
  %v329 = vsel %vm328, %v327, %v325
  %s330 = scalar_lea.vmem %s0, 21
  %v331 = vld [vmem:[%s330] sm:$0x4]
  %vm332 = vcmask 1042434
  %v333 = vsel %vm332, %v331, %v329
  %s334 = scalar_lea.vmem %s0, 52
  %v335 = vld [vmem:[%s334] sm:$0x8]
  %vm336 = vcmask 1043459
  %v337 = vsel %vm336, %v335, %v333
  %s338 = scalar_lea.vmem %s0, 83
  %v339 = vld [vmem:[%s338] sm:$0x10]
  %vm340 = vcmask 1044484
  %v341 = vsel %vm340, %v339, %v337
  %s342 = scalar_lea.vmem %s0, 114
  %v343 = vld [vmem:[%s342] sm:$0x20]
  %vm344 = vcmask 1045509
  %v345 = vsel %vm344, %v343, %v341
  %s346 = scalar_lea.vmem %s0, 145
  %v347 = vld [vmem:[%s346] sm:$0x40]
  %vm348 = vcmask 1046534
  %v349 = vsel %vm348, %v347, %v345
  %s350 = scalar_lea.vmem %s0, 176
  %v351 = vld [vmem:[%s350] sm:$0x80]
  %vm352 = vcmask 1047559
  %v353 = vsel %vm352, %v351, %v349
  %354 = vrot.lane.b32.xlu0 %v353, 102
  %v355 = vpop.permute.xlu0 %354
  %vm356 = vcmask 917296
  %s357 = scalar_lea.vmem %s1, 32
  %358 = vst.msk [vmem:[%s357] sm:$0x3] %vm356, %v355
  %s359 = scalar_lea.vmem %s1, 6
  %360 = vst.msk [vmem:[%s359] sm:$0xfc] %vm356, %v355
  %s361 = scalar_lea.vmem %s0, 215
  %v362 = vld [vmem:[%s361] sm:$0x1]
  %s363 = scalar_lea.vmem %s0, 246
  %v364 = vld [vmem:[%s363] sm:$0x2]
  %vm365 = vcmask 1041409
  %v366 = vsel %vm365, %v364, %v362
  %367 = vrot.lane.b32.xlu0 %v366, 102
  %v368 = vpop.permute.xlu0 %367
  %vm369 = vcmask 917296
  %s370 = scalar_lea.vmem %s1, 14
  %371 = vst.msk [vmem:[%s370] sm:$0x3] %vm369, %v368
  %s372 = scalar_lea.vmem %s0, 10
  %v373 = vld [vmem:[%s372] sm:$0x1]
  %s374 = scalar_lea.vmem %s0, 41
  %v375 = vld [vmem:[%s374] sm:$0x2]
  %vm376 = vcmask 1041409
  %v377 = vsel %vm376, %v375, %v373
  %s378 = scalar_lea.vmem %s0, 72
  %v379 = vld [vmem:[%s378] sm:$0x4]
  %vm380 = vcmask 1042434
  %v381 = vsel %vm380, %v379, %v377
  %s382 = scalar_lea.vmem %s0, 103
  %v383 = vld [vmem:[%s382] sm:$0x8]
  %vm384 = vcmask 1043459
  %v385 = vsel %vm384, %v383, %v381
  %s386 = scalar_lea.vmem %s0, 134
  %v387 = vld [vmem:[%s386] sm:$0x10]
  %vm388 = vcmask 1044484
  %v389 = vsel %vm388, %v387, %v385
  %s390 = scalar_lea.vmem %s0, 165
  %v391 = vld [vmem:[%s390] sm:$0x20]
  %vm392 = vcmask 1045509
  %v393 = vsel %vm392, %v391, %v389
  %s394 = scalar_lea.vmem %s0, 196
  %v395 = vld [vmem:[%s394] sm:$0x40]
  %vm396 = vcmask 1046534
  %v397 = vsel %vm396, %v395, %v393
  %s398 = scalar_lea.vmem %s0, 227
  %v399 = vld [vmem:[%s398] sm:$0x80]
  %vm400 = vcmask 1047559
  %v401 = vsel %vm400, %v399, %v397
  %402 = vrot.lane.b32.xlu0 %v401, 100
  %v403 = vpop.permute.xlu0 %402
  %vm404 = vcmask 900896
  %405 = vst.msk [vmem:[%s1] sm:$0xff] %vm404, %v403
  %s406 = scalar_lea.vmem %s0, 266
  %v407 = vld [vmem:[%s406] sm:$0x1]
  %s408 = scalar_lea.vmem %s0, 297
  %v409 = vld [vmem:[%s408] sm:$0x2]
  %vm410 = vcmask 1041409
  %v411 = vsel %vm410, %v409, %v407
  %412 = vrot.lane.b32.xlu0 %v411, 100
  %v413 = vpop.permute.xlu0 %412
  %vm414 = vcmask 900896
  %s415 = scalar_lea.vmem %s1, 24
  %416 = vst.msk [vmem:[%s415] sm:$0x3] %vm414, %v413
  %s417 = scalar_lea.vmem %s0, 278
  %v418 = vld [vmem:[%s417] sm:$0x1]
  %s419 = scalar_lea.vmem %s0, 309
  %v420 = vld [vmem:[%s419] sm:$0x2]
  %vm421 = vcmask 1041409
  %v422 = vsel %vm421, %v420, %v418
  %s423 = scalar_lea.vmem %s0, 20
  %v424 = vld [vmem:[%s423] sm:$0x4]
  %vm425 = vcmask 1042434
  %v426 = vsel %vm425, %v424, %v422
  %s427 = scalar_lea.vmem %s0, 51
  %v428 = vld [vmem:[%s427] sm:$0x8]
  %vm429 = vcmask 1043459
  %v430 = vsel %vm429, %v428, %v426
  %s431 = scalar_lea.vmem %s0, 82
  %v432 = vld [vmem:[%s431] sm:$0x10]
  %vm433 = vcmask 1044484
  %v434 = vsel %vm433, %v432, %v430
  %s435 = scalar_lea.vmem %s0, 113
  %v436 = vld [vmem:[%s435] sm:$0x20]
  %vm437 = vcmask 1045509
  %v438 = vsel %vm437, %v436, %v434
  %s439 = scalar_lea.vmem %s0, 144
  %v440 = vld [vmem:[%s439] sm:$0x40]
  %vm441 = vcmask 1046534
  %v442 = vsel %vm441, %v440, %v438
  %s443 = scalar_lea.vmem %s0, 175
  %v444 = vld [vmem:[%s443] sm:$0x80]
  %vm445 = vcmask 1047559
  %v446 = vsel %vm445, %v444, %v442
  %447 = vrot.lane.b32.xlu0 %v446, 92
  %v448 = vpop.permute.xlu0 %447
  %vm449 = vcmask 835296
  %s450 = scalar_lea.vmem %s1, 32
  %451 = vst.msk [vmem:[%s450] sm:$0x3] %vm449, %v448
  %s452 = scalar_lea.vmem %s1, 6
  %453 = vst.msk [vmem:[%s452] sm:$0xfc] %vm449, %v448
  %s454 = scalar_lea.vmem %s0, 214
  %v455 = vld [vmem:[%s454] sm:$0x1]
  %s456 = scalar_lea.vmem %s0, 245
  %v457 = vld [vmem:[%s456] sm:$0x2]
  %vm458 = vcmask 1041409
  %v459 = vsel %vm458, %v457, %v455
  %460 = vrot.lane.b32.xlu0 %v459, 92
  %v461 = vpop.permute.xlu0 %460
  %vm462 = vcmask 835296
  %s463 = scalar_lea.vmem %s1, 14
  %464 = vst.msk [vmem:[%s463] sm:$0x3] %vm462, %v461
  %s465 = scalar_lea.vmem %s0, 9
  %v466 = vld [vmem:[%s465] sm:$0x1]
  %s467 = scalar_lea.vmem %s0, 40
  %v468 = vld [vmem:[%s467] sm:$0x2]
  %vm469 = vcmask 1041409
  %v470 = vsel %vm469, %v468, %v466
  %s471 = scalar_lea.vmem %s0, 71
  %v472 = vld [vmem:[%s471] sm:$0x4]
  %vm473 = vcmask 1042434
  %v474 = vsel %vm473, %v472, %v470
  %s475 = scalar_lea.vmem %s0, 102
  %v476 = vld [vmem:[%s475] sm:$0x8]
  %vm477 = vcmask 1043459
  %v478 = vsel %vm477, %v476, %v474
  %s479 = scalar_lea.vmem %s0, 133
  %v480 = vld [vmem:[%s479] sm:$0x10]
  %vm481 = vcmask 1044484
  %v482 = vsel %vm481, %v480, %v478
  %s483 = scalar_lea.vmem %s0, 164
  %v484 = vld [vmem:[%s483] sm:$0x20]
  %vm485 = vcmask 1045509
  %v486 = vsel %vm485, %v484, %v482
  %s487 = scalar_lea.vmem %s0, 195
  %v488 = vld [vmem:[%s487] sm:$0x40]
  %vm489 = vcmask 1046534
  %v490 = vsel %vm489, %v488, %v486
  %s491 = scalar_lea.vmem %s0, 226
  %v492 = vld [vmem:[%s491] sm:$0x80]
  %vm493 = vcmask 1047559
  %v494 = vsel %vm493, %v492, %v490
  %495 = vrot.lane.b32.xlu0 %v494, 90
  %v496 = vpop.permute.xlu0 %495
  %vm497 = vcmask 818896
  %498 = vst.msk [vmem:[%s1] sm:$0xff] %vm497, %v496
  %s499 = scalar_lea.vmem %s0, 265
  %v500 = vld [vmem:[%s499] sm:$0x1]
  %s501 = scalar_lea.vmem %s0, 296
  %v502 = vld [vmem:[%s501] sm:$0x2]
  %vm503 = vcmask 1041409
  %v504 = vsel %vm503, %v502, %v500
  %505 = vrot.lane.b32.xlu0 %v504, 90
  %v506 = vpop.permute.xlu0 %505
  %vm507 = vcmask 818896
  %s508 = scalar_lea.vmem %s1, 24
  %509 = vst.msk [vmem:[%s508] sm:$0x3] %vm507, %v506
  %s510 = scalar_lea.vmem %s0, 277
  %v511 = vld [vmem:[%s510] sm:$0x1]
  %s512 = scalar_lea.vmem %s0, 308
  %v513 = vld [vmem:[%s512] sm:$0x2]
  %vm514 = vcmask 1041409
  %v515 = vsel %vm514, %v513, %v511
  %s516 = scalar_lea.vmem %s0, 19
  %v517 = vld [vmem:[%s516] sm:$0x4]
  %vm518 = vcmask 1042434
  %v519 = vsel %vm518, %v517, %v515
  %s520 = scalar_lea.vmem %s0, 50
  %v521 = vld [vmem:[%s520] sm:$0x8]
  %vm522 = vcmask 1043459
  %v523 = vsel %vm522, %v521, %v519
  %s524 = scalar_lea.vmem %s0, 81
  %v525 = vld [vmem:[%s524] sm:$0x10]
  %vm526 = vcmask 1044484
  %v527 = vsel %vm526, %v525, %v523
  %s528 = scalar_lea.vmem %s0, 112
  %v529 = vld [vmem:[%s528] sm:$0x20]
  %vm530 = vcmask 1045509
  %v531 = vsel %vm530, %v529, %v527
  %s532 = scalar_lea.vmem %s0, 143
  %v533 = vld [vmem:[%s532] sm:$0x40]
  %vm534 = vcmask 1046534
  %v535 = vsel %vm534, %v533, %v531
  %s536 = scalar_lea.vmem %s0, 174
  %v537 = vld [vmem:[%s536] sm:$0x80]
  %vm538 = vcmask 1047559
  %v539 = vsel %vm538, %v537, %v535
  %540 = vrot.lane.b32.xlu0 %v539, 82
  %v541 = vpop.permute.xlu0 %540
  %vm542 = vcmask 753296
  %s543 = scalar_lea.vmem %s1, 32
  %544 = vst.msk [vmem:[%s543] sm:$0x3] %vm542, %v541
  %s545 = scalar_lea.vmem %s1, 6
  %546 = vst.msk [vmem:[%s545] sm:$0xfc] %vm542, %v541
  %s547 = scalar_lea.vmem %s0, 213
  %v548 = vld [vmem:[%s547] sm:$0x1]
  %s549 = scalar_lea.vmem %s0, 244
  %v550 = vld [vmem:[%s549] sm:$0x2]
  %vm551 = vcmask 1041409
  %v552 = vsel %vm551, %v550, %v548
  %553 = vrot.lane.b32.xlu0 %v552, 82
  %v554 = vpop.permute.xlu0 %553
  %vm555 = vcmask 753296
  %s556 = scalar_lea.vmem %s1, 14
  %557 = vst.msk [vmem:[%s556] sm:$0x3] %vm555, %v554
  %s558 = scalar_lea.vmem %s0, 8
  %v559 = vld [vmem:[%s558] sm:$0x1]
  %s560 = scalar_lea.vmem %s0, 39
  %v561 = vld [vmem:[%s560] sm:$0x2]
  %vm562 = vcmask 1041409
  %v563 = vsel %vm562, %v561, %v559
  %s564 = scalar_lea.vmem %s0, 70
  %v565 = vld [vmem:[%s564] sm:$0x4]
  %vm566 = vcmask 1042434
  %v567 = vsel %vm566, %v565, %v563
  %s568 = scalar_lea.vmem %s0, 101
  %v569 = vld [vmem:[%s568] sm:$0x8]
  %vm570 = vcmask 1043459
  %v571 = vsel %vm570, %v569, %v567
  %s572 = scalar_lea.vmem %s0, 132
  %v573 = vld [vmem:[%s572] sm:$0x10]
  %vm574 = vcmask 1044484
  %v575 = vsel %vm574, %v573, %v571
  %s576 = scalar_lea.vmem %s0, 163
  %v577 = vld [vmem:[%s576] sm:$0x20]
  %vm578 = vcmask 1045509
  %v579 = vsel %vm578, %v577, %v575
  %s580 = scalar_lea.vmem %s0, 194
  %v581 = vld [vmem:[%s580] sm:$0x40]
  %vm582 = vcmask 1046534
  %v583 = vsel %vm582, %v581, %v579
  %s584 = scalar_lea.vmem %s0, 225
  %v585 = vld [vmem:[%s584] sm:$0x80]
  %vm586 = vcmask 1047559
  %v587 = vsel %vm586, %v585, %v583
  %588 = vrot.lane.b32.xlu0 %v587, 80
  %v589 = vpop.permute.xlu0 %588
  %vm590 = vcmask 736896
  %591 = vst.msk [vmem:[%s1] sm:$0xff] %vm590, %v589
  %s592 = scalar_lea.vmem %s0, 264
  %v593 = vld [vmem:[%s592] sm:$0x1]
  %s594 = scalar_lea.vmem %s0, 295
  %v595 = vld [vmem:[%s594] sm:$0x2]
  %vm596 = vcmask 1041409
  %v597 = vsel %vm596, %v595, %v593
  %598 = vrot.lane.b32.xlu0 %v597, 80
  %v599 = vpop.permute.xlu0 %598
  %vm600 = vcmask 736896
  %s601 = scalar_lea.vmem %s1, 24
  %602 = vst.msk [vmem:[%s601] sm:$0x3] %vm600, %v599
  %s603 = scalar_lea.vmem %s0, 276
  %v604 = vld [vmem:[%s603] sm:$0x1]
  %s605 = scalar_lea.vmem %s0, 307
  %v606 = vld [vmem:[%s605] sm:$0x2]
  %vm607 = vcmask 1041409
  %v608 = vsel %vm607, %v606, %v604
  %s609 = scalar_lea.vmem %s0, 18
  %v610 = vld [vmem:[%s609] sm:$0x4]
  %vm611 = vcmask 1042434
  %v612 = vsel %vm611, %v610, %v608
  %s613 = scalar_lea.vmem %s0, 49
  %v614 = vld [vmem:[%s613] sm:$0x8]
  %vm615 = vcmask 1043459
  %v616 = vsel %vm615, %v614, %v612
  %s617 = scalar_lea.vmem %s0, 80
  %v618 = vld [vmem:[%s617] sm:$0x10]
  %vm619 = vcmask 1044484
  %v620 = vsel %vm619, %v618, %v616
  %s621 = scalar_lea.vmem %s0, 111
  %v622 = vld [vmem:[%s621] sm:$0x20]
  %vm623 = vcmask 1045509
  %v624 = vsel %vm623, %v622, %v620
  %s625 = scalar_lea.vmem %s0, 142
  %v626 = vld [vmem:[%s625] sm:$0x40]
  %vm627 = vcmask 1046534
  %v628 = vsel %vm627, %v626, %v624
  %s629 = scalar_lea.vmem %s0, 173
  %v630 = vld [vmem:[%s629] sm:$0x80]
  %vm631 = vcmask 1047559
  %v632 = vsel %vm631, %v630, %v628
  %633 = vrot.lane.b32.xlu0 %v632, 72
  %v634 = vpop.permute.xlu0 %633
  %vm635 = vcmask 671296
  %s636 = scalar_lea.vmem %s1, 32
  %637 = vst.msk [vmem:[%s636] sm:$0x3] %vm635, %v634
  %s638 = scalar_lea.vmem %s1, 6
  %639 = vst.msk [vmem:[%s638] sm:$0xfc] %vm635, %v634
  %s640 = scalar_lea.vmem %s0, 212
  %v641 = vld [vmem:[%s640] sm:$0x1]
  %s642 = scalar_lea.vmem %s0, 243
  %v643 = vld [vmem:[%s642] sm:$0x2]
  %vm644 = vcmask 1041409
  %v645 = vsel %vm644, %v643, %v641
  %646 = vrot.lane.b32.xlu0 %v645, 72
  %v647 = vpop.permute.xlu0 %646
  %vm648 = vcmask 671296
  %s649 = scalar_lea.vmem %s1, 14
  %650 = vst.msk [vmem:[%s649] sm:$0x3] %vm648, %v647
  %s651 = scalar_lea.vmem %s0, 7
  %v652 = vld [vmem:[%s651] sm:$0x1]
  %s653 = scalar_lea.vmem %s0, 38
  %v654 = vld [vmem:[%s653] sm:$0x2]
  %vm655 = vcmask 1041409
  %v656 = vsel %vm655, %v654, %v652
  %s657 = scalar_lea.vmem %s0, 69
  %v658 = vld [vmem:[%s657] sm:$0x4]
  %vm659 = vcmask 1042434
  %v660 = vsel %vm659, %v658, %v656
  %s661 = scalar_lea.vmem %s0, 100
  %v662 = vld [vmem:[%s661] sm:$0x8]
  %vm663 = vcmask 1043459
  %v664 = vsel %vm663, %v662, %v660
  %s665 = scalar_lea.vmem %s0, 131
  %v666 = vld [vmem:[%s665] sm:$0x10]
  %vm667 = vcmask 1044484
  %v668 = vsel %vm667, %v666, %v664
  %s669 = scalar_lea.vmem %s0, 162
  %v670 = vld [vmem:[%s669] sm:$0x20]
  %vm671 = vcmask 1045509
  %v672 = vsel %vm671, %v670, %v668
  %s673 = scalar_lea.vmem %s0, 193
  %v674 = vld [vmem:[%s673] sm:$0x40]
  %vm675 = vcmask 1046534
  %v676 = vsel %vm675, %v674, %v672
  %s677 = scalar_lea.vmem %s0, 224
  %v678 = vld [vmem:[%s677] sm:$0x80]
  %vm679 = vcmask 1047559
  %v680 = vsel %vm679, %v678, %v676
  %681 = vrot.lane.b32.xlu0 %v680, 70
  %v682 = vpop.permute.xlu0 %681
  %vm683 = vcmask 654896
  %684 = vst.msk [vmem:[%s1] sm:$0xff] %vm683, %v682
  %s685 = scalar_lea.vmem %s0, 263
  %v686 = vld [vmem:[%s685] sm:$0x1]
  %s687 = scalar_lea.vmem %s0, 294
  %v688 = vld [vmem:[%s687] sm:$0x2]
  %vm689 = vcmask 1041409
  %v690 = vsel %vm689, %v688, %v686
  %691 = vrot.lane.b32.xlu0 %v690, 70
  %v692 = vpop.permute.xlu0 %691
  %vm693 = vcmask 654896
  %s694 = scalar_lea.vmem %s1, 24
  %695 = vst.msk [vmem:[%s694] sm:$0x3] %vm693, %v692
  %s696 = scalar_lea.vmem %s0, 275
  %v697 = vld [vmem:[%s696] sm:$0x1]
  %s698 = scalar_lea.vmem %s0, 306
  %v699 = vld [vmem:[%s698] sm:$0x2]
  %vm700 = vcmask 1041409
  %v701 = vsel %vm700, %v699, %v697
  %s702 = scalar_lea.vmem %s0, 17
  %v703 = vld [vmem:[%s702] sm:$0x4]
  %vm704 = vcmask 1042434
  %v705 = vsel %vm704, %v703, %v701
  %s706 = scalar_lea.vmem %s0, 48
  %v707 = vld [vmem:[%s706] sm:$0x8]
  %vm708 = vcmask 1043459
  %v709 = vsel %vm708, %v707, %v705
  %s710 = scalar_lea.vmem %s0, 79
  %v711 = vld [vmem:[%s710] sm:$0x10]
  %vm712 = vcmask 1044484
  %v713 = vsel %vm712, %v711, %v709
  %s714 = scalar_lea.vmem %s0, 110
  %v715 = vld [vmem:[%s714] sm:$0x20]
  %vm716 = vcmask 1045509
  %v717 = vsel %vm716, %v715, %v713
  %s718 = scalar_lea.vmem %s0, 141
  %v719 = vld [vmem:[%s718] sm:$0x40]
  %vm720 = vcmask 1046534
  %v721 = vsel %vm720, %v719, %v717
  %s722 = scalar_lea.vmem %s0, 172
  %v723 = vld [vmem:[%s722] sm:$0x80]
  %vm724 = vcmask 1047559
  %v725 = vsel %vm724, %v723, %v721
  %726 = vrot.lane.b32.xlu0 %v725, 62
  %v727 = vpop.permute.xlu0 %726
  %vm728 = vcmask 589296
  %s729 = scalar_lea.vmem %s1, 32
  %730 = vst.msk [vmem:[%s729] sm:$0x3] %vm728, %v727
  %s731 = scalar_lea.vmem %s1, 6
  %732 = vst.msk [vmem:[%s731] sm:$0xfc] %vm728, %v727
  %s733 = scalar_lea.vmem %s0, 211
  %v734 = vld [vmem:[%s733] sm:$0x1]
  %s735 = scalar_lea.vmem %s0, 242
  %v736 = vld [vmem:[%s735] sm:$0x2]
  %vm737 = vcmask 1041409
  %v738 = vsel %vm737, %v736, %v734
  %739 = vrot.lane.b32.xlu0 %v738, 62
  %v740 = vpop.permute.xlu0 %739
  %vm741 = vcmask 589296
  %s742 = scalar_lea.vmem %s1, 14
  %743 = vst.msk [vmem:[%s742] sm:$0x3] %vm741, %v740
  %s744 = scalar_lea.vmem %s0, 6
  %v745 = vld [vmem:[%s744] sm:$0x1]
  %s746 = scalar_lea.vmem %s0, 37
  %v747 = vld [vmem:[%s746] sm:$0x2]
  %vm748 = vcmask 1041409
  %v749 = vsel %vm748, %v747, %v745
  %s750 = scalar_lea.vmem %s0, 68
  %v751 = vld [vmem:[%s750] sm:$0x4]
  %vm752 = vcmask 1042434
  %v753 = vsel %vm752, %v751, %v749
  %s754 = scalar_lea.vmem %s0, 99
  %v755 = vld [vmem:[%s754] sm:$0x8]
  %vm756 = vcmask 1043459
  %v757 = vsel %vm756, %v755, %v753
  %s758 = scalar_lea.vmem %s0, 130
  %v759 = vld [vmem:[%s758] sm:$0x10]
  %vm760 = vcmask 1044484
  %v761 = vsel %vm760, %v759, %v757
  %s762 = scalar_lea.vmem %s0, 161
  %v763 = vld [vmem:[%s762] sm:$0x20]
  %vm764 = vcmask 1045509
  %v765 = vsel %vm764, %v763, %v761
  %s766 = scalar_lea.vmem %s0, 192
  %v767 = vld [vmem:[%s766] sm:$0x40]
  %vm768 = vcmask 1046534
  %v769 = vsel %vm768, %v767, %v765
  %s770 = scalar_lea.vmem %s0, 223
  %v771 = vld [vmem:[%s770] sm:$0x80]
  %vm772 = vcmask 1047559
  %v773 = vsel %vm772, %v771, %v769
  %774 = vrot.lane.b32.xlu0 %v773, 60
  %v775 = vpop.permute.xlu0 %774
  %vm776 = vcmask 572896
  %777 = vst.msk [vmem:[%s1] sm:$0xff] %vm776, %v775
  %s778 = scalar_lea.vmem %s0, 262
  %v779 = vld [vmem:[%s778] sm:$0x1]
  %s780 = scalar_lea.vmem %s0, 293
  %v781 = vld [vmem:[%s780] sm:$0x2]
  %vm782 = vcmask 1041409
  %v783 = vsel %vm782, %v781, %v779
  %784 = vrot.lane.b32.xlu0 %v783, 60
  %v785 = vpop.permute.xlu0 %784
  %vm786 = vcmask 572896
  %s787 = scalar_lea.vmem %s1, 24
  %788 = vst.msk [vmem:[%s787] sm:$0x3] %vm786, %v785
  %s789 = scalar_lea.vmem %s0, 287
  %v790 = vld [vmem:[%s789] sm:$0x1]
  %s791 = scalar_lea.vmem %s0, 318
  %v792 = vld [vmem:[%s791] sm:$0x2]
  %vm793 = vcmask 1041409
  %v794 = vsel %vm793, %v792, %v790
  %s795 = scalar_lea.vmem %s0, 29
  %v796 = vld [vmem:[%s795] sm:$0x4]
  %vm797 = vcmask 1042434
  %v798 = vsel %vm797, %v796, %v794
  %s799 = scalar_lea.vmem %s0, 60
  %v800 = vld [vmem:[%s799] sm:$0x8]
  %vm801 = vcmask 1043459
  %v802 = vsel %vm801, %v800, %v798
  %s803 = scalar_lea.vmem %s0, 91
  %v804 = vld [vmem:[%s803] sm:$0x10]
  %vm805 = vcmask 1044484
  %v806 = vsel %vm805, %v804, %v802
  %s807 = scalar_lea.vmem %s0, 122
  %v808 = vld [vmem:[%s807] sm:$0x20]
  %vm809 = vcmask 1045509
  %v810 = vsel %vm809, %v808, %v806
  %s811 = scalar_lea.vmem %s0, 153
  %v812 = vld [vmem:[%s811] sm:$0x40]
  %vm813 = vcmask 1046534
  %v814 = vsel %vm813, %v812, %v810
  %s815 = scalar_lea.vmem %s0, 184
  %v816 = vld [vmem:[%s815] sm:$0x80]
  %vm817 = vcmask 1047559
  %v818 = vsel %vm817, %v816, %v814
  %819 = vrot.lane.b32.xlu0 %v818, 54
  %v820 = vpop.permute.xlu0 %819
  %vm821 = vcmask 523696
  %s822 = scalar_lea.vmem %s1, 40
  %823 = vst.msk [vmem:[%s822] sm:$0x3] %vm821, %v820
  %s824 = scalar_lea.vmem %s1, 14
  %825 = vst.msk [vmem:[%s824] sm:$0xfc] %vm821, %v820
  %s826 = scalar_lea.vmem %s0, 223
  %v827 = vld [vmem:[%s826] sm:$0x1]
  %s828 = scalar_lea.vmem %s0, 254
  %v829 = vld [vmem:[%s828] sm:$0x2]
  %vm830 = vcmask 1041409
  %v831 = vsel %vm830, %v829, %v827
  %832 = vrot.lane.b32.xlu0 %v831, 54
  %v833 = vpop.permute.xlu0 %832
  %vm834 = vcmask 523696
  %s835 = scalar_lea.vmem %s1, 22
  %836 = vst.msk [vmem:[%s835] sm:$0x3] %vm834, %v833
  %s837 = scalar_lea.vmem %s0, 274
  %v838 = vld [vmem:[%s837] sm:$0x1]
  %s839 = scalar_lea.vmem %s0, 305
  %v840 = vld [vmem:[%s839] sm:$0x2]
  %vm841 = vcmask 1041409
  %v842 = vsel %vm841, %v840, %v838
  %s843 = scalar_lea.vmem %s0, 16
  %v844 = vld [vmem:[%s843] sm:$0x4]
  %vm845 = vcmask 1042434
  %v846 = vsel %vm845, %v844, %v842
  %s847 = scalar_lea.vmem %s0, 47
  %v848 = vld [vmem:[%s847] sm:$0x8]
  %vm849 = vcmask 1043459
  %v850 = vsel %vm849, %v848, %v846
  %s851 = scalar_lea.vmem %s0, 78
  %v852 = vld [vmem:[%s851] sm:$0x10]
  %vm853 = vcmask 1044484
  %v854 = vsel %vm853, %v852, %v850
  %s855 = scalar_lea.vmem %s0, 109
  %v856 = vld [vmem:[%s855] sm:$0x20]
  %vm857 = vcmask 1045509
  %v858 = vsel %vm857, %v856, %v854
  %s859 = scalar_lea.vmem %s0, 140
  %v860 = vld [vmem:[%s859] sm:$0x40]
  %vm861 = vcmask 1046534
  %v862 = vsel %vm861, %v860, %v858
  %s863 = scalar_lea.vmem %s0, 171
  %v864 = vld [vmem:[%s863] sm:$0x80]
  %vm865 = vcmask 1047559
  %v866 = vsel %vm865, %v864, %v862
  %867 = vrot.lane.b32.xlu0 %v866, 52
  %v868 = vpop.permute.xlu0 %867
  %vm869 = vcmask 507296
  %s870 = scalar_lea.vmem %s1, 32
  %871 = vst.msk [vmem:[%s870] sm:$0x3] %vm869, %v868
  %s872 = scalar_lea.vmem %s1, 6
  %873 = vst.msk [vmem:[%s872] sm:$0xfc] %vm869, %v868
  %s874 = scalar_lea.vmem %s0, 210
  %v875 = vld [vmem:[%s874] sm:$0x1]
  %s876 = scalar_lea.vmem %s0, 241
  %v877 = vld [vmem:[%s876] sm:$0x2]
  %vm878 = vcmask 1041409
  %v879 = vsel %vm878, %v877, %v875
  %880 = vrot.lane.b32.xlu0 %v879, 52
  %v881 = vpop.permute.xlu0 %880
  %vm882 = vcmask 507296
  %s883 = scalar_lea.vmem %s1, 14
  %884 = vst.msk [vmem:[%s883] sm:$0x3] %vm882, %v881
  %s885 = scalar_lea.vmem %s0, 5
  %v886 = vld [vmem:[%s885] sm:$0x1]
  %s887 = scalar_lea.vmem %s0, 36
  %v888 = vld [vmem:[%s887] sm:$0x2]
  %vm889 = vcmask 1041409
  %v890 = vsel %vm889, %v888, %v886
  %s891 = scalar_lea.vmem %s0, 67
  %v892 = vld [vmem:[%s891] sm:$0x4]
  %vm893 = vcmask 1042434
  %v894 = vsel %vm893, %v892, %v890
  %s895 = scalar_lea.vmem %s0, 98
  %v896 = vld [vmem:[%s895] sm:$0x8]
  %vm897 = vcmask 1043459
  %v898 = vsel %vm897, %v896, %v894
  %s899 = scalar_lea.vmem %s0, 129
  %v900 = vld [vmem:[%s899] sm:$0x10]
  %vm901 = vcmask 1044484
  %v902 = vsel %vm901, %v900, %v898
  %s903 = scalar_lea.vmem %s0, 160
  %v904 = vld [vmem:[%s903] sm:$0x20]
  %vm905 = vcmask 1045509
  %v906 = vsel %vm905, %v904, %v902
  %s907 = scalar_lea.vmem %s0, 191
  %v908 = vld [vmem:[%s907] sm:$0x40]
  %vm909 = vcmask 1046534
  %v910 = vsel %vm909, %v908, %v906
  %s911 = scalar_lea.vmem %s0, 222
  %v912 = vld [vmem:[%s911] sm:$0x80]
  %vm913 = vcmask 1047559
  %v914 = vsel %vm913, %v912, %v910
  %915 = vrot.lane.b32.xlu0 %v914, 50
  %v916 = vpop.permute.xlu0 %915
  %vm917 = vcmask 490896
  %918 = vst.msk [vmem:[%s1] sm:$0xff] %vm917, %v916
  %s919 = scalar_lea.vmem %s0, 261
  %v920 = vld [vmem:[%s919] sm:$0x1]
  %s921 = scalar_lea.vmem %s0, 292
  %v922 = vld [vmem:[%s921] sm:$0x2]
  %vm923 = vcmask 1041409
  %v924 = vsel %vm923, %v922, %v920
  %925 = vrot.lane.b32.xlu0 %v924, 50
  %v926 = vpop.permute.xlu0 %925
  %vm927 = vcmask 490896
  %s928 = scalar_lea.vmem %s1, 24
  %929 = vst.msk [vmem:[%s928] sm:$0x3] %vm927, %v926
  %s930 = scalar_lea.vmem %s0, 286
  %v931 = vld [vmem:[%s930] sm:$0x1]
  %s932 = scalar_lea.vmem %s0, 317
  %v933 = vld [vmem:[%s932] sm:$0x2]
  %vm934 = vcmask 1041409
  %v935 = vsel %vm934, %v933, %v931
  %s936 = scalar_lea.vmem %s0, 28
  %v937 = vld [vmem:[%s936] sm:$0x4]
  %vm938 = vcmask 1042434
  %v939 = vsel %vm938, %v937, %v935
  %s940 = scalar_lea.vmem %s0, 59
  %v941 = vld [vmem:[%s940] sm:$0x8]
  %vm942 = vcmask 1043459
  %v943 = vsel %vm942, %v941, %v939
  %s944 = scalar_lea.vmem %s0, 90
  %v945 = vld [vmem:[%s944] sm:$0x10]
  %vm946 = vcmask 1044484
  %v947 = vsel %vm946, %v945, %v943
  %s948 = scalar_lea.vmem %s0, 121
  %v949 = vld [vmem:[%s948] sm:$0x20]
  %vm950 = vcmask 1045509
  %v951 = vsel %vm950, %v949, %v947
  %s952 = scalar_lea.vmem %s0, 152
  %v953 = vld [vmem:[%s952] sm:$0x40]
  %vm954 = vcmask 1046534
  %v955 = vsel %vm954, %v953, %v951
  %s956 = scalar_lea.vmem %s0, 183
  %v957 = vld [vmem:[%s956] sm:$0x80]
  %vm958 = vcmask 1047559
  %v959 = vsel %vm958, %v957, %v955
  %960 = vrot.lane.b32.xlu0 %v959, 44
  %v961 = vpop.permute.xlu0 %960
  %vm962 = vcmask 441696
  %s963 = scalar_lea.vmem %s1, 40
  %964 = vst.msk [vmem:[%s963] sm:$0x3] %vm962, %v961
  %s965 = scalar_lea.vmem %s1, 14
  %966 = vst.msk [vmem:[%s965] sm:$0xfc] %vm962, %v961
  %s967 = scalar_lea.vmem %s0, 222
  %v968 = vld [vmem:[%s967] sm:$0x1]
  %s969 = scalar_lea.vmem %s0, 253
  %v970 = vld [vmem:[%s969] sm:$0x2]
  %vm971 = vcmask 1041409
  %v972 = vsel %vm971, %v970, %v968
  %973 = vrot.lane.b32.xlu0 %v972, 44
  %v974 = vpop.permute.xlu0 %973
  %vm975 = vcmask 441696
  %s976 = scalar_lea.vmem %s1, 22
  %977 = vst.msk [vmem:[%s976] sm:$0x3] %vm975, %v974
  %s978 = scalar_lea.vmem %s0, 273
  %v979 = vld [vmem:[%s978] sm:$0x1]
  %s980 = scalar_lea.vmem %s0, 304
  %v981 = vld [vmem:[%s980] sm:$0x2]
  %vm982 = vcmask 1041409
  %v983 = vsel %vm982, %v981, %v979
  %s984 = scalar_lea.vmem %s0, 15
  %v985 = vld [vmem:[%s984] sm:$0x4]
  %vm986 = vcmask 1042434
  %v987 = vsel %vm986, %v985, %v983
  %s988 = scalar_lea.vmem %s0, 46
  %v989 = vld [vmem:[%s988] sm:$0x8]
  %vm990 = vcmask 1043459
  %v991 = vsel %vm990, %v989, %v987
  %s992 = scalar_lea.vmem %s0, 77
  %v993 = vld [vmem:[%s992] sm:$0x10]
  %vm994 = vcmask 1044484
  %v995 = vsel %vm994, %v993, %v991
  %s996 = scalar_lea.vmem %s0, 108
  %v997 = vld [vmem:[%s996] sm:$0x20]
  %vm998 = vcmask 1045509
  %v999 = vsel %vm998, %v997, %v995
  %s1000 = scalar_lea.vmem %s0, 139
  %v1001 = vld [vmem:[%s1000] sm:$0x40]
  %vm1002 = vcmask 1046534
  %v1003 = vsel %vm1002, %v1001, %v999
  %s1004 = scalar_lea.vmem %s0, 170
  %v1005 = vld [vmem:[%s1004] sm:$0x80]
  %vm1006 = vcmask 1047559
  %v1007 = vsel %vm1006, %v1005, %v1003
  %1008 = vrot.lane.b32.xlu0 %v1007, 42
  %v1009 = vpop.permute.xlu0 %1008
  %vm1010 = vcmask 425296
  %s1011 = scalar_lea.vmem %s1, 32
  %1012 = vst.msk [vmem:[%s1011] sm:$0x3] %vm1010, %v1009
  %s1013 = scalar_lea.vmem %s1, 6
  %1014 = vst.msk [vmem:[%s1013] sm:$0xfc] %vm1010, %v1009
  %s1015 = scalar_lea.vmem %s0, 209
  %v1016 = vld [vmem:[%s1015] sm:$0x1]
  %s1017 = scalar_lea.vmem %s0, 240
  %v1018 = vld [vmem:[%s1017] sm:$0x2]
  %vm1019 = vcmask 1041409
  %v1020 = vsel %vm1019, %v1018, %v1016
  %1021 = vrot.lane.b32.xlu0 %v1020, 42
  %v1022 = vpop.permute.xlu0 %1021
  %vm1023 = vcmask 425296
  %s1024 = scalar_lea.vmem %s1, 14
  %1025 = vst.msk [vmem:[%s1024] sm:$0x3] %vm1023, %v1022
  %s1026 = scalar_lea.vmem %s0, 4
  %v1027 = vld [vmem:[%s1026] sm:$0x1]
  %s1028 = scalar_lea.vmem %s0, 35
  %v1029 = vld [vmem:[%s1028] sm:$0x2]
  %vm1030 = vcmask 1041409
  %v1031 = vsel %vm1030, %v1029, %v1027
  %s1032 = scalar_lea.vmem %s0, 66
  %v1033 = vld [vmem:[%s1032] sm:$0x4]
  %vm1034 = vcmask 1042434
  %v1035 = vsel %vm1034, %v1033, %v1031
  %s1036 = scalar_lea.vmem %s0, 97
  %v1037 = vld [vmem:[%s1036] sm:$0x8]
  %vm1038 = vcmask 1043459
  %v1039 = vsel %vm1038, %v1037, %v1035
  %s1040 = scalar_lea.vmem %s0, 128
  %v1041 = vld [vmem:[%s1040] sm:$0x10]
  %vm1042 = vcmask 1044484
  %v1043 = vsel %vm1042, %v1041, %v1039
  %s1044 = scalar_lea.vmem %s0, 159
  %v1045 = vld [vmem:[%s1044] sm:$0x20]
  %vm1046 = vcmask 1045509
  %v1047 = vsel %vm1046, %v1045, %v1043
  %s1048 = scalar_lea.vmem %s0, 190
  %v1049 = vld [vmem:[%s1048] sm:$0x40]
  %vm1050 = vcmask 1046534
  %v1051 = vsel %vm1050, %v1049, %v1047
  %s1052 = scalar_lea.vmem %s0, 221
  %v1053 = vld [vmem:[%s1052] sm:$0x80]
  %vm1054 = vcmask 1047559
  %v1055 = vsel %vm1054, %v1053, %v1051
  %1056 = vrot.lane.b32.xlu0 %v1055, 40
  %v1057 = vpop.permute.xlu0 %1056
  %vm1058 = vcmask 408896
  %1059 = vst.msk [vmem:[%s1] sm:$0xff] %vm1058, %v1057
  %s1060 = scalar_lea.vmem %s0, 260
  %v1061 = vld [vmem:[%s1060] sm:$0x1]
  %s1062 = scalar_lea.vmem %s0, 291
  %v1063 = vld [vmem:[%s1062] sm:$0x2]
  %vm1064 = vcmask 1041409
  %v1065 = vsel %vm1064, %v1063, %v1061
  %1066 = vrot.lane.b32.xlu0 %v1065, 40
  %v1067 = vpop.permute.xlu0 %1066
  %vm1068 = vcmask 408896
  %s1069 = scalar_lea.vmem %s1, 24
  %1070 = vst.msk [vmem:[%s1069] sm:$0x3] %vm1068, %v1067
  %s1071 = scalar_lea.vmem %s0, 285
  %v1072 = vld [vmem:[%s1071] sm:$0x1]
  %s1073 = scalar_lea.vmem %s0, 316
  %v1074 = vld [vmem:[%s1073] sm:$0x2]
  %vm1075 = vcmask 1041409
  %v1076 = vsel %vm1075, %v1074, %v1072
  %s1077 = scalar_lea.vmem %s0, 27
  %v1078 = vld [vmem:[%s1077] sm:$0x4]
  %vm1079 = vcmask 1042434
  %v1080 = vsel %vm1079, %v1078, %v1076
  %s1081 = scalar_lea.vmem %s0, 58
  %v1082 = vld [vmem:[%s1081] sm:$0x8]
  %vm1083 = vcmask 1043459
  %v1084 = vsel %vm1083, %v1082, %v1080
  %s1085 = scalar_lea.vmem %s0, 89
  %v1086 = vld [vmem:[%s1085] sm:$0x10]
  %vm1087 = vcmask 1044484
  %v1088 = vsel %vm1087, %v1086, %v1084
  %s1089 = scalar_lea.vmem %s0, 120
  %v1090 = vld [vmem:[%s1089] sm:$0x20]
  %vm1091 = vcmask 1045509
  %v1092 = vsel %vm1091, %v1090, %v1088
  %s1093 = scalar_lea.vmem %s0, 151
  %v1094 = vld [vmem:[%s1093] sm:$0x40]
  %vm1095 = vcmask 1046534
  %v1096 = vsel %vm1095, %v1094, %v1092
  %s1097 = scalar_lea.vmem %s0, 182
  %v1098 = vld [vmem:[%s1097] sm:$0x80]
  %vm1099 = vcmask 1047559
  %v1100 = vsel %vm1099, %v1098, %v1096
  %1101 = vrot.lane.b32.xlu0 %v1100, 34
  %v1102 = vpop.permute.xlu0 %1101
  %vm1103 = vcmask 359696
  %s1104 = scalar_lea.vmem %s1, 40
  %1105 = vst.msk [vmem:[%s1104] sm:$0x3] %vm1103, %v1102
  %s1106 = scalar_lea.vmem %s1, 14
  %1107 = vst.msk [vmem:[%s1106] sm:$0xfc] %vm1103, %v1102
  %s1108 = scalar_lea.vmem %s0, 221
  %v1109 = vld [vmem:[%s1108] sm:$0x1]
  %s1110 = scalar_lea.vmem %s0, 252
  %v1111 = vld [vmem:[%s1110] sm:$0x2]
  %vm1112 = vcmask 1041409
  %v1113 = vsel %vm1112, %v1111, %v1109
  %1114 = vrot.lane.b32.xlu0 %v1113, 34
  %v1115 = vpop.permute.xlu0 %1114
  %vm1116 = vcmask 359696
  %s1117 = scalar_lea.vmem %s1, 22
  %1118 = vst.msk [vmem:[%s1117] sm:$0x3] %vm1116, %v1115
  %s1119 = scalar_lea.vmem %s0, 272
  %v1120 = vld [vmem:[%s1119] sm:$0x1]
  %s1121 = scalar_lea.vmem %s0, 303
  %v1122 = vld [vmem:[%s1121] sm:$0x2]
  %vm1123 = vcmask 1041409
  %v1124 = vsel %vm1123, %v1122, %v1120
  %s1125 = scalar_lea.vmem %s0, 14
  %v1126 = vld [vmem:[%s1125] sm:$0x4]
  %vm1127 = vcmask 1042434
  %v1128 = vsel %vm1127, %v1126, %v1124
  %s1129 = scalar_lea.vmem %s0, 45
  %v1130 = vld [vmem:[%s1129] sm:$0x8]
  %vm1131 = vcmask 1043459
  %v1132 = vsel %vm1131, %v1130, %v1128
  %s1133 = scalar_lea.vmem %s0, 76
  %v1134 = vld [vmem:[%s1133] sm:$0x10]
  %vm1135 = vcmask 1044484
  %v1136 = vsel %vm1135, %v1134, %v1132
  %s1137 = scalar_lea.vmem %s0, 107
  %v1138 = vld [vmem:[%s1137] sm:$0x20]
  %vm1139 = vcmask 1045509
  %v1140 = vsel %vm1139, %v1138, %v1136
  %s1141 = scalar_lea.vmem %s0, 138
  %v1142 = vld [vmem:[%s1141] sm:$0x40]
  %vm1143 = vcmask 1046534
  %v1144 = vsel %vm1143, %v1142, %v1140
  %s1145 = scalar_lea.vmem %s0, 169
  %v1146 = vld [vmem:[%s1145] sm:$0x80]
  %vm1147 = vcmask 1047559
  %v1148 = vsel %vm1147, %v1146, %v1144
  %1149 = vrot.lane.b32.xlu0 %v1148, 32
  %v1150 = vpop.permute.xlu0 %1149
  %vm1151 = vcmask 343296
  %s1152 = scalar_lea.vmem %s1, 32
  %1153 = vst.msk [vmem:[%s1152] sm:$0x3] %vm1151, %v1150
  %s1154 = scalar_lea.vmem %s1, 6
  %1155 = vst.msk [vmem:[%s1154] sm:$0xfc] %vm1151, %v1150
  %s1156 = scalar_lea.vmem %s0, 208
  %v1157 = vld [vmem:[%s1156] sm:$0x1]
  %s1158 = scalar_lea.vmem %s0, 239
  %v1159 = vld [vmem:[%s1158] sm:$0x2]
  %vm1160 = vcmask 1041409
  %v1161 = vsel %vm1160, %v1159, %v1157
  %1162 = vrot.lane.b32.xlu0 %v1161, 32
  %v1163 = vpop.permute.xlu0 %1162
  %vm1164 = vcmask 343296
  %s1165 = scalar_lea.vmem %s1, 14
  %1166 = vst.msk [vmem:[%s1165] sm:$0x3] %vm1164, %v1163
  %s1167 = scalar_lea.vmem %s0, 3
  %v1168 = vld [vmem:[%s1167] sm:$0x1]
  %s1169 = scalar_lea.vmem %s0, 34
  %v1170 = vld [vmem:[%s1169] sm:$0x2]
  %vm1171 = vcmask 1041409
  %v1172 = vsel %vm1171, %v1170, %v1168
  %s1173 = scalar_lea.vmem %s0, 65
  %v1174 = vld [vmem:[%s1173] sm:$0x4]
  %vm1175 = vcmask 1042434
  %v1176 = vsel %vm1175, %v1174, %v1172
  %s1177 = scalar_lea.vmem %s0, 96
  %v1178 = vld [vmem:[%s1177] sm:$0x8]
  %vm1179 = vcmask 1043459
  %v1180 = vsel %vm1179, %v1178, %v1176
  %s1181 = scalar_lea.vmem %s0, 127
  %v1182 = vld [vmem:[%s1181] sm:$0x10]
  %vm1183 = vcmask 1044484
  %v1184 = vsel %vm1183, %v1182, %v1180
  %s1185 = scalar_lea.vmem %s0, 158
  %v1186 = vld [vmem:[%s1185] sm:$0x20]
  %vm1187 = vcmask 1045509
  %v1188 = vsel %vm1187, %v1186, %v1184
  %s1189 = scalar_lea.vmem %s0, 189
  %v1190 = vld [vmem:[%s1189] sm:$0x40]
  %vm1191 = vcmask 1046534
  %v1192 = vsel %vm1191, %v1190, %v1188
  %s1193 = scalar_lea.vmem %s0, 220
  %v1194 = vld [vmem:[%s1193] sm:$0x80]
  %vm1195 = vcmask 1047559
  %v1196 = vsel %vm1195, %v1194, %v1192
  %1197 = vrot.lane.b32.xlu0 %v1196, 30
  %v1198 = vpop.permute.xlu0 %1197
  %vm1199 = vcmask 326896
  %1200 = vst.msk [vmem:[%s1] sm:$0xff] %vm1199, %v1198
  %s1201 = scalar_lea.vmem %s0, 259
  %v1202 = vld [vmem:[%s1201] sm:$0x1]
  %s1203 = scalar_lea.vmem %s0, 290
  %v1204 = vld [vmem:[%s1203] sm:$0x2]
  %vm1205 = vcmask 1041409
  %v1206 = vsel %vm1205, %v1204, %v1202
  %1207 = vrot.lane.b32.xlu0 %v1206, 30
  %v1208 = vpop.permute.xlu0 %1207
  %vm1209 = vcmask 326896
  %s1210 = scalar_lea.vmem %s1, 24
  %1211 = vst.msk [vmem:[%s1210] sm:$0x3] %vm1209, %v1208
  %s1212 = scalar_lea.vmem %s0, 284
  %v1213 = vld [vmem:[%s1212] sm:$0x1]
  %s1214 = scalar_lea.vmem %s0, 315
  %v1215 = vld [vmem:[%s1214] sm:$0x2]
  %vm1216 = vcmask 1041409
  %v1217 = vsel %vm1216, %v1215, %v1213
  %s1218 = scalar_lea.vmem %s0, 26
  %v1219 = vld [vmem:[%s1218] sm:$0x4]
  %vm1220 = vcmask 1042434
  %v1221 = vsel %vm1220, %v1219, %v1217
  %s1222 = scalar_lea.vmem %s0, 57
  %v1223 = vld [vmem:[%s1222] sm:$0x8]
  %vm1224 = vcmask 1043459
  %v1225 = vsel %vm1224, %v1223, %v1221
  %s1226 = scalar_lea.vmem %s0, 88
  %v1227 = vld [vmem:[%s1226] sm:$0x10]
  %vm1228 = vcmask 1044484
  %v1229 = vsel %vm1228, %v1227, %v1225
  %s1230 = scalar_lea.vmem %s0, 119
  %v1231 = vld [vmem:[%s1230] sm:$0x20]
  %vm1232 = vcmask 1045509
  %v1233 = vsel %vm1232, %v1231, %v1229
  %s1234 = scalar_lea.vmem %s0, 150
  %v1235 = vld [vmem:[%s1234] sm:$0x40]
  %vm1236 = vcmask 1046534
  %v1237 = vsel %vm1236, %v1235, %v1233
  %s1238 = scalar_lea.vmem %s0, 181
  %v1239 = vld [vmem:[%s1238] sm:$0x80]
  %vm1240 = vcmask 1047559
  %v1241 = vsel %vm1240, %v1239, %v1237
  %1242 = vrot.lane.b32.xlu0 %v1241, 24
  %v1243 = vpop.permute.xlu0 %1242
  %vm1244 = vcmask 277696
  %s1245 = scalar_lea.vmem %s1, 40
  %1246 = vst.msk [vmem:[%s1245] sm:$0x3] %vm1244, %v1243
  %s1247 = scalar_lea.vmem %s1, 14
  %1248 = vst.msk [vmem:[%s1247] sm:$0xfc] %vm1244, %v1243
  %s1249 = scalar_lea.vmem %s0, 220
  %v1250 = vld [vmem:[%s1249] sm:$0x1]
  %s1251 = scalar_lea.vmem %s0, 251
  %v1252 = vld [vmem:[%s1251] sm:$0x2]
  %vm1253 = vcmask 1041409
  %v1254 = vsel %vm1253, %v1252, %v1250
  %1255 = vrot.lane.b32.xlu0 %v1254, 24
  %v1256 = vpop.permute.xlu0 %1255
  %vm1257 = vcmask 277696
  %s1258 = scalar_lea.vmem %s1, 22
  %1259 = vst.msk [vmem:[%s1258] sm:$0x3] %vm1257, %v1256
  %s1260 = scalar_lea.vmem %s0, 271
  %v1261 = vld [vmem:[%s1260] sm:$0x1]
  %s1262 = scalar_lea.vmem %s0, 302
  %v1263 = vld [vmem:[%s1262] sm:$0x2]
  %vm1264 = vcmask 1041409
  %v1265 = vsel %vm1264, %v1263, %v1261
  %s1266 = scalar_lea.vmem %s0, 13
  %v1267 = vld [vmem:[%s1266] sm:$0x4]
  %vm1268 = vcmask 1042434
  %v1269 = vsel %vm1268, %v1267, %v1265
  %s1270 = scalar_lea.vmem %s0, 44
  %v1271 = vld [vmem:[%s1270] sm:$0x8]
  %vm1272 = vcmask 1043459
  %v1273 = vsel %vm1272, %v1271, %v1269
  %s1274 = scalar_lea.vmem %s0, 75
  %v1275 = vld [vmem:[%s1274] sm:$0x10]
  %vm1276 = vcmask 1044484
  %v1277 = vsel %vm1276, %v1275, %v1273
  %s1278 = scalar_lea.vmem %s0, 106
  %v1279 = vld [vmem:[%s1278] sm:$0x20]
  %vm1280 = vcmask 1045509
  %v1281 = vsel %vm1280, %v1279, %v1277
  %s1282 = scalar_lea.vmem %s0, 137
  %v1283 = vld [vmem:[%s1282] sm:$0x40]
  %vm1284 = vcmask 1046534
  %v1285 = vsel %vm1284, %v1283, %v1281
  %s1286 = scalar_lea.vmem %s0, 168
  %v1287 = vld [vmem:[%s1286] sm:$0x80]
  %vm1288 = vcmask 1047559
  %v1289 = vsel %vm1288, %v1287, %v1285
  %1290 = vrot.lane.b32.xlu0 %v1289, 22
  %v1291 = vpop.permute.xlu0 %1290
  %vm1292 = vcmask 261296
  %s1293 = scalar_lea.vmem %s1, 32
  %1294 = vst.msk [vmem:[%s1293] sm:$0x3] %vm1292, %v1291
  %s1295 = scalar_lea.vmem %s1, 6
  %1296 = vst.msk [vmem:[%s1295] sm:$0xfc] %vm1292, %v1291
  %s1297 = scalar_lea.vmem %s0, 207
  %v1298 = vld [vmem:[%s1297] sm:$0x1]
  %s1299 = scalar_lea.vmem %s0, 238
  %v1300 = vld [vmem:[%s1299] sm:$0x2]
  %vm1301 = vcmask 1041409
  %v1302 = vsel %vm1301, %v1300, %v1298
  %1303 = vrot.lane.b32.xlu0 %v1302, 22
  %v1304 = vpop.permute.xlu0 %1303
  %vm1305 = vcmask 261296
  %s1306 = scalar_lea.vmem %s1, 14
  %1307 = vst.msk [vmem:[%s1306] sm:$0x3] %vm1305, %v1304
  %s1308 = scalar_lea.vmem %s0, 2
  %v1309 = vld [vmem:[%s1308] sm:$0x1]
  %s1310 = scalar_lea.vmem %s0, 33
  %v1311 = vld [vmem:[%s1310] sm:$0x2]
  %vm1312 = vcmask 1041409
  %v1313 = vsel %vm1312, %v1311, %v1309
  %s1314 = scalar_lea.vmem %s0, 64
  %v1315 = vld [vmem:[%s1314] sm:$0x4]
  %vm1316 = vcmask 1042434
  %v1317 = vsel %vm1316, %v1315, %v1313
  %s1318 = scalar_lea.vmem %s0, 95
  %v1319 = vld [vmem:[%s1318] sm:$0x8]
  %vm1320 = vcmask 1043459
  %v1321 = vsel %vm1320, %v1319, %v1317
  %s1322 = scalar_lea.vmem %s0, 126
  %v1323 = vld [vmem:[%s1322] sm:$0x10]
  %vm1324 = vcmask 1044484
  %v1325 = vsel %vm1324, %v1323, %v1321
  %s1326 = scalar_lea.vmem %s0, 157
  %v1327 = vld [vmem:[%s1326] sm:$0x20]
  %vm1328 = vcmask 1045509
  %v1329 = vsel %vm1328, %v1327, %v1325
  %s1330 = scalar_lea.vmem %s0, 188
  %v1331 = vld [vmem:[%s1330] sm:$0x40]
  %vm1332 = vcmask 1046534
  %v1333 = vsel %vm1332, %v1331, %v1329
  %s1334 = scalar_lea.vmem %s0, 219
  %v1335 = vld [vmem:[%s1334] sm:$0x80]
  %vm1336 = vcmask 1047559
  %v1337 = vsel %vm1336, %v1335, %v1333
  %1338 = vrot.lane.b32.xlu0 %v1337, 20
  %v1339 = vpop.permute.xlu0 %1338
  %vm1340 = vcmask 244896
  %1341 = vst.msk [vmem:[%s1] sm:$0xff] %vm1340, %v1339
  %s1342 = scalar_lea.vmem %s0, 258
  %v1343 = vld [vmem:[%s1342] sm:$0x1]
  %s1344 = scalar_lea.vmem %s0, 289
  %v1345 = vld [vmem:[%s1344] sm:$0x2]
  %vm1346 = vcmask 1041409
  %v1347 = vsel %vm1346, %v1345, %v1343
  %1348 = vrot.lane.b32.xlu0 %v1347, 20
  %v1349 = vpop.permute.xlu0 %1348
  %vm1350 = vcmask 244896
  %s1351 = scalar_lea.vmem %s1, 24
  %1352 = vst.msk [vmem:[%s1351] sm:$0x3] %vm1350, %v1349
  %s1353 = scalar_lea.vmem %s0, 283
  %v1354 = vld [vmem:[%s1353] sm:$0x1]
  %s1355 = scalar_lea.vmem %s0, 314
  %v1356 = vld [vmem:[%s1355] sm:$0x2]
  %vm1357 = vcmask 1041409
  %v1358 = vsel %vm1357, %v1356, %v1354
  %s1359 = scalar_lea.vmem %s0, 25
  %v1360 = vld [vmem:[%s1359] sm:$0x4]
  %vm1361 = vcmask 1042434
  %v1362 = vsel %vm1361, %v1360, %v1358
  %s1363 = scalar_lea.vmem %s0, 56
  %v1364 = vld [vmem:[%s1363] sm:$0x8]
  %vm1365 = vcmask 1043459
  %v1366 = vsel %vm1365, %v1364, %v1362
  %s1367 = scalar_lea.vmem %s0, 87
  %v1368 = vld [vmem:[%s1367] sm:$0x10]
  %vm1369 = vcmask 1044484
  %v1370 = vsel %vm1369, %v1368, %v1366
  %s1371 = scalar_lea.vmem %s0, 118
  %v1372 = vld [vmem:[%s1371] sm:$0x20]
  %vm1373 = vcmask 1045509
  %v1374 = vsel %vm1373, %v1372, %v1370
  %s1375 = scalar_lea.vmem %s0, 149
  %v1376 = vld [vmem:[%s1375] sm:$0x40]
  %vm1377 = vcmask 1046534
  %v1378 = vsel %vm1377, %v1376, %v1374
  %s1379 = scalar_lea.vmem %s0, 180
  %v1380 = vld [vmem:[%s1379] sm:$0x80]
  %vm1381 = vcmask 1047559
  %v1382 = vsel %vm1381, %v1380, %v1378
  %1383 = vrot.lane.b32.xlu0 %v1382, 14
  %v1384 = vpop.permute.xlu0 %1383
  %vm1385 = vcmask 195696
  %s1386 = scalar_lea.vmem %s1, 40
  %1387 = vst.msk [vmem:[%s1386] sm:$0x3] %vm1385, %v1384
  %s1388 = scalar_lea.vmem %s1, 14
  %1389 = vst.msk [vmem:[%s1388] sm:$0xfc] %vm1385, %v1384
  %s1390 = scalar_lea.vmem %s0, 219
  %v1391 = vld [vmem:[%s1390] sm:$0x1]
  %s1392 = scalar_lea.vmem %s0, 250
  %v1393 = vld [vmem:[%s1392] sm:$0x2]
  %vm1394 = vcmask 1041409
  %v1395 = vsel %vm1394, %v1393, %v1391
  %1396 = vrot.lane.b32.xlu0 %v1395, 14
  %v1397 = vpop.permute.xlu0 %1396
  %vm1398 = vcmask 195696
  %s1399 = scalar_lea.vmem %s1, 22
  %1400 = vst.msk [vmem:[%s1399] sm:$0x3] %vm1398, %v1397
  %s1401 = scalar_lea.vmem %s0, 270
  %v1402 = vld [vmem:[%s1401] sm:$0x1]
  %s1403 = scalar_lea.vmem %s0, 301
  %v1404 = vld [vmem:[%s1403] sm:$0x2]
  %vm1405 = vcmask 1041409
  %v1406 = vsel %vm1405, %v1404, %v1402
  %s1407 = scalar_lea.vmem %s0, 12
  %v1408 = vld [vmem:[%s1407] sm:$0x4]
  %vm1409 = vcmask 1042434
  %v1410 = vsel %vm1409, %v1408, %v1406
  %s1411 = scalar_lea.vmem %s0, 43
  %v1412 = vld [vmem:[%s1411] sm:$0x8]
  %vm1413 = vcmask 1043459
  %v1414 = vsel %vm1413, %v1412, %v1410
  %s1415 = scalar_lea.vmem %s0, 74
  %v1416 = vld [vmem:[%s1415] sm:$0x10]
  %vm1417 = vcmask 1044484
  %v1418 = vsel %vm1417, %v1416, %v1414
  %s1419 = scalar_lea.vmem %s0, 105
  %v1420 = vld [vmem:[%s1419] sm:$0x20]
  %vm1421 = vcmask 1045509
  %v1422 = vsel %vm1421, %v1420, %v1418
  %s1423 = scalar_lea.vmem %s0, 136
  %v1424 = vld [vmem:[%s1423] sm:$0x40]
  %vm1425 = vcmask 1046534
  %v1426 = vsel %vm1425, %v1424, %v1422
  %s1427 = scalar_lea.vmem %s0, 167
  %v1428 = vld [vmem:[%s1427] sm:$0x80]
  %vm1429 = vcmask 1047559
  %v1430 = vsel %vm1429, %v1428, %v1426
  %1431 = vrot.lane.b32.xlu0 %v1430, 12
  %v1432 = vpop.permute.xlu0 %1431
  %vm1433 = vcmask 179296
  %s1434 = scalar_lea.vmem %s1, 32
  %1435 = vst.msk [vmem:[%s1434] sm:$0x3] %vm1433, %v1432
  %s1436 = scalar_lea.vmem %s1, 6
  %1437 = vst.msk [vmem:[%s1436] sm:$0xfc] %vm1433, %v1432
  %s1438 = scalar_lea.vmem %s0, 206
  %v1439 = vld [vmem:[%s1438] sm:$0x1]
  %s1440 = scalar_lea.vmem %s0, 237
  %v1441 = vld [vmem:[%s1440] sm:$0x2]
  %vm1442 = vcmask 1041409
  %v1443 = vsel %vm1442, %v1441, %v1439
  %1444 = vrot.lane.b32.xlu0 %v1443, 12
  %v1445 = vpop.permute.xlu0 %1444
  %vm1446 = vcmask 179296
  %s1447 = scalar_lea.vmem %s1, 14
  %1448 = vst.msk [vmem:[%s1447] sm:$0x3] %vm1446, %v1445
  %s1449 = scalar_lea.vmem %s0, 1
  %v1450 = vld [vmem:[%s1449] sm:$0x1]
  %s1451 = scalar_lea.vmem %s0, 32
  %v1452 = vld [vmem:[%s1451] sm:$0x2]
  %vm1453 = vcmask 1041409
  %v1454 = vsel %vm1453, %v1452, %v1450
  %s1455 = scalar_lea.vmem %s0, 63
  %v1456 = vld [vmem:[%s1455] sm:$0x4]
  %vm1457 = vcmask 1042434
  %v1458 = vsel %vm1457, %v1456, %v1454
  %s1459 = scalar_lea.vmem %s0, 94
  %v1460 = vld [vmem:[%s1459] sm:$0x8]
  %vm1461 = vcmask 1043459
  %v1462 = vsel %vm1461, %v1460, %v1458
  %s1463 = scalar_lea.vmem %s0, 125
  %v1464 = vld [vmem:[%s1463] sm:$0x10]
  %vm1465 = vcmask 1044484
  %v1466 = vsel %vm1465, %v1464, %v1462
  %s1467 = scalar_lea.vmem %s0, 156
  %v1468 = vld [vmem:[%s1467] sm:$0x20]
  %vm1469 = vcmask 1045509
  %v1470 = vsel %vm1469, %v1468, %v1466
  %s1471 = scalar_lea.vmem %s0, 187
  %v1472 = vld [vmem:[%s1471] sm:$0x40]
  %vm1473 = vcmask 1046534
  %v1474 = vsel %vm1473, %v1472, %v1470
  %s1475 = scalar_lea.vmem %s0, 218
  %v1476 = vld [vmem:[%s1475] sm:$0x80]
  %vm1477 = vcmask 1047559
  %v1478 = vsel %vm1477, %v1476, %v1474
  %1479 = vrot.lane.b32.xlu0 %v1478, 10
  %v1480 = vpop.permute.xlu0 %1479
  %vm1481 = vcmask 162896
  %1482 = vst.msk [vmem:[%s1] sm:$0xff] %vm1481, %v1480
  %s1483 = scalar_lea.vmem %s0, 257
  %v1484 = vld [vmem:[%s1483] sm:$0x1]
  %s1485 = scalar_lea.vmem %s0, 288
  %v1486 = vld [vmem:[%s1485] sm:$0x2]
  %vm1487 = vcmask 1041409
  %v1488 = vsel %vm1487, %v1486, %v1484
  %1489 = vrot.lane.b32.xlu0 %v1488, 10
  %v1490 = vpop.permute.xlu0 %1489
  %vm1491 = vcmask 162896
  %s1492 = scalar_lea.vmem %s1, 24
  %1493 = vst.msk [vmem:[%s1492] sm:$0x3] %vm1491, %v1490
  %s1494 = scalar_lea.vmem %s0, 282
  %v1495 = vld [vmem:[%s1494] sm:$0x1]
  %s1496 = scalar_lea.vmem %s0, 313
  %v1497 = vld [vmem:[%s1496] sm:$0x2]
  %vm1498 = vcmask 1041409
  %v1499 = vsel %vm1498, %v1497, %v1495
  %s1500 = scalar_lea.vmem %s0, 24
  %v1501 = vld [vmem:[%s1500] sm:$0x4]
  %vm1502 = vcmask 1042434
  %v1503 = vsel %vm1502, %v1501, %v1499
  %s1504 = scalar_lea.vmem %s0, 55
  %v1505 = vld [vmem:[%s1504] sm:$0x8]
  %vm1506 = vcmask 1043459
  %v1507 = vsel %vm1506, %v1505, %v1503
  %s1508 = scalar_lea.vmem %s0, 86
  %v1509 = vld [vmem:[%s1508] sm:$0x10]
  %vm1510 = vcmask 1044484
  %v1511 = vsel %vm1510, %v1509, %v1507
  %s1512 = scalar_lea.vmem %s0, 117
  %v1513 = vld [vmem:[%s1512] sm:$0x20]
  %vm1514 = vcmask 1045509
  %v1515 = vsel %vm1514, %v1513, %v1511
  %s1516 = scalar_lea.vmem %s0, 148
  %v1517 = vld [vmem:[%s1516] sm:$0x40]
  %vm1518 = vcmask 1046534
  %v1519 = vsel %vm1518, %v1517, %v1515
  %s1520 = scalar_lea.vmem %s0, 179
  %v1521 = vld [vmem:[%s1520] sm:$0x80]
  %vm1522 = vcmask 1047559
  %v1523 = vsel %vm1522, %v1521, %v1519
  %1524 = vrot.lane.b32.xlu0 %v1523, 4
  %v1525 = vpop.permute.xlu0 %1524
  %vm1526 = vcmask 113696
  %s1527 = scalar_lea.vmem %s1, 40
  %1528 = vst.msk [vmem:[%s1527] sm:$0x3] %vm1526, %v1525
  %s1529 = scalar_lea.vmem %s1, 14
  %1530 = vst.msk [vmem:[%s1529] sm:$0xfc] %vm1526, %v1525
  %s1531 = scalar_lea.vmem %s0, 218
  %v1532 = vld [vmem:[%s1531] sm:$0x1]
  %s1533 = scalar_lea.vmem %s0, 249
  %v1534 = vld [vmem:[%s1533] sm:$0x2]
  %vm1535 = vcmask 1041409
  %v1536 = vsel %vm1535, %v1534, %v1532
  %1537 = vrot.lane.b32.xlu0 %v1536, 4
  %v1538 = vpop.permute.xlu0 %1537
  %vm1539 = vcmask 113696
  %s1540 = scalar_lea.vmem %s1, 22
  %1541 = vst.msk [vmem:[%s1540] sm:$0x3] %vm1539, %v1538
  %s1542 = scalar_lea.vmem %s0, 269
  %v1543 = vld [vmem:[%s1542] sm:$0x1]
  %s1544 = scalar_lea.vmem %s0, 300
  %v1545 = vld [vmem:[%s1544] sm:$0x2]
  %vm1546 = vcmask 1041409
  %v1547 = vsel %vm1546, %v1545, %v1543
  %s1548 = scalar_lea.vmem %s0, 11
  %v1549 = vld [vmem:[%s1548] sm:$0x4]
  %vm1550 = vcmask 1042434
  %v1551 = vsel %vm1550, %v1549, %v1547
  %s1552 = scalar_lea.vmem %s0, 42
  %v1553 = vld [vmem:[%s1552] sm:$0x8]
  %vm1554 = vcmask 1043459
  %v1555 = vsel %vm1554, %v1553, %v1551
  %s1556 = scalar_lea.vmem %s0, 73
  %v1557 = vld [vmem:[%s1556] sm:$0x10]
  %vm1558 = vcmask 1044484
  %v1559 = vsel %vm1558, %v1557, %v1555
  %s1560 = scalar_lea.vmem %s0, 104
  %v1561 = vld [vmem:[%s1560] sm:$0x20]
  %vm1562 = vcmask 1045509
  %v1563 = vsel %vm1562, %v1561, %v1559
  %s1564 = scalar_lea.vmem %s0, 135
  %v1565 = vld [vmem:[%s1564] sm:$0x40]
  %vm1566 = vcmask 1046534
  %v1567 = vsel %vm1566, %v1565, %v1563
  %s1568 = scalar_lea.vmem %s0, 166
  %v1569 = vld [vmem:[%s1568] sm:$0x80]
  %vm1570 = vcmask 1047559
  %v1571 = vsel %vm1570, %v1569, %v1567
  %1572 = vrot.lane.b32.xlu0 %v1571, 2
  %v1573 = vpop.permute.xlu0 %1572
  %vm1574 = vcmask 97296
  %s1575 = scalar_lea.vmem %s1, 32
  %1576 = vst.msk [vmem:[%s1575] sm:$0x3] %vm1574, %v1573
  %s1577 = scalar_lea.vmem %s1, 6
  %1578 = vst.msk [vmem:[%s1577] sm:$0xfc] %vm1574, %v1573
  %s1579 = scalar_lea.vmem %s0, 205
  %v1580 = vld [vmem:[%s1579] sm:$0x1]
  %s1581 = scalar_lea.vmem %s0, 236
  %v1582 = vld [vmem:[%s1581] sm:$0x2]
  %vm1583 = vcmask 1041409
  %v1584 = vsel %vm1583, %v1582, %v1580
  %1585 = vrot.lane.b32.xlu0 %v1584, 2
  %v1586 = vpop.permute.xlu0 %1585
  %vm1587 = vcmask 97296
  %s1588 = scalar_lea.vmem %s1, 14
  %1589 = vst.msk [vmem:[%s1588] sm:$0x3] %vm1587, %v1586

// kernel: cnn_duq_forward.5
$region0: #{cnn_duq_forward.5}
  #allocation0 [shape = 'u32[]', space=smem, size = 0x4, offset = 0x4, fixed_abs, tag = 'smem constant byte address 0x4 - core index']
  #allocation1 [shape = 'u32[144,128]{1,0:T(1,128)}', space=vmem, size = 0x12000, scoped, tag = 'internal scratch']
  %s0 = inlined_call_operand.vmem [shape: f32[2,256], index: 0, kind: input, shape index: {}]
  %s1 = inlined_call_operand.vmem [shape: f32[256,120], index: 1, kind: input, shape index: {}]
  %s2 = inlined_call_operand.vmem [shape: f32[1,120], index: 2, kind: input, shape index: {}]
  %s3 = inlined_call_operand.vmem [shape: f32[120,84], index: 3, kind: input, shape index: {}]
  %s4 = inlined_call_operand.vmem [shape: f32[1,84], index: 4, kind: input, shape index: {}]
  %s5 = inlined_call_operand.vmem [shape: f32[84,320], index: 5, kind: input, shape index: {}]
  %s6 = inlined_call_operand.vmem [shape: f32[1,320], index: 6, kind: input, shape index: {}]
  %s7 = inlined_call_operand.vmem [shape: f32[320,10], index: 7, kind: input, shape index: {}]
  %s8 = inlined_call_operand.hbm [shape: f32[2,10], index: 8, kind: output, shape index: {0}]
  %s9 = inlined_call_operand.hbm [shape: f32[2,10], index: 9, kind: output, shape index: {1}]
  %10 = xla_tuple %s8, %s9
  %s11 = sld [smem:[#allocation0]]
  $region50: #{cnn_duq_forward.5} parent=0
    _
  %s13 = ssub.s32 1, %s11
  %s14 = scalar_select 0, %s13, %s11
  $region1: #{cnn_duq_forward.5} parent=0
    #allocation2 [shape = 'u8[1024]{0}', space=vmem, size = 0x400, scoped, tag = 'output window, operand 0, single buffered']
    #allocation3 [shape = 's32[1]{0}', space=sflag, size = 0x4, scoped, tag = 'scoped memory for cnn_duq_forward.5']
    #allocation4 [shape = 'u8[1024]{0}', space=vmem, size = 0x400, scoped, tag = 'output window, operand 1, single buffered']
    #allocation5 [shape = 's32[1]{0}', space=sflag, size = 0x4, scoped, tag = 'scoped memory for cnn_duq_forward.5']
    %15 = vsyncpa [#allocation3], 0
    %16 = vsyncpa [#allocation5], 0
    // Predicated region
    $region2: #{cnn_duq_forward.5} parent=1 // pred_check
      _
    $region3: #{cnn_duq_forward.5} parent=1 // pred_check_branch
      %18 = sbr.rel (0) target = $region5
    $region4: #{cnn_duq_forward.5} parent=1 // pred_region
      _
    $region5: #{cnn_duq_forward.5} parent=1 // pred_fallthru
      _
    // Predicated region
    $region6: #{cnn_duq_forward.5} parent=1 // pred_check
      _
    $region7: #{cnn_duq_forward.5} parent=1 // pred_check_branch
      %20 = sbr.rel (0) target = $region9
    $region8: #{cnn_duq_forward.5} parent=1 // pred_region
      _
    $region9: #{cnn_duq_forward.5} parent=1 // pred_fallthru
      _
    // Predicated region
    $region10: #{cnn_duq_forward.5} parent=1 // pred_check
      _
    $region11: #{cnn_duq_forward.5} parent=1 // pred_check_branch
      %22 = sbr.rel (0) target = $region13
    $region12: #{cnn_duq_forward.5} parent=1 // pred_region
      _
    $region13: #{cnn_duq_forward.5} parent=1 // pred_fallthru
      _
    // Predicated region
    $region14: #{cnn_duq_forward.5} parent=1 // pred_check
      _
    $region15: #{cnn_duq_forward.5} parent=1 // pred_check_branch
      %24 = sbr.rel (0) target = $region17
    $region16: #{cnn_duq_forward.5} parent=1 // pred_region
      _
    $region17: #{cnn_duq_forward.5} parent=1 // pred_fallthru
      _
    // Predicated region
    $region18: #{cnn_duq_forward.5} parent=1 // pred_check
      _
    $region19: #{cnn_duq_forward.5} parent=1 // pred_check_branch
      %26 = sbr.rel (0) target = $region21
    $region20: #{cnn_duq_forward.5} parent=1 // pred_region
      _
    $region21: #{cnn_duq_forward.5} parent=1 // pred_fallthru
      _
    // Predicated region
    $region22: #{cnn_duq_forward.5} parent=1 // pred_check
      _
    $region23: #{cnn_duq_forward.5} parent=1 // pred_check_branch
      %28 = sbr.rel (0) target = $region25
    $region24: #{cnn_duq_forward.5} parent=1 // pred_region
      _
    $region25: #{cnn_duq_forward.5} parent=1 // pred_fallthru
      _
    // Predicated region
    $region26: #{cnn_duq_forward.5} parent=1 // pred_check
      _
    $region27: #{cnn_duq_forward.5} parent=1 // pred_check_branch
      %30 = sbr.rel (0) target = $region29
    $region28: #{cnn_duq_forward.5} parent=1 // pred_region
      _
    $region29: #{cnn_duq_forward.5} parent=1 // pred_fallthru
      _
    // Predicated region
    $region30: #{cnn_duq_forward.5} parent=1 // pred_check
      _
    $region31: #{cnn_duq_forward.5} parent=1 // pred_check_branch
      %32 = sbr.rel (0) target = $region33
    $region32: #{cnn_duq_forward.5} parent=1 // pred_region
      _
    $region33: #{cnn_duq_forward.5} parent=1 // pred_fallthru
      _
    %v33 = vld [vmem:[%s0] sm:$0xf]
    %v34 = vld [vmem:[%s1] sm:$0xff]
    %v35 = vld [vmem:[%s1 + $0x8] sm:$0xff]
    %v36 = vld [vmem:[%s1 + $0x10] sm:$0xff]
    %v37 = vld [vmem:[%s1 + $0x18] sm:$0xff]
    %v38 = vld [vmem:[%s1 + $0x20] sm:$0xff]
    %v39 = vld [vmem:[%s1 + $0x28] sm:$0xff]
    %v40 = vld [vmem:[%s1 + $0x30] sm:$0xff]
    %v41 = vld [vmem:[%s1 + $0x38] sm:$0xff]
    %v42 = vld [vmem:[%s1 + $0x40] sm:$0xff]
    %v43 = vld [vmem:[%s1 + $0x48] sm:$0xff]
    %v44 = vld [vmem:[%s1 + $0x50] sm:$0xff]
    %v45 = vld [vmem:[%s1 + $0x58] sm:$0xff]
    %v46 = vld [vmem:[%s1 + $0x60] sm:$0xff]
    %v47 = vld [vmem:[%s1 + $0x68] sm:$0xff]
    %v48 = vld [vmem:[%s1 + $0x70] sm:$0xff]
    %v49 = vld [vmem:[%s1 + $0x78] sm:$0xff]
    %v50 = vld [vmem:[%s1 + $0x80] sm:$0xff]
    %v51 = vld [vmem:[%s1 + $0x88] sm:$0xff]
    %v52 = vld [vmem:[%s1 + $0x90] sm:$0xff]
    %v53 = vld [vmem:[%s1 + $0x98] sm:$0xff]
    %v54 = vld [vmem:[%s1 + $0xa0] sm:$0xff]
    %v55 = vld [vmem:[%s1 + $0xa8] sm:$0xff]
    %v56 = vld [vmem:[%s1 + $0xb0] sm:$0xff]
    %v57 = vld [vmem:[%s1 + $0xb8] sm:$0xff]
    %v58 = vld [vmem:[%s1 + $0xc0] sm:$0xff]
    %v59 = vld [vmem:[%s1 + $0xc8] sm:$0xff]
    %v60 = vld [vmem:[%s1 + $0xd0] sm:$0xff]
    %v61 = vld [vmem:[%s1 + $0xd8] sm:$0xff]
    %v62 = vld [vmem:[%s1 + $0xe0] sm:$0xff]
    %v63 = vld [vmem:[%s1 + $0xe8] sm:$0xff]
    %v64 = vld [vmem:[%s1 + $0xf0] sm:$0xff]
    %v65 = vld [vmem:[%s1 + $0xf8] sm:$0xff]
    %v66 = vld [vmem:[%s2] sm:$0x1]
    %v68 = vlaneseq
    %v69 = vshrl.u32 %v68, 7
    %v70 = vsub.s32 0, %v69
    %v71 = vrot.slane %v66, %v70
    %v75 = vunpack.c.l.s4 1983009808
    %v76 = vunpack.c.0.s8 %v75
    %v77 = vlaneseq
    %v78 = vshrl.u32 %v77, 7
    %v79 = vsub.s32 %v76, %v78
    %v80 = vrot.slane %v33, %v79
    %v81 = vcombine.high %v80, %v80
    %84 = vmatprep.subr.mxu0 0.0
    %85 = vmatpush1.msra.mxu0 %v34
    %86 = vmatprep.subr.mxu0 0.0
    %87 = vmatpush1.msra.mxu0 %v35
    %88 = vmatprep.subr.mxu0 0.0
    %89 = vmatpush1.msra.mxu0 %v36
    %90 = vmatprep.subr.mxu0 0.0
    %91 = vmatpush1.msra.mxu0 %v37
    %92 = vmatprep.subr.mxu0 0.0
    %93 = vmatpush1.msra.mxu0 %v38
    %94 = vmatprep.subr.mxu0 0.0
    %95 = vmatpush1.msra.mxu0 %v39
    %96 = vmatprep.subr.mxu0 0.0
    %97 = vmatpush1.msra.mxu0 %v40
    %98 = vmatprep.subr.mxu0 0.0
    %99 = vmatpush1.msra.mxu0 %v41
    %100 = vmatprep.subr.mxu0 0.0
    %101 = vmatpush1.msra.mxu0 %v42
    %102 = vmatprep.subr.mxu0 0.0
    %103 = vmatpush1.msra.mxu0 %v43
    %104 = vmatprep.subr.mxu0 0.0
    %105 = vmatpush1.msra.mxu0 %v44
    %106 = vmatprep.subr.mxu0 0.0
    %107 = vmatpush1.msra.mxu0 %v45
    %108 = vmatprep.subr.mxu0 0.0
    %109 = vmatpush1.msra.mxu0 %v46
    %110 = vmatprep.subr.mxu0 0.0
    %111 = vmatpush1.msra.mxu0 %v47
    %112 = vmatprep.subr.mxu0 0.0
    %113 = vmatpush1.msra.mxu0 %v48
    %114 = vmatprep.subr.mxu0 0.0
    %115 = vmatpush1.msra.mxu0 %v49
    %116 = vmatprep.subr.mxu0 0.0
    %117 = vmatpush1.msra.mxu0 %v50
    %118 = vmatprep.subr.mxu0 0.0
    %119 = vmatpush1.msra.mxu0 %v51
    %120 = vmatprep.subr.mxu0 0.0
    %121 = vmatpush1.msra.mxu0 %v52
    %122 = vmatprep.subr.mxu0 0.0
    %123 = vmatpush1.msra.mxu0 %v53
    %124 = vmatprep.subr.mxu0 0.0
    %125 = vmatpush1.msra.mxu0 %v54
    %126 = vmatprep.subr.mxu0 0.0
    %127 = vmatpush1.msra.mxu0 %v55
    %128 = vmatprep.subr.mxu0 0.0
    %129 = vmatpush1.msra.mxu0 %v56
    %130 = vmatprep.subr.mxu0 0.0
    %131 = vmatpush1.msra.mxu0 %v57
    %132 = vmatprep.subr.mxu0 0.0
    %133 = vmatpush1.msra.mxu0 %v58
    %134 = vmatprep.subr.mxu0 0.0
    %135 = vmatpush1.msra.mxu0 %v59
    %136 = vmatprep.subr.mxu0 0.0
    %137 = vmatpush1.msra.mxu0 %v60
    %138 = vmatprep.subr.mxu0 0.0
    %139 = vmatpush1.msra.mxu0 %v61
    %140 = vmatprep.subr.mxu0 0.0
    %141 = vmatpush1.msra.mxu0 %v62
    %142 = vmatprep.subr.mxu0 0.0
    %143 = vmatpush1.msra.mxu0 %v63
    %144 = vmatprep.subr.mxu0 0.0
    %145 = vmatpush1.msra.mxu0 %v64
    %146 = vmatprep.subr.mxu0 0.0
    %147 = vmatpush1.msra.mxu0 %v65
    %148 = vmatprep.mubr.f32.mxu0 %v81
    %149 = vmatmul.mubr.f32.gmra.mrb[0].mxu0 %v80
    %v150 = vpop.f32.mrb[0].mxu0
    %v151 = vadd.f32 %v71, %v150
    %v152 = vpop.f32.mrb[0].mxu0
    %153 = vdwg.mxu0
    %v154 = vmax.f32 %v151, 0.0
    %v155 = vld [vmem:[%s3] sm:$0xff]
    %v156 = vld [vmem:[%s3 + $0x8] sm:$0xff]
    %v157 = vld [vmem:[%s3 + $0x10] sm:$0xff]
    %v158 = vld [vmem:[%s3 + $0x18] sm:$0xff]
    %v159 = vld [vmem:[%s3 + $0x20] sm:$0xff]
    %v160 = vld [vmem:[%s3 + $0x28] sm:$0xff]
    %v161 = vld [vmem:[%s3 + $0x30] sm:$0xff]
    %v162 = vld [vmem:[%s3 + $0x38] sm:$0xff]
    %v163 = vld [vmem:[%s3 + $0x40] sm:$0xff]
    %v164 = vld [vmem:[%s3 + $0x48] sm:$0xff]
    %v165 = vld [vmem:[%s3 + $0x50] sm:$0xff]
    %v166 = vld [vmem:[%s3 + $0x58] sm:$0xff]
    %v167 = vld [vmem:[%s3 + $0x60] sm:$0xff]
    %v168 = vld [vmem:[%s3 + $0x68] sm:$0xff]
    %v169 = vld [vmem:[%s3 + $0x70] sm:$0xff]
    %v170 = vld [vmem:[%s4] sm:$0x1]
    %v172 = vlaneseq
    %v173 = vshrl.u32 %v172, 7
    %v174 = vsub.s32 0, %v173
    %v175 = vrot.slane %v170, %v174
    %vm177 = vcmask 982016
    %v179 = vsel %vm177, %v154, 0
    %181 = vmatprep.subr.mxu0 0.0
    %182 = vmatpush1.msra.mxu0 %v155
    %183 = vmatprep.subr.mxu0 0.0
    %184 = vmatpush1.msra.mxu0 %v156
    %185 = vmatprep.subr.mxu0 0.0
    %186 = vmatpush1.msra.mxu0 %v157
    %187 = vmatprep.subr.mxu0 0.0
    %188 = vmatpush1.msra.mxu0 %v158
    %189 = vmatprep.subr.mxu0 0.0
    %190 = vmatpush1.msra.mxu0 %v159
    %191 = vmatprep.subr.mxu0 0.0
    %192 = vmatpush1.msra.mxu0 %v160
    %193 = vmatprep.subr.mxu0 0.0
    %194 = vmatpush1.msra.mxu0 %v161
    %195 = vmatprep.subr.mxu0 0.0
    %196 = vmatpush1.msra.mxu0 %v162
    %197 = vmatprep.subr.mxu0 0.0
    %198 = vmatpush1.msra.mxu0 %v163
    %199 = vmatprep.subr.mxu0 0.0
    %200 = vmatpush1.msra.mxu0 %v164
    %201 = vmatprep.subr.mxu0 0.0
    %202 = vmatpush1.msra.mxu0 %v165
    %203 = vmatprep.subr.mxu0 0.0
    %204 = vmatpush1.msra.mxu0 %v166
    %205 = vmatprep.subr.mxu0 0.0
    %206 = vmatpush1.msra.mxu0 %v167
    %207 = vmatprep.subr.mxu0 0.0
    %208 = vmatpush1.msra.mxu0 %v168
    %209 = vmatprep.subr.mxu0 0.0
    %210 = vmatpush1.msra.mxu0 %v169
    %211 = vmatprep.subr.mxu0 0.0
    %212 = vmatpush1.msra.mxu0 0.0
    %213 = vmatprep.subr.mxu0 0.0
    %214 = vmatpush1.msra.mxu0 0.0
    %215 = vmatprep.subr.mxu0 0.0
    %216 = vmatpush1.msra.mxu0 0.0
    %217 = vmatprep.subr.mxu0 0.0
    %218 = vmatpush1.msra.mxu0 0.0
    %219 = vmatprep.subr.mxu0 0.0
    %220 = vmatpush1.msra.mxu0 0.0
    %221 = vmatprep.subr.mxu0 0.0
    %222 = vmatpush1.msra.mxu0 0.0
    %223 = vmatprep.subr.mxu0 0.0
    %224 = vmatpush1.msra.mxu0 0.0
    %225 = vmatprep.subr.mxu0 0.0
    %226 = vmatpush1.msra.mxu0 0.0
    %227 = vmatprep.subr.mxu0 0.0
    %228 = vmatpush1.msra.mxu0 0.0
    %229 = vmatprep.subr.mxu0 0.0
    %230 = vmatpush1.msra.mxu0 0.0
    %231 = vmatprep.subr.mxu0 0.0
    %232 = vmatpush1.msra.mxu0 0.0
    %233 = vmatprep.subr.mxu0 0.0
    %234 = vmatpush1.msra.mxu0 0.0
    %235 = vmatprep.subr.mxu0 0.0
    %236 = vmatpush1.msra.mxu0 0.0
    %237 = vmatprep.subr.mxu0 0.0
    %238 = vmatpush1.msra.mxu0 0.0
    %239 = vmatprep.subr.mxu0 0.0
    %240 = vmatpush1.msra.mxu0 0.0
    %241 = vmatprep.subr.mxu0 0.0
    %242 = vmatpush1.msra.mxu0 0.0
    %243 = vmatprep.subr.mxu0 0.0
    %244 = vmatpush1.msra.mxu0 0.0
    %245 = vmatprep.mubr.f32.mxu0 0.0
    %246 = vmatmul.mubr.f32.gmra.mrb[0].mxu0 %v179
    %v247 = vpop.f32.mrb[0].mxu0
    %v248 = vadd.f32 %v175, %v247
    %v249 = vpop.f32.mrb[0].mxu0
    %250 = vdwg.mxu0
    %v251 = vmax.f32 %v248, 0.0
    %v252 = vld [vmem:[%s5] sm:$0xff]
    %v253 = vld [vmem:[%s5 + $0x8] sm:$0xff]
    %v254 = vld [vmem:[%s5 + $0x10] sm:$0xff]
    %v255 = vld [vmem:[%s5 + $0x18] sm:$0xff]
    %v256 = vld [vmem:[%s5 + $0x20] sm:$0xff]
    %v257 = vld [vmem:[%s5 + $0x28] sm:$0xff]
    %v258 = vld [vmem:[%s5 + $0x30] sm:$0xff]
    %v259 = vld [vmem:[%s5 + $0x38] sm:$0xff]
    %v260 = vld [vmem:[%s5 + $0x40] sm:$0xff]
    %v261 = vld [vmem:[%s5 + $0x48] sm:$0xff]
    %v262 = vld [vmem:[%s5 + $0x50] sm:$0xff]
    %v263 = vld [vmem:[%s5 + $0x58] sm:$0xff]
    %v264 = vld [vmem:[%s5 + $0x60] sm:$0xff]
    %v265 = vld [vmem:[%s5 + $0x68] sm:$0xff]
    %v266 = vld [vmem:[%s5 + $0x70] sm:$0xff]
    %v267 = vld [vmem:[%s5 + $0x78] sm:$0xff]
    %v268 = vld [vmem:[%s5 + $0x80] sm:$0xff]
    %v269 = vld [vmem:[%s5 + $0x88] sm:$0xff]
    %v270 = vld [vmem:[%s5 + $0x90] sm:$0xff]
    %v271 = vld [vmem:[%s5 + $0x98] sm:$0xff]
    %v272 = vld [vmem:[%s5 + $0xa0] sm:$0xff]
    %v273 = vld [vmem:[%s5 + $0xa8] sm:$0xff]
    %v274 = vld [vmem:[%s5 + $0xb0] sm:$0xff]
    %v275 = vld [vmem:[%s5 + $0xb8] sm:$0xff]
    %v276 = vld [vmem:[%s5 + $0xc0] sm:$0xff]
    %v277 = vld [vmem:[%s5 + $0xc8] sm:$0xff]
    %v278 = vld [vmem:[%s5 + $0xd0] sm:$0xff]
    %v279 = vld [vmem:[%s5 + $0xd8] sm:$0xff]
    %v280 = vld [vmem:[%s5 + $0xe0] sm:$0xff]
    %v281 = vld [vmem:[%s5 + $0xe8] sm:$0xff]
    %v282 = vld [vmem:[%s5 + $0xf0] sm:$0xf]
    %v283 = vld [vmem:[%s5 + $0xf8] sm:$0xf]
    %v284 = vld [vmem:[%s5 + $0x100] sm:$0xf]
    %vm285 = vcmask 687104
    %v287 = vsel %vm285, %v251, 0
    %vm289 = vcmask 1043456
    %v291 = vsel %vm289, %v282, 0
    %v294 = vsel %vm289, %v283, 0
    %v297 = vsel %vm289, %v284, 0
    %299 = vmatprep.subr.mxu0 %v253
    %300 = vmatpush1.msra.mxu0 %v252
    %301 = vmatprep.subr.mxu0 %v256
    %302 = vmatpush1.msra.mxu0 %v255
    %303 = vmatprep.subr.mxu0 %v259
    %304 = vmatpush1.msra.mxu0 %v258
    %305 = vmatprep.subr.mxu0 %v262
    %306 = vmatpush1.msra.mxu0 %v261
    %307 = vmatprep.subr.mxu0 %v265
    %308 = vmatpush1.msra.mxu0 %v264
    %309 = vmatprep.subr.mxu0 %v268
    %310 = vmatpush1.msra.mxu0 %v267
    %311 = vmatprep.subr.mxu0 %v271
    %312 = vmatpush1.msra.mxu0 %v270
    %313 = vmatprep.subr.mxu0 %v274
    %314 = vmatpush1.msra.mxu0 %v273
    %315 = vmatprep.subr.mxu0 %v277
    %316 = vmatpush1.msra.mxu0 %v276
    %317 = vmatprep.subr.mxu0 %v280
    %318 = vmatpush1.msra.mxu0 %v279
    %319 = vmatprep.subr.mxu0 %v294
    %320 = vmatpush1.msra.mxu0 %v291
    %321 = vmatprep.subr.mxu0 0.0
    %322 = vmatpush1.msra.mxu0 0.0
    %323 = vmatprep.subr.mxu0 0.0
    %324 = vmatpush1.msra.mxu0 0.0
    %325 = vmatprep.subr.mxu0 0.0
    %326 = vmatpush1.msra.mxu0 0.0
    %327 = vmatprep.subr.mxu0 0.0
    %328 = vmatpush1.msra.mxu0 0.0
    %329 = vmatprep.subr.mxu0 0.0
    %330 = vmatpush1.msra.mxu0 0.0
    %331 = vmatprep.subr.mxu0 0.0
    %332 = vmatpush1.msra.mxu0 0.0
    %333 = vmatprep.subr.mxu0 0.0
    %334 = vmatpush1.msra.mxu0 0.0
    %335 = vmatprep.subr.mxu0 0.0
    %336 = vmatpush1.msra.mxu0 0.0
    %337 = vmatprep.subr.mxu0 0.0
    %338 = vmatpush1.msra.mxu0 0.0
    %339 = vmatprep.subr.mxu0 0.0
    %340 = vmatpush1.msra.mxu0 0.0
    %341 = vmatprep.subr.mxu0 0.0
    %342 = vmatpush1.msra.mxu0 0.0
    %343 = vmatprep.subr.mxu0 0.0
    %344 = vmatpush1.msra.mxu0 0.0
    %345 = vmatprep.subr.mxu0 0.0
    %346 = vmatpush1.msra.mxu0 0.0
    %347 = vmatprep.subr.mxu0 0.0
    %348 = vmatpush1.msra.mxu0 0.0
    %349 = vmatprep.subr.mxu0 0.0
    %350 = vmatpush1.msra.mxu0 0.0
    %351 = vmatprep.subr.mxu0 0.0
    %352 = vmatpush1.msra.mxu0 0.0
    %353 = vmatprep.subr.mxu0 0.0
    %354 = vmatpush1.msra.mxu0 0.0
    %355 = vmatprep.subr.mxu0 0.0
    %356 = vmatpush1.msra.mxu0 0.0
    %357 = vmatprep.subr.mxu0 0.0
    %358 = vmatpush1.msra.mxu0 0.0
    %359 = vmatprep.subr.mxu0 0.0
    %360 = vmatpush1.msra.mxu0 0.0
    %361 = vmatprep.subr.mxu0 0.0
    %362 = vmatpush1.msra.mxu0 0.0
    %363 = vmatprep.mubr.f32.mxu0 0.0
    %364 = vmatmul.mubr.f32.gmra.mrb[0].mxu0 %v287
    %v365 = vpop.f32.mrb[0].mxu0
    %v366 = vadd.f32 0.0, %v365
    %v367 = vpop.f32.mrb[0].mxu0
    %v368 = vadd.f32 0.0, %v367
    %369 = vdwg.mxu0
    %370 = vmatprep.subr.mxu0 0.0
    %371 = vmatpush1.msra.mxu0 %v254
    %372 = vmatprep.subr.mxu0 0.0
    %373 = vmatpush1.msra.mxu0 %v257
    %374 = vmatprep.subr.mxu0 0.0
    %375 = vmatpush1.msra.mxu0 %v260
    %376 = vmatprep.subr.mxu0 0.0
    %377 = vmatpush1.msra.mxu0 %v263
    %378 = vmatprep.subr.mxu0 0.0
    %379 = vmatpush1.msra.mxu0 %v266
    %380 = vmatprep.subr.mxu0 0.0
    %381 = vmatpush1.msra.mxu0 %v269
    %382 = vmatprep.subr.mxu0 0.0
    %383 = vmatpush1.msra.mxu0 %v272
    %384 = vmatprep.subr.mxu0 0.0
    %385 = vmatpush1.msra.mxu0 %v275
    %386 = vmatprep.subr.mxu0 0.0
    %387 = vmatpush1.msra.mxu0 %v278
    %388 = vmatprep.subr.mxu0 0.0
    %389 = vmatpush1.msra.mxu0 %v281
    %390 = vmatprep.subr.mxu0 0.0
    %391 = vmatpush1.msra.mxu0 %v297
    %392 = vmatprep.subr.mxu0 0.0
    %393 = vmatpush1.msra.mxu0 0.0
    %394 = vmatprep.subr.mxu0 0.0
    %395 = vmatpush1.msra.mxu0 0.0
    %396 = vmatprep.subr.mxu0 0.0
    %397 = vmatpush1.msra.mxu0 0.0
    %398 = vmatprep.subr.mxu0 0.0
    %399 = vmatpush1.msra.mxu0 0.0
    %400 = vmatprep.subr.mxu0 0.0
    %401 = vmatpush1.msra.mxu0 0.0
    %402 = vmatprep.subr.mxu0 0.0
    %403 = vmatpush1.msra.mxu0 0.0
    %404 = vmatprep.subr.mxu0 0.0
    %405 = vmatpush1.msra.mxu0 0.0
    %406 = vmatprep.subr.mxu0 0.0
    %407 = vmatpush1.msra.mxu0 0.0
    %408 = vmatprep.subr.mxu0 0.0
    %409 = vmatpush1.msra.mxu0 0.0
    %410 = vmatprep.subr.mxu0 0.0
    %411 = vmatpush1.msra.mxu0 0.0
    %412 = vmatprep.subr.mxu0 0.0
    %413 = vmatpush1.msra.mxu0 0.0
    %414 = vmatprep.subr.mxu0 0.0
    %415 = vmatpush1.msra.mxu0 0.0
    %416 = vmatprep.subr.mxu0 0.0
    %417 = vmatpush1.msra.mxu0 0.0
    %418 = vmatprep.subr.mxu0 0.0
    %419 = vmatpush1.msra.mxu0 0.0
    %420 = vmatprep.subr.mxu0 0.0
    %421 = vmatpush1.msra.mxu0 0.0
    %422 = vmatprep.subr.mxu0 0.0
    %423 = vmatpush1.msra.mxu0 0.0
    %424 = vmatprep.subr.mxu0 0.0
    %425 = vmatpush1.msra.mxu0 0.0
    %426 = vmatprep.subr.mxu0 0.0
    %427 = vmatpush1.msra.mxu0 0.0
    %428 = vmatprep.subr.mxu0 0.0
    %429 = vmatpush1.msra.mxu0 0.0
    %430 = vmatprep.subr.mxu0 0.0
    %431 = vmatpush1.msra.mxu0 0.0
    %432 = vmatprep.subr.mxu0 0.0
    %433 = vmatpush1.msra.mxu0 0.0
    %434 = vmatprep.mubr.f32.mxu0 0.0
    %435 = vmatmul.mubr.f32.gmra.mrb[0].mxu0 %v287
    %v436 = vpop.f32.mrb[0].mxu0
    %v437 = vadd.f32 0.0, %v436
    %v438 = vpop.f32.mrb[0].mxu0
    %439 = vdwg.mxu0
    %v440 = vld [vmem:[%s6] sm:$0x7]
    %v442 = vlaneseq
    %v443 = vshrl.u32 %v442, 7
    %v444 = vsub.s32 0, %v443
    %v445 = vrot.slane %v440, %v444
    %v446 = vlaneseq
    %v447 = vshrl.u32 %v446, 7
    %v448 = vsub.s32 1, %v447
    %v449 = vrot.slane %v440, %v448
    %v450 = vlaneseq
    %v451 = vshrl.u32 %v450, 7
    %v452 = vsub.s32 2, %v451
    %v453 = vrot.slane %v440, %v452
    %v457 = vsub.f32 %v366, %v445
    %v458 = vsub.f32 %v368, %v449
    %v459 = vsub.f32 %v437, %v453
    %v460 = vmul.f32 %v457, %v457
    %v461 = vmul.f32 %v458, %v458
    %v462 = vmul.f32 %v459, %v459
    %v463 = vld [vmem:[%s7] sm:$0xff]
    %v464 = vld [vmem:[%s7 + $0x8] sm:$0xff]
    %v465 = vld [vmem:[%s7 + $0x10] sm:$0xff]
    %v466 = vld [vmem:[%s7 + $0x18] sm:$0xff]
    %v467 = vld [vmem:[%s7 + $0x20] sm:$0xff]
    %v468 = vld [vmem:[%s7 + $0x28] sm:$0xff]
    %v469 = vld [vmem:[%s7 + $0x30] sm:$0xff]
    %v470 = vld [vmem:[%s7 + $0x38] sm:$0xff]
    %v471 = vld [vmem:[%s7 + $0x40] sm:$0xff]
    %v472 = vld [vmem:[%s7 + $0x48] sm:$0xff]
    %v473 = vld [vmem:[%s7 + $0x50] sm:$0xff]
    %v474 = vld [vmem:[%s7 + $0x58] sm:$0xff]
    %v475 = vld [vmem:[%s7 + $0x60] sm:$0xff]
    %v476 = vld [vmem:[%s7 + $0x68] sm:$0xff]
    %v477 = vld [vmem:[%s7 + $0x70] sm:$0xff]
    %v478 = vld [vmem:[%s7 + $0x78] sm:$0xff]
    %v479 = vld [vmem:[%s7 + $0x80] sm:$0xff]
    %v480 = vld [vmem:[%s7 + $0x88] sm:$0xff]
    %v481 = vld [vmem:[%s7 + $0x90] sm:$0xff]
    %v482 = vld [vmem:[%s7 + $0x98] sm:$0xff]
    %v483 = vld [vmem:[%s7 + $0xa0] sm:$0xff]
    %v484 = vld [vmem:[%s7 + $0xa8] sm:$0xff]
    %v485 = vld [vmem:[%s7 + $0xb0] sm:$0xff]
    %v486 = vld [vmem:[%s7 + $0xb8] sm:$0xff]
    %v487 = vld [vmem:[%s7 + $0xc0] sm:$0xff]
    %v488 = vld [vmem:[%s7 + $0xc8] sm:$0xff]
    %v489 = vld [vmem:[%s7 + $0xd0] sm:$0xff]
    %v490 = vld [vmem:[%s7 + $0xd8] sm:$0xff]
    %v491 = vld [vmem:[%s7 + $0xe0] sm:$0xff]
    %v492 = vld [vmem:[%s7 + $0xe8] sm:$0xff]
    %v493 = vld [vmem:[%s7 + $0xf0] sm:$0xff]
    %v494 = vld [vmem:[%s7 + $0xf8] sm:$0xff]
    %v495 = vld [vmem:[%s7 + $0x100] sm:$0xff]
    %v496 = vld [vmem:[%s7 + $0x108] sm:$0xff]
    %v497 = vld [vmem:[%s7 + $0x110] sm:$0xff]
    %v498 = vld [vmem:[%s7 + $0x118] sm:$0xff]
    %v499 = vld [vmem:[%s7 + $0x120] sm:$0xff]
    %v500 = vld [vmem:[%s7 + $0x128] sm:$0xff]
    %v501 = vld [vmem:[%s7 + $0x130] sm:$0xff]
    %v502 = vld [vmem:[%s7 + $0x138] sm:$0xff]
    %vm503 = vcmask 523264
    %v505 = vsel %vm503, %v462, 0
    %507 = vmatprep.subr.mxu0 0.0
    %508 = vmatpush1.msra.mxu0 %v463
    %509 = vmatprep.subr.mxu0 0.0
    %510 = vmatpush1.msra.mxu0 %v464
    %511 = vmatprep.subr.mxu0 0.0
    %512 = vmatpush1.msra.mxu0 %v465
    %513 = vmatprep.subr.mxu0 0.0
    %514 = vmatpush1.msra.mxu0 %v466
    %515 = vmatprep.subr.mxu0 0.0
    %516 = vmatpush1.msra.mxu0 %v467
    %517 = vmatprep.subr.mxu0 0.0
    %518 = vmatpush1.msra.mxu0 %v468
    %519 = vmatprep.subr.mxu0 0.0
    %520 = vmatpush1.msra.mxu0 %v469
    %521 = vmatprep.subr.mxu0 0.0
    %522 = vmatpush1.msra.mxu0 %v470
    %523 = vmatprep.subr.mxu0 0.0
    %524 = vmatpush1.msra.mxu0 %v471
    %525 = vmatprep.subr.mxu0 0.0
    %526 = vmatpush1.msra.mxu0 %v472
    %527 = vmatprep.subr.mxu0 0.0
    %528 = vmatpush1.msra.mxu0 %v473
    %529 = vmatprep.subr.mxu0 0.0
    %530 = vmatpush1.msra.mxu0 %v474
    %531 = vmatprep.subr.mxu0 0.0
    %532 = vmatpush1.msra.mxu0 %v475
    %533 = vmatprep.subr.mxu0 0.0
    %534 = vmatpush1.msra.mxu0 %v476
    %535 = vmatprep.subr.mxu0 0.0
    %536 = vmatpush1.msra.mxu0 %v477
    %537 = vmatprep.subr.mxu0 0.0
    %538 = vmatpush1.msra.mxu0 %v478
    %539 = vmatprep.subr.mxu0 0.0
    %540 = vmatpush1.msra.mxu0 %v479
    %541 = vmatprep.subr.mxu0 0.0
    %542 = vmatpush1.msra.mxu0 %v480
    %543 = vmatprep.subr.mxu0 0.0
    %544 = vmatpush1.msra.mxu0 %v481
    %545 = vmatprep.subr.mxu0 0.0
    %546 = vmatpush1.msra.mxu0 %v482
    %547 = vmatprep.subr.mxu0 0.0
    %548 = vmatpush1.msra.mxu0 %v483
    %549 = vmatprep.subr.mxu0 0.0
    %550 = vmatpush1.msra.mxu0 %v484
    %551 = vmatprep.subr.mxu0 0.0
    %552 = vmatpush1.msra.mxu0 %v485
    %553 = vmatprep.subr.mxu0 0.0
    %554 = vmatpush1.msra.mxu0 %v486
    %555 = vmatprep.subr.mxu0 0.0
    %556 = vmatpush1.msra.mxu0 %v487
    %557 = vmatprep.subr.mxu0 0.0
    %558 = vmatpush1.msra.mxu0 %v488
    %559 = vmatprep.subr.mxu0 0.0
    %560 = vmatpush1.msra.mxu0 %v489
    %561 = vmatprep.subr.mxu0 0.0
    %562 = vmatpush1.msra.mxu0 %v490
    %563 = vmatprep.subr.mxu0 0.0
    %564 = vmatpush1.msra.mxu0 %v491
    %565 = vmatprep.subr.mxu0 0.0
    %566 = vmatpush1.msra.mxu0 %v492
    %567 = vmatprep.subr.mxu0 0.0
    %568 = vmatpush1.msra.mxu0 %v493
    %569 = vmatprep.subr.mxu0 0.0
    %570 = vmatpush1.msra.mxu0 %v494
    %571 = vmatprep.mubr.f32.mxu0 %v461
    %572 = vmatmul.mubr.f32.gmra.mrb[0].mxu0 %v460
    %v573 = vpop.f32.mrb[0].mxu0
    %v574 = vadd.f32 0.0, %v573
    %v575 = vpop.f32.mrb[0].mxu0
    %576 = vdwg.mxu0
    %577 = vmatprep.subr.mxu0 0.0
    %578 = vmatpush1.msra.mxu0 %v495
    %579 = vmatprep.subr.mxu0 0.0
    %580 = vmatpush1.msra.mxu0 %v496
    %581 = vmatprep.subr.mxu0 0.0
    %582 = vmatpush1.msra.mxu0 %v497
    %583 = vmatprep.subr.mxu0 0.0
    %584 = vmatpush1.msra.mxu0 %v498
    %585 = vmatprep.subr.mxu0 0.0
    %586 = vmatpush1.msra.mxu0 %v499
    %587 = vmatprep.subr.mxu0 0.0
    %588 = vmatpush1.msra.mxu0 %v500
    %589 = vmatprep.subr.mxu0 0.0
    %590 = vmatpush1.msra.mxu0 %v501
    %591 = vmatprep.subr.mxu0 0.0
    %592 = vmatpush1.msra.mxu0 %v502
    %593 = vmatprep.subr.mxu0 0.0
    %594 = vmatpush1.msra.mxu0 0.0
    %595 = vmatprep.subr.mxu0 0.0
    %596 = vmatpush1.msra.mxu0 0.0
    %597 = vmatprep.subr.mxu0 0.0
    %598 = vmatpush1.msra.mxu0 0.0
    %599 = vmatprep.subr.mxu0 0.0
    %600 = vmatpush1.msra.mxu0 0.0
    %601 = vmatprep.subr.mxu0 0.0
    %602 = vmatpush1.msra.mxu0 0.0
    %603 = vmatprep.subr.mxu0 0.0
    %604 = vmatpush1.msra.mxu0 0.0
    %605 = vmatprep.subr.mxu0 0.0
    %606 = vmatpush1.msra.mxu0 0.0
    %607 = vmatprep.subr.mxu0 0.0
    %608 = vmatpush1.msra.mxu0 0.0
    %609 = vmatprep.subr.mxu0 0.0
    %610 = vmatpush1.msra.mxu0 0.0
    %611 = vmatprep.subr.mxu0 0.0
    %612 = vmatpush1.msra.mxu0 0.0
    %613 = vmatprep.subr.mxu0 0.0
    %614 = vmatpush1.msra.mxu0 0.0
    %615 = vmatprep.subr.mxu0 0.0
    %616 = vmatpush1.msra.mxu0 0.0
    %617 = vmatprep.subr.mxu0 0.0
    %618 = vmatpush1.msra.mxu0 0.0
    %619 = vmatprep.subr.mxu0 0.0
    %620 = vmatpush1.msra.mxu0 0.0
    %621 = vmatprep.subr.mxu0 0.0
    %622 = vmatpush1.msra.mxu0 0.0
    %623 = vmatprep.subr.mxu0 0.0
    %624 = vmatpush1.msra.mxu0 0.0
    %625 = vmatprep.subr.mxu0 0.0
    %626 = vmatpush1.msra.mxu0 0.0
    %627 = vmatprep.subr.mxu0 0.0
    %628 = vmatpush1.msra.mxu0 0.0
    %629 = vmatprep.subr.mxu0 0.0
    %630 = vmatpush1.msra.mxu0 0.0
    %631 = vmatprep.subr.mxu0 0.0
    %632 = vmatpush1.msra.mxu0 0.0
    %633 = vmatprep.subr.mxu0 0.0
    %634 = vmatpush1.msra.mxu0 0.0
    %635 = vmatprep.subr.mxu0 0.0
    %636 = vmatpush1.msra.mxu0 0.0
    %637 = vmatprep.subr.mxu0 0.0
    %638 = vmatpush1.msra.mxu0 0.0
    %639 = vmatprep.subr.mxu0 0.0
    %640 = vmatpush1.msra.mxu0 0.0
    %641 = vmatprep.mubr.f32.mxu0 0.0
    %642 = vmatmul.mubr.f32.gmra.mrb[0].mxu0 %v505
    %v643 = vpop.f32.mrb[0].mxu0
    %v644 = vadd.f32 %v574, %v643
    %v645 = vpop.f32.mrb[0].mxu0
    %646 = vdwg.mxu0
    %v647 = vmul.f32 %v644, 1.5625
    %vm648 = vcmask 74752
    %649 = vst.msk [vmem:[#allocation4] sm:$0x3] %vm648, %v647
    %v650 = vsub.f32 0.0, %v647
    %v651 = vmul.f32 %v650, 1.442695
    %v652 = vpow.pop %v651
    %653 = vst.msk [vmem:[#allocation2] sm:$0x3] %vm648, %v652
    // Predicated region
    $region34: #{cnn_duq_forward.5} parent=1 // pred_check
      _
    $region35: #{cnn_duq_forward.5} parent=1 // pred_check_branch
      %655 = sbr.rel (0) target = $region37
    $region36: #{cnn_duq_forward.5} parent=1 // pred_region
      %s657 = ssub.s32 32, 32
      %658 = vsyncadd [#allocation3], %s657
      %s660 = sshll.u32 [#allocation2], 4
      %s661 = int_to_ptr.vmem [resolvable:$true] %s660
      %663 = dma.vmem_to_hbm [thread:$0]  %s661, 32, %s8, [#allocation3]
    $region37: #{cnn_duq_forward.5} parent=1 // pred_fallthru
      _
    // Predicated region
    $region38: #{cnn_duq_forward.5} parent=1 // pred_check
      _
    $region39: #{cnn_duq_forward.5} parent=1 // pred_check_branch
      %665 = sbr.rel (0) target = $region41
    $region40: #{cnn_duq_forward.5} parent=1 // pred_region
      %s667 = ssub.s32 32, 32
      %668 = vsyncadd [#allocation5], %s667
      %s670 = sshll.u32 [#allocation4], 4
      %s671 = int_to_ptr.vmem [resolvable:$true] %s670
      %673 = dma.vmem_to_hbm [thread:$0]  %s671, 32, %s9, [#allocation5]
    $region41: #{cnn_duq_forward.5} parent=1 // pred_fallthru
      _
    // Predicated region
    $region42: #{cnn_duq_forward.5} parent=1 // pred_check
      _
    $region43: #{cnn_duq_forward.5} parent=1 // pred_check_branch
      %675 = sbr.rel (0) target = $region45
    $region44: #{cnn_duq_forward.5} parent=1 // pred_region
      %676 = dma.done [#allocation3], 32
    $region45: #{cnn_duq_forward.5} parent=1 // pred_fallthru
      _
    // Predicated region
    $region46: #{cnn_duq_forward.5} parent=1 // pred_check
      _
    $region47: #{cnn_duq_forward.5} parent=1 // pred_check_branch
      %678 = sbr.rel (0) target = $region49
    $region48: #{cnn_duq_forward.5} parent=1 // pred_region
      %679 = dma.done [#allocation5], 32
    $region49: #{cnn_duq_forward.5} parent=1 // pred_fallthru
      _
    %680 = vsyncpa [#allocation3], 1
    %681 = vsyncpa [#allocation5], 1

</llo_original>
